<compile_context>
chip_gen: v7x
topology: tpu7x:2x2x1
jax: 0.10.0
libtpu: 0.0.40
codegen_flags: <defaults>
</compile_context>

<pallas_src>
import jax
import jax.numpy as jnp
from jax.experimental import pallas as pl
from jax.experimental.pallas import tpu as pltpu

_BN_EPS = 1e-5
_VMEM = pltpu.MemorySpace.VMEM


# ---------------------------------------------------------------------------
# Kernels
# ---------------------------------------------------------------------------
def _conv_gemm_bn_relu_pool_kernel(x_ref, w_ref, scale_ref, shift_ref, o_ref):
    """Fused conv(im2col GEMM) + folded BN + ReLU + 2x2 max-pool.

    x_ref:     (4, R, K)  im2col patches, one slab per pool-window position
    w_ref:     (K, C)     conv weights (K = 5*5*Cin, C = Cout)
    scale_ref: (1, C)     gamma / sqrt(var + eps)
    shift_ref: (1, C)     beta + (conv_bias - mean) * scale
    o_ref:     (R, C)     pooled activations, rows ordered (b, yo, xo)
    """
    w = w_ref[...]
    scale = scale_ref[...]
    shift = shift_ref[...]

    def act(d):
        y = jnp.dot(x_ref[d], w, preferred_element_type=jnp.float32)
        return jnp.maximum(y * scale + shift, 0.0)        # folded BN + ReLU

    # 2x2 max pool == elementwise max over the four window-position slabs.
    o_ref[...] = jnp.maximum(jnp.maximum(act(0), act(1)),
                             jnp.maximum(act(2), act(3))).astype(o_ref.dtype)


def _linear_kernel(x_ref, w_ref, b_ref, o_ref):
    y = jnp.dot(x_ref[...], w_ref[...], preferred_element_type=jnp.float32)
    o_ref[...] = (y + b_ref[...]).astype(o_ref.dtype)


# ---------------------------------------------------------------------------
# Wrappers (layout plumbing stays in XLA; FLOPs stay in the Pallas kernels)
# ---------------------------------------------------------------------------
def _im2col_pool_major(a, ksize):
    """a: (B, H, W, Cin) NHWC -> (4, B*(H//2)*(W//2), ksize*ksize*Cin).

    'same'-padded KxK patches with the 2x2 pool-window position (dy, dx) as the
    leading axis, so pooling fuses into the GEMM kernel as a max over slabs.
    """
    B, H, W, Cin = a.shape
    P = ksize // 2
    Ho, Wo = H // 2, W // 2
    a_pad = jnp.pad(a, ((0, 0), (P, P), (P, P), (0, 0)))
    slabs = []
    for dy in range(2):
        for dx in range(2):
            taps = []
            for ky in range(ksize):
                for kx in range(ksize):
                    y0, x0 = dy + ky, dx + kx
                    taps.append(a_pad[:, y0:y0 + 2 * Ho:2, x0:x0 + 2 * Wo:2, :])
            patches = jnp.concatenate(taps, axis=-1)       # (B, Ho, Wo, K*K*Cin)
            slabs.append(patches.reshape(B * Ho * Wo, ksize * ksize * Cin))
    return jnp.stack(slabs, axis=0)


def conv_bn_relu_pool(a, w_oihw, b_conv, gamma, beta, mean, var,
                      *, use_bf16=False, tile_rows=512):
    """One CNNFashion_Mnist layer on NHWC input a -> (B, H//2, W//2, Cout)."""
    B, H, W, Cin = a.shape
    Cout, _, K, _ = w_oihw.shape
    Ho, Wo = H // 2, W // 2
    R = B * Ho * Wo
    KK = K * K * Cin

    x_col = _im2col_pool_major(a, K)                               # (4, R, KK)
    w_col = jnp.transpose(w_oihw, (2, 3, 1, 0)).reshape(KK, Cout)  # (KK, Cout)
    inv_std = gamma / jnp.sqrt(var + _BN_EPS)
    scale = inv_std.reshape(1, Cout)
    shift = (beta + (b_conv - mean) * inv_std).reshape(1, Cout)

    if use_bf16:  # halve HBM traffic of the mem-bound GEMM; f32 accumulation kept
        x_col = x_col.astype(jnp.bfloat16)
        w_col = w_col.astype(jnp.bfloat16)

    out_shape = jax.ShapeDtypeStruct((R, Cout), jnp.float32)

    if R % tile_rows == 0 and R // tile_rows >= 2:
        # Large-batch path: tile the GEMM rows, keep weights/scale/shift
        # VMEM-resident, mark the axis "parallel" (v7x megacore) and let the
        # pipeliner overlap the patch DMA with the matmuls.
        out = pl.pallas_call(
            _conv_gemm_bn_relu_pool_kernel,
            out_shape=out_shape,
            grid=(R // tile_rows,),
            in_specs=[
                pl.BlockSpec((4, tile_rows, KK), lambda i: (0, i, 0)),
                pl.BlockSpec((KK, Cout), lambda i: (0, 0)),
                pl.BlockSpec((1, Cout), lambda i: (0, 0)),
                pl.BlockSpec((1, Cout), lambda i: (0, 0)),
            ],
            out_specs=pl.BlockSpec((tile_rows, Cout), lambda i: (i, 0)),
            compiler_params=pltpu.CompilerParams(
                dimension_semantics=("parallel",)),
        )(x_col, w_col, scale, shift)
    else:
        # Small problem: single invocation, whole operands VMEM-resident —
        # no grid bookkeeping and no redundant double buffers.
        out = pl.pallas_call(
            _conv_gemm_bn_relu_pool_kernel,
            out_shape=out_shape,
            in_specs=[pl.BlockSpec(memory_space=_VMEM)] * 4,
            out_specs=pl.BlockSpec(memory_space=_VMEM),
        )(x_col, w_col, scale, shift)

    return out.reshape(B, Ho, Wo, Cout)


def linear(x2d, w_in_out, bias):
    B = x2d.shape[0]
    Dout = w_in_out.shape[1]
    return pl.pallas_call(
        _linear_kernel,
        out_shape=jax.ShapeDtypeStruct((B, Dout), jnp.float32),
        in_specs=[pl.BlockSpec(memory_space=_VMEM)] * 3,
        out_specs=pl.BlockSpec(memory_space=_VMEM),
    )(x2d, w_in_out, bias.reshape(1, Dout))


def cnn_fashion_mnist_forward(x_nchw, p, *, use_bf16=False):
    """Full forward: returns logits (B, 10)."""
    a = jnp.transpose(x_nchw, (0, 2, 3, 1)).astype(jnp.float32)    # NCHW -> NHWC
    a = conv_bn_relu_pool(a, p["conv1_w"], p["conv1_b"], p["bn1_g"], p["bn1_b"],
                          p["bn1_m"], p["bn1_v"], use_bf16=use_bf16)
    a = conv_bn_relu_pool(a, p["conv2_w"], p["conv2_b"], p["bn2_g"], p["bn2_b"],
                          p["bn2_m"], p["bn2_v"], use_bf16=use_bf16)
    B, Ho, Wo, C = a.shape
    x_fc = a.reshape(B, Ho * Wo * C)                               # (y, x, c) order
    # Permute fc weight columns from torch's NCHW flatten order (c, y, x) into
    # our (y, x, c) order, stored transposed so the kernel computes x @ W.
    wf = p["fc_w"]                                                 # (10, C*Ho*Wo)
    w_fc = jnp.transpose(wf.reshape(wf.shape[0], C, Ho, Wo),
                         (2, 3, 1, 0)).reshape(Ho * Wo * C, wf.shape[0])
    return linear(x_fc, w_fc, p["fc_b"])


# ---------------------------------------------------------------------------
# Pure-JAX reference (mirrors the PyTorch module in eval mode)
# ---------------------------------------------------------------------------
def reference_forward(x_nchw, p):
    hi = jax.lax.Precision.HIGHEST

    def block(a, w, b, g, beta, m, v):
        y = jax.lax.conv_general_dilated(
            a, w, window_strides=(1, 1), padding=[(2, 2), (2, 2)],
            dimension_numbers=("NCHW", "OIHW", "NCHW"), precision=hi)
        y = y + b.reshape(1, -1, 1, 1)
        y = (y - m.reshape(1, -1, 1, 1)) / jnp.sqrt(v.reshape(1, -1, 1, 1) + _BN_EPS)
        y = y * g.reshape(1, -1, 1, 1) + beta.reshape(1, -1, 1, 1)
        y = jnp.maximum(y, 0.0)
        B, C, H, W = y.shape
        return y.reshape(B, C, H // 2, 2, W // 2, 2).max(axis=(3, 5))

    a = block(x_nchw, p["conv1_w"], p["conv1_b"], p["bn1_g"], p["bn1_b"],
              p["bn1_m"], p["bn1_v"])
    a = block(a, p["conv2_w"], p["conv2_b"], p["bn2_g"], p["bn2_b"],
              p["bn2_m"], p["bn2_v"])
    a = a.reshape(a.shape[0], -1)
    return jnp.dot(a, p["fc_w"].T, precision=hi) + p["fc_b"]


if __name__ == "__main__":
    B = 2  # Fashion-MNIST input: (B, 1, 28, 28) — required by fc = Linear(7*7*32, 10)
    key = jax.random.PRNGKey(0)
    ks = jax.random.split(key, 16)

    x = jax.random.normal(ks[0], (B, 1, 28, 28), jnp.float32)
    p = {
        "conv1_w": 0.1 * jax.random.normal(ks[1], (16, 1, 5, 5), jnp.float32),
        "conv1_b": 0.1 * jax.random.normal(ks[2], (16,), jnp.float32),
        "bn1_g": 1.0 + 0.1 * jax.random.normal(ks[3], (16,), jnp.float32),
        "bn1_b": 0.1 * jax.random.normal(ks[4], (16,), jnp.float32),
        "bn1_m": 0.1 * jax.random.normal(ks[5], (16,), jnp.float32),
        "bn1_v": jax.random.uniform(ks[6], (16,), jnp.float32, 0.5, 1.5),
        "conv2_w": 0.05 * jax.random.normal(ks[7], (32, 16, 5, 5), jnp.float32),
        "conv2_b": 0.1 * jax.random.normal(ks[8], (32,), jnp.float32),
        "bn2_g": 1.0 + 0.1 * jax.random.normal(ks[9], (32,), jnp.float32),
        "bn2_b": 0.1 * jax.random.normal(ks[10], (32,), jnp.float32),
        "bn2_m": 0.1 * jax.random.normal(ks[11], (32,), jnp.float32),
        "bn2_v": jax.random.uniform(ks[12], (32,), jnp.float32, 0.5, 1.5),
        "fc_w": 0.02 * jax.random.normal(ks[13], (10, 7 * 7 * 32), jnp.float32),
        "fc_b": 0.02 * jax.random.normal(ks[14], (10,), jnp.float32),
    }

    fwd = jax.jit(cnn_fashion_mnist_forward)
    out = jax.block_until_ready(fwd(x, p))

    ref = reference_forward(x, p)
    assert out.shape == (B, 10)
    assert jnp.allclose(out, ref, atol=2e-3, rtol=2e-2), (
        f"mismatch vs reference: max abs err {jnp.max(jnp.abs(out - ref))}")

    print("KERNEL_OK")
</pallas_src>

<mosaic_0001>
module attributes {stable_mosaic.version = 11 : i64} {
  func.func @_conv_gemm_bn_relu_pool_kernel(%arg0: memref<4x392x25xf32, #tpu.memory_space<vmem>>, %arg1: memref<25x16xf32, #tpu.memory_space<vmem>>, %arg2: memref<1x16xf32, #tpu.memory_space<vmem>>, %arg3: memref<1x16xf32, #tpu.memory_space<vmem>>, %arg4: memref<392x16xf32, #tpu.memory_space<vmem>>) attributes {dimension_semantics = [], scalar_prefetch = 0 : i64, scratch_operands = 0 : i64, tpu.core_type = #tpu.core_type<tc>} {
    %c0 = arith.constant 0 : index
    %c0_0 = arith.constant 0 : index
    %0 = vector.load %arg1[%c0, %c0_0] : memref<25x16xf32, #tpu.memory_space<vmem>>, vector<25x16xf32>
    %c0_1 = arith.constant 0 : index
    %c0_2 = arith.constant 0 : index
    %1 = vector.load %arg2[%c0_1, %c0_2] : memref<1x16xf32, #tpu.memory_space<vmem>>, vector<1x16xf32>
    %c0_3 = arith.constant 0 : index
    %c0_4 = arith.constant 0 : index
    %2 = vector.load %arg3[%c0_3, %c0_4] : memref<1x16xf32, #tpu.memory_space<vmem>>, vector<1x16xf32>
    %c0_5 = arith.constant 0 : index
    %c0_6 = arith.constant 0 : index
    %c0_7 = arith.constant 0 : index
    %3 = vector.load %arg0[%c0_5, %c0_6, %c0_7] : memref<4x392x25xf32, #tpu.memory_space<vmem>>, vector<1x392x25xf32>
    %4 = vector.shape_cast %3 : vector<1x392x25xf32> to vector<392x25xf32>
    %cst = arith.constant dense<0.000000e+00> : vector<392x16xf32>
    %5 = tpu.matmul %4, %0, %cst {dimension_numbers = #tpu.dot_dimension_numbers<[1], [0], [0], [1], [0, 0, 1, 1], [], []>} : vector<392x25xf32>, vector<25x16xf32>, vector<392x16xf32> -> vector<392x16xf32>
    %6 = vector.broadcast %1 : vector<1x16xf32> to vector<392x16xf32>
    %7 = arith.mulf %5, %6 : vector<392x16xf32>
    %8 = vector.broadcast %2 : vector<1x16xf32> to vector<392x16xf32>
    %9 = arith.addf %7, %8 : vector<392x16xf32>
    %cst_8 = arith.constant 0.000000e+00 : f32
    %10 = vector.broadcast %cst_8 : f32 to vector<392x16xf32>
    %11 = arith.maximumf %9, %10 : vector<392x16xf32>
    %c1 = arith.constant 1 : index
    %c0_9 = arith.constant 0 : index
    %c0_10 = arith.constant 0 : index
    %12 = vector.load %arg0[%c1, %c0_9, %c0_10] : memref<4x392x25xf32, #tpu.memory_space<vmem>>, vector<1x392x25xf32>
    %13 = vector.shape_cast %12 : vector<1x392x25xf32> to vector<392x25xf32>
    %cst_11 = arith.constant dense<0.000000e+00> : vector<392x16xf32>
    %14 = tpu.matmul %13, %0, %cst_11 {dimension_numbers = #tpu.dot_dimension_numbers<[1], [0], [0], [1], [0, 0, 1, 1], [], []>} : vector<392x25xf32>, vector<25x16xf32>, vector<392x16xf32> -> vector<392x16xf32>
    %15 = vector.broadcast %1 : vector<1x16xf32> to vector<392x16xf32>
    %16 = arith.mulf %14, %15 : vector<392x16xf32>
    %17 = vector.broadcast %2 : vector<1x16xf32> to vector<392x16xf32>
    %18 = arith.addf %16, %17 : vector<392x16xf32>
    %cst_12 = arith.constant 0.000000e+00 : f32
    %19 = vector.broadcast %cst_12 : f32 to vector<392x16xf32>
    %20 = arith.maximumf %18, %19 : vector<392x16xf32>
    %21 = arith.maximumf %11, %20 : vector<392x16xf32>
    %c2 = arith.constant 2 : index
    %c0_13 = arith.constant 0 : index
    %c0_14 = arith.constant 0 : index
    %22 = vector.load %arg0[%c2, %c0_13, %c0_14] : memref<4x392x25xf32, #tpu.memory_space<vmem>>, vector<1x392x25xf32>
    %23 = vector.shape_cast %22 : vector<1x392x25xf32> to vector<392x25xf32>
    %cst_15 = arith.constant dense<0.000000e+00> : vector<392x16xf32>
    %24 = tpu.matmul %23, %0, %cst_15 {dimension_numbers = #tpu.dot_dimension_numbers<[1], [0], [0], [1], [0, 0, 1, 1], [], []>} : vector<392x25xf32>, vector<25x16xf32>, vector<392x16xf32> -> vector<392x16xf32>
    %25 = vector.broadcast %1 : vector<1x16xf32> to vector<392x16xf32>
    %26 = arith.mulf %24, %25 : vector<392x16xf32>
    %27 = vector.broadcast %2 : vector<1x16xf32> to vector<392x16xf32>
    %28 = arith.addf %26, %27 : vector<392x16xf32>
    %cst_16 = arith.constant 0.000000e+00 : f32
    %29 = vector.broadcast %cst_16 : f32 to vector<392x16xf32>
    %30 = arith.maximumf %28, %29 : vector<392x16xf32>
    %c3 = arith.constant 3 : index
    %c0_17 = arith.constant 0 : index
    %c0_18 = arith.constant 0 : index
    %31 = vector.load %arg0[%c3, %c0_17, %c0_18] : memref<4x392x25xf32, #tpu.memory_space<vmem>>, vector<1x392x25xf32>
    %32 = vector.shape_cast %31 : vector<1x392x25xf32> to vector<392x25xf32>
    %cst_19 = arith.constant dense<0.000000e+00> : vector<392x16xf32>
    %33 = tpu.matmul %32, %0, %cst_19 {dimension_numbers = #tpu.dot_dimension_numbers<[1], [0], [0], [1], [0, 0, 1, 1], [], []>} : vector<392x25xf32>, vector<25x16xf32>, vector<392x16xf32> -> vector<392x16xf32>
    %34 = vector.broadcast %1 : vector<1x16xf32> to vector<392x16xf32>
    %35 = arith.mulf %33, %34 : vector<392x16xf32>
    %36 = vector.broadcast %2 : vector<1x16xf32> to vector<392x16xf32>
    %37 = arith.addf %35, %36 : vector<392x16xf32>
    %cst_20 = arith.constant 0.000000e+00 : f32
    %38 = vector.broadcast %cst_20 : f32 to vector<392x16xf32>
    %39 = arith.maximumf %37, %38 : vector<392x16xf32>
    %40 = arith.maximumf %30, %39 : vector<392x16xf32>
    %41 = arith.maximumf %21, %40 : vector<392x16xf32>
    %c0_21 = arith.constant 0 : index
    %c0_22 = arith.constant 0 : index
    %42 = vector.load %arg4[%c0_21, %c0_22] : memref<392x16xf32, #tpu.memory_space<vmem>>, vector<392x16xf32>
    tpu.vector_store %arg4[%c0_21, %c0_22], %41 {strides = array<i32>} : memref<392x16xf32, #tpu.memory_space<vmem>>, vector<392x16xf32>,
    return
  }
}

module attributes {stable_mosaic.version = 11 : i64} {
  func.func @_conv_gemm_bn_relu_pool_kernel(%arg0: memref<4x98x400xf32, #tpu.memory_space<vmem>>, %arg1: memref<400x32xf32, #tpu.memory_space<vmem>>, %arg2: memref<1x32xf32, #tpu.memory_space<vmem>>, %arg3: memref<1x32xf32, #tpu.memory_space<vmem>>, %arg4: memref<98x32xf32, #tpu.memory_space<vmem>>) attributes {dimension_semantics = [], scalar_prefetch = 0 : i64, scratch_operands = 0 : i64, tpu.core_type = #tpu.core_type<tc>} {
    %c0 = arith.constant 0 : index
    %c0_0 = arith.constant 0 : index
    %0 = vector.load %arg1[%c0, %c0_0] : memref<400x32xf32, #tpu.memory_space<vmem>>, vector<400x32xf32>
    %c0_1 = arith.constant 0 : index
    %c0_2 = arith.constant 0 : index
    %1 = vector.load %arg2[%c0_1, %c0_2] : memref<1x32xf32, #tpu.memory_space<vmem>>, vector<1x32xf32>
    %c0_3 = arith.constant 0 : index
    %c0_4 = arith.constant 0 : index
    %2 = vector.load %arg3[%c0_3, %c0_4] : memref<1x32xf32, #tpu.memory_space<vmem>>, vector<1x32xf32>
    %c0_5 = arith.constant 0 : index
    %c0_6 = arith.constant 0 : index
    %c0_7 = arith.constant 0 : index
    %3 = vector.load %arg0[%c0_5, %c0_6, %c0_7] : memref<4x98x400xf32, #tpu.memory_space<vmem>>, vector<1x98x400xf32>
    %4 = vector.shape_cast %3 : vector<1x98x400xf32> to vector<98x400xf32>
    %cst = arith.constant dense<0.000000e+00> : vector<98x32xf32>
    %5 = tpu.matmul %4, %0, %cst {dimension_numbers = #tpu.dot_dimension_numbers<[1], [0], [0], [1], [0, 0, 1, 1], [], []>} : vector<98x400xf32>, vector<400x32xf32>, vector<98x32xf32> -> vector<98x32xf32>
    %6 = vector.broadcast %1 : vector<1x32xf32> to vector<98x32xf32>
    %7 = arith.mulf %5, %6 : vector<98x32xf32>
    %8 = vector.broadcast %2 : vector<1x32xf32> to vector<98x32xf32>
    %9 = arith.addf %7, %8 : vector<98x32xf32>
    %cst_8 = arith.constant 0.000000e+00 : f32
    %10 = vector.broadcast %cst_8 : f32 to vector<98x32xf32>
    %11 = arith.maximumf %9, %10 : vector<98x32xf32>
    %c1 = arith.constant 1 : index
    %c0_9 = arith.constant 0 : index
    %c0_10 = arith.constant 0 : index
    %12 = vector.load %arg0[%c1, %c0_9, %c0_10] : memref<4x98x400xf32, #tpu.memory_space<vmem>>, vector<1x98x400xf32>
    %13 = vector.shape_cast %12 : vector<1x98x400xf32> to vector<98x400xf32>
    %cst_11 = arith.constant dense<0.000000e+00> : vector<98x32xf32>
    %14 = tpu.matmul %13, %0, %cst_11 {dimension_numbers = #tpu.dot_dimension_numbers<[1], [0], [0], [1], [0, 0, 1, 1], [], []>} : vector<98x400xf32>, vector<400x32xf32>, vector<98x32xf32> -> vector<98x32xf32>
    %15 = vector.broadcast %1 : vector<1x32xf32> to vector<98x32xf32>
    %16 = arith.mulf %14, %15 : vector<98x32xf32>
    %17 = vector.broadcast %2 : vector<1x32xf32> to vector<98x32xf32>
    %18 = arith.addf %16, %17 : vector<98x32xf32>
    %cst_12 = arith.constant 0.000000e+00 : f32
    %19 = vector.broadcast %cst_12 : f32 to vector<98x32xf32>
    %20 = arith.maximumf %18, %19 : vector<98x32xf32>
    %21 = arith.maximumf %11, %20 : vector<98x32xf32>
    %c2 = arith.constant 2 : index
    %c0_13 = arith.constant 0 : index
    %c0_14 = arith.constant 0 : index
    %22 = vector.load %arg0[%c2, %c0_13, %c0_14] : memref<4x98x400xf32, #tpu.memory_space<vmem>>, vector<1x98x400xf32>
    %23 = vector.shape_cast %22 : vector<1x98x400xf32> to vector<98x400xf32>
    %cst_15 = arith.constant dense<0.000000e+00> : vector<98x32xf32>
    %24 = tpu.matmul %23, %0, %cst_15 {dimension_numbers = #tpu.dot_dimension_numbers<[1], [0], [0], [1], [0, 0, 1, 1], [], []>} : vector<98x400xf32>, vector<400x32xf32>, vector<98x32xf32> -> vector<98x32xf32>
    %25 = vector.broadcast %1 : vector<1x32xf32> to vector<98x32xf32>
    %26 = arith.mulf %24, %25 : vector<98x32xf32>
    %27 = vector.broadcast %2 : vector<1x32xf32> to vector<98x32xf32>
    %28 = arith.addf %26, %27 : vector<98x32xf32>
    %cst_16 = arith.constant 0.000000e+00 : f32
    %29 = vector.broadcast %cst_16 : f32 to vector<98x32xf32>
    %30 = arith.maximumf %28, %29 : vector<98x32xf32>
    %c3 = arith.constant 3 : index
    %c0_17 = arith.constant 0 : index
    %c0_18 = arith.constant 0 : index
    %31 = vector.load %arg0[%c3, %c0_17, %c0_18] : memref<4x98x400xf32, #tpu.memory_space<vmem>>, vector<1x98x400xf32>
    %32 = vector.shape_cast %31 : vector<1x98x400xf32> to vector<98x400xf32>
    %cst_19 = arith.constant dense<0.000000e+00> : vector<98x32xf32>
    %33 = tpu.matmul %32, %0, %cst_19 {dimension_numbers = #tpu.dot_dimension_numbers<[1], [0], [0], [1], [0, 0, 1, 1], [], []>} : vector<98x400xf32>, vector<400x32xf32>, vector<98x32xf32> -> vector<98x32xf32>
    %34 = vector.broadcast %1 : vector<1x32xf32> to vector<98x32xf32>
    %35 = arith.mulf %33, %34 : vector<98x32xf32>
    %36 = vector.broadcast %2 : vector<1x32xf32> to vector<98x32xf32>
    %37 = arith.addf %35, %36 : vector<98x32xf32>
    %cst_20 = arith.constant 0.000000e+00 : f32
    %38 = vector.broadcast %cst_20 : f32 to vector<98x32xf32>
    %39 = arith.maximumf %37, %38 : vector<98x32xf32>
    %40 = arith.maximumf %30, %39 : vector<98x32xf32>
    %41 = arith.maximumf %21, %40 : vector<98x32xf32>
    %c0_21 = arith.constant 0 : index
    %c0_22 = arith.constant 0 : index
    %42 = vector.load %arg4[%c0_21, %c0_22] : memref<98x32xf32, #tpu.memory_space<vmem>>, vector<98x32xf32>
    tpu.vector_store %arg4[%c0_21, %c0_22], %41 {strides = array<i32>} : memref<98x32xf32, #tpu.memory_space<vmem>>, vector<98x32xf32>,
    return
  }
}

module attributes {stable_mosaic.version = 11 : i64} {
  func.func @_linear_kernel(%arg0: memref<2x1568xf32, #tpu.memory_space<vmem>>, %arg1: memref<1568x10xf32, #tpu.memory_space<vmem>>, %arg2: memref<1x10xf32, #tpu.memory_space<vmem>>, %arg3: memref<2x10xf32, #tpu.memory_space<vmem>>) attributes {dimension_semantics = [], scalar_prefetch = 0 : i64, scratch_operands = 0 : i64, tpu.core_type = #tpu.core_type<tc>} {
    %c0 = arith.constant 0 : index
    %c0_0 = arith.constant 0 : index
    %0 = vector.load %arg0[%c0, %c0_0] : memref<2x1568xf32, #tpu.memory_space<vmem>>, vector<2x1568xf32>
    %c0_1 = arith.constant 0 : index
    %c0_2 = arith.constant 0 : index
    %1 = vector.load %arg1[%c0_1, %c0_2] : memref<1568x10xf32, #tpu.memory_space<vmem>>, vector<1568x10xf32>
    %cst = arith.constant dense<0.000000e+00> : vector<2x10xf32>
    %2 = tpu.matmul %0, %1, %cst {dimension_numbers = #tpu.dot_dimension_numbers<[1], [0], [0], [1], [0, 0, 1, 1], [], []>} : vector<2x1568xf32>, vector<1568x10xf32>, vector<2x10xf32> -> vector<2x10xf32>
    %c0_3 = arith.constant 0 : index
    %c0_4 = arith.constant 0 : index
    %3 = vector.load %arg2[%c0_3, %c0_4] : memref<1x10xf32, #tpu.memory_space<vmem>>, vector<1x10xf32>
    %4 = vector.broadcast %3 : vector<1x10xf32> to vector<2x10xf32>
    %5 = arith.addf %2, %4 : vector<2x10xf32>
    %c0_5 = arith.constant 0 : index
    %c0_6 = arith.constant 0 : index
    %6 = vector.load %arg3[%c0_5, %c0_6] : memref<2x10xf32, #tpu.memory_space<vmem>>, vector<2x10xf32>
    tpu.vector_store %arg3[%c0_5, %c0_6], %5 {strides = array<i32>} : memref<2x10xf32, #tpu.memory_space<vmem>>, vector<2x10xf32>,
    return
  }
}

</mosaic_0001>

<llo_original>
// kernel: cnn_fashion_mnist_forward.3
$region0: #{cnn_fashion_mnist_forward.3}
  #allocation0 [shape = 'u32[]', space=smem, size = 0x4, offset = 0x4, fixed_abs, tag = 'smem constant byte address 0x4 - core index']
  #allocation1 [shape = 'u32[144,128]{1,0:T(1,128)}', space=vmem, size = 0x12000, scoped, tag = 'internal scratch']
  %s0 = inlined_call_operand.vmem [shape: f32[4,392,25], index: 0, kind: input, shape index: {}]
  %s1 = inlined_call_operand.vmem [shape: f32[25,16], index: 1, kind: input, shape index: {}]
  %s2 = inlined_call_operand.vmem [shape: f32[1,16], index: 2, kind: input, shape index: {}]
  %s3 = inlined_call_operand.vmem [shape: f32[1,16], index: 3, kind: input, shape index: {}]
  %s4 = inlined_call_operand.vmem [shape: f32[392,16], index: 4, kind: output, shape index: {}]
  %s5 = sld [smem:[#allocation0]]
  $region26: #{cnn_fashion_mnist_forward.3} parent=0
    _
  %s7 = ssub.s32 1, %s5
  %s8 = scalar_select 0, %s7, %s5
  // Predicated region
  $region2: #{cnn_fashion_mnist_forward.3} parent=0 // pred_check
    _
  $region3: #{cnn_fashion_mnist_forward.3} parent=0 // pred_check_branch
    %10 = sbr.rel (0) target = $region5
  $region4: #{cnn_fashion_mnist_forward.3} parent=0 // pred_region
    _
  $region5: #{cnn_fashion_mnist_forward.3} parent=0 // pred_fallthru
    _
  // Predicated region
  $region6: #{cnn_fashion_mnist_forward.3} parent=0 // pred_check
    _
  $region7: #{cnn_fashion_mnist_forward.3} parent=0 // pred_check_branch
    %12 = sbr.rel (0) target = $region9
  $region8: #{cnn_fashion_mnist_forward.3} parent=0 // pred_region
    _
  $region9: #{cnn_fashion_mnist_forward.3} parent=0 // pred_fallthru
    _
  // Predicated region
  $region10: #{cnn_fashion_mnist_forward.3} parent=0 // pred_check
    _
  $region11: #{cnn_fashion_mnist_forward.3} parent=0 // pred_check_branch
    %14 = sbr.rel (0) target = $region13
  $region12: #{cnn_fashion_mnist_forward.3} parent=0 // pred_region
    _
  $region13: #{cnn_fashion_mnist_forward.3} parent=0 // pred_fallthru
    _
  // Predicated region
  $region14: #{cnn_fashion_mnist_forward.3} parent=0 // pred_check
    _
  $region15: #{cnn_fashion_mnist_forward.3} parent=0 // pred_check_branch
    %16 = sbr.rel (0) target = $region17
  $region16: #{cnn_fashion_mnist_forward.3} parent=0 // pred_region
    _
  $region17: #{cnn_fashion_mnist_forward.3} parent=0 // pred_fallthru
    _
  %v17 = vld [vmem:[%s1] sm:$0xff]
  %v18 = vld [vmem:[%s1 + $0x8] sm:$0xff]
  %v19 = vld [vmem:[%s1 + $0x10] sm:$0xff]
  %v20 = vld [vmem:[%s1 + $0x18] sm:$0x1]
  %v21 = vld [vmem:[%s2] sm:$0x1]
  %v22 = vld [vmem:[%s3] sm:$0x1]
  %v23 = vld [vmem:[%s0] sm:$0xff]
  %v24 = vld [vmem:[%s0 + $0x8] sm:$0xff]
  %v25 = vld [vmem:[%s0 + $0x10] sm:$0xff]
  %v26 = vld [vmem:[%s0 + $0x18] sm:$0xff]
  %v27 = vld [vmem:[%s0 + $0x20] sm:$0xff]
  %v28 = vld [vmem:[%s0 + $0x28] sm:$0xff]
  %v29 = vld [vmem:[%s0 + $0x30] sm:$0xff]
  %v30 = vld [vmem:[%s0 + $0x38] sm:$0xff]
  %v31 = vld [vmem:[%s0 + $0x40] sm:$0xff]
  %v32 = vld [vmem:[%s0 + $0x48] sm:$0xff]
  %v33 = vld [vmem:[%s0 + $0x50] sm:$0xff]
  %v34 = vld [vmem:[%s0 + $0x58] sm:$0xff]
  %v35 = vld [vmem:[%s0 + $0x60] sm:$0xff]
  %v36 = vld [vmem:[%s0 + $0x68] sm:$0xff]
  %v37 = vld [vmem:[%s0 + $0x70] sm:$0xff]
  %v38 = vld [vmem:[%s0 + $0x78] sm:$0xff]
  %v39 = vld [vmem:[%s0 + $0x80] sm:$0xff]
  %v40 = vld [vmem:[%s0 + $0x88] sm:$0xff]
  %v41 = vld [vmem:[%s0 + $0x90] sm:$0xff]
  %v42 = vld [vmem:[%s0 + $0x98] sm:$0xff]
  %v43 = vld [vmem:[%s0 + $0xa0] sm:$0xff]
  %v44 = vld [vmem:[%s0 + $0xa8] sm:$0xff]
  %v45 = vld [vmem:[%s0 + $0xb0] sm:$0xff]
  %v46 = vld [vmem:[%s0 + $0xb8] sm:$0xff]
  %v47 = vld [vmem:[%s0 + $0xc0] sm:$0xff]
  %v48 = vld [vmem:[%s0 + $0xc8] sm:$0xff]
  %v49 = vld [vmem:[%s0 + $0xd0] sm:$0xff]
  %v50 = vld [vmem:[%s0 + $0xd8] sm:$0xff]
  %v51 = vld [vmem:[%s0 + $0xe0] sm:$0xff]
  %v52 = vld [vmem:[%s0 + $0xe8] sm:$0xff]
  %v53 = vld [vmem:[%s0 + $0xf0] sm:$0xff]
  %v54 = vld [vmem:[%s0 + $0xf8] sm:$0xff]
  %v55 = vld [vmem:[%s0 + $0x100] sm:$0xff]
  %v56 = vld [vmem:[%s0 + $0x108] sm:$0xff]
  %v57 = vld [vmem:[%s0 + $0x110] sm:$0xff]
  %v58 = vld [vmem:[%s0 + $0x118] sm:$0xff]
  %v59 = vld [vmem:[%s0 + $0x120] sm:$0xff]
  %v60 = vld [vmem:[%s0 + $0x128] sm:$0xff]
  %v61 = vld [vmem:[%s0 + $0x130] sm:$0xff]
  %v62 = vld [vmem:[%s0 + $0x138] sm:$0xff]
  %v63 = vld [vmem:[%s0 + $0x140] sm:$0xff]
  %v64 = vld [vmem:[%s0 + $0x148] sm:$0xff]
  %v65 = vld [vmem:[%s0 + $0x150] sm:$0xff]
  %v66 = vld [vmem:[%s0 + $0x158] sm:$0xff]
  %v67 = vld [vmem:[%s0 + $0x160] sm:$0xff]
  %v68 = vld [vmem:[%s0 + $0x168] sm:$0xff]
  %v69 = vld [vmem:[%s0 + $0x170] sm:$0xff]
  %v70 = vld [vmem:[%s0 + $0x178] sm:$0xff]
  %v71 = vld [vmem:[%s0 + $0x180] sm:$0xff]
  %vm72 = vcmask 203776
  %v74 = vsel %vm72, %v23, 0
  %v77 = vsel %vm72, %v24, 0
  %v80 = vsel %vm72, %v25, 0
  %v83 = vsel %vm72, %v26, 0
  %v86 = vsel %vm72, %v27, 0
  %v89 = vsel %vm72, %v28, 0
  %v92 = vsel %vm72, %v29, 0
  %v95 = vsel %vm72, %v30, 0
  %v98 = vsel %vm72, %v31, 0
  %v101 = vsel %vm72, %v32, 0
  %v104 = vsel %vm72, %v33, 0
  %v107 = vsel %vm72, %v34, 0
  %v110 = vsel %vm72, %v35, 0
  %v113 = vsel %vm72, %v36, 0
  %v116 = vsel %vm72, %v37, 0
  %v119 = vsel %vm72, %v38, 0
  %v122 = vsel %vm72, %v39, 0
  %v125 = vsel %vm72, %v40, 0
  %v128 = vsel %vm72, %v41, 0
  %v131 = vsel %vm72, %v42, 0
  %v134 = vsel %vm72, %v43, 0
  %v137 = vsel %vm72, %v44, 0
  %v140 = vsel %vm72, %v45, 0
  %v143 = vsel %vm72, %v46, 0
  %v146 = vsel %vm72, %v47, 0
  %v149 = vsel %vm72, %v48, 0
  %v152 = vsel %vm72, %v49, 0
  %v155 = vsel %vm72, %v50, 0
  %v158 = vsel %vm72, %v51, 0
  %v161 = vsel %vm72, %v52, 0
  %v164 = vsel %vm72, %v53, 0
  %v167 = vsel %vm72, %v54, 0
  %v170 = vsel %vm72, %v55, 0
  %v173 = vsel %vm72, %v56, 0
  %v176 = vsel %vm72, %v57, 0
  %v179 = vsel %vm72, %v58, 0
  %v182 = vsel %vm72, %v59, 0
  %v185 = vsel %vm72, %v60, 0
  %v188 = vsel %vm72, %v61, 0
  %v191 = vsel %vm72, %v62, 0
  %v194 = vsel %vm72, %v63, 0
  %v197 = vsel %vm72, %v64, 0
  %v200 = vsel %vm72, %v65, 0
  %v203 = vsel %vm72, %v66, 0
  %v206 = vsel %vm72, %v67, 0
  %v209 = vsel %vm72, %v68, 0
  %v212 = vsel %vm72, %v69, 0
  %v215 = vsel %vm72, %v70, 0
  %v218 = vsel %vm72, %v71, 0
  %vm220 = vcmask 1040384
  %v222 = vsel %vm220, %v20, 0
  %224 = vmatprep.subr.mxu0 0.0
  %225 = vmatpush1.msra.mxu0 %v17
  %226 = vmatprep.subr.mxu0 0.0
  %227 = vmatpush1.msra.mxu0 %v18
  %228 = vmatprep.subr.mxu0 0.0
  %229 = vmatpush1.msra.mxu0 %v19
  %230 = vmatprep.subr.mxu0 0.0
  %231 = vmatpush1.msra.mxu0 %v222
  %232 = vmatprep.subr.mxu0 0.0
  %233 = vmatpush1.msra.mxu0 0.0
  %234 = vmatprep.subr.mxu0 0.0
  %235 = vmatpush1.msra.mxu0 0.0
  %236 = vmatprep.subr.mxu0 0.0
  %237 = vmatpush1.msra.mxu0 0.0
  %238 = vmatprep.subr.mxu0 0.0
  %239 = vmatpush1.msra.mxu0 0.0
  %240 = vmatprep.subr.mxu0 0.0
  %241 = vmatpush1.msra.mxu0 0.0
  %242 = vmatprep.subr.mxu0 0.0
  %243 = vmatpush1.msra.mxu0 0.0
  %244 = vmatprep.subr.mxu0 0.0
  %245 = vmatpush1.msra.mxu0 0.0
  %246 = vmatprep.subr.mxu0 0.0
  %247 = vmatpush1.msra.mxu0 0.0
  %248 = vmatprep.subr.mxu0 0.0
  %249 = vmatpush1.msra.mxu0 0.0
  %250 = vmatprep.subr.mxu0 0.0
  %251 = vmatpush1.msra.mxu0 0.0
  %252 = vmatprep.subr.mxu0 0.0
  %253 = vmatpush1.msra.mxu0 0.0
  %254 = vmatprep.subr.mxu0 0.0
  %255 = vmatpush1.msra.mxu0 0.0
  %256 = vmatprep.subr.mxu0 0.0
  %257 = vmatpush1.msra.mxu0 0.0
  %258 = vmatprep.subr.mxu0 0.0
  %259 = vmatpush1.msra.mxu0 0.0
  %260 = vmatprep.subr.mxu0 0.0
  %261 = vmatpush1.msra.mxu0 0.0
  %262 = vmatprep.subr.mxu0 0.0
  %263 = vmatpush1.msra.mxu0 0.0
  %264 = vmatprep.subr.mxu0 0.0
  %265 = vmatpush1.msra.mxu0 0.0
  %266 = vmatprep.subr.mxu0 0.0
  %267 = vmatpush1.msra.mxu0 0.0
  %268 = vmatprep.subr.mxu0 0.0
  %269 = vmatpush1.msra.mxu0 0.0
  %270 = vmatprep.subr.mxu0 0.0
  %271 = vmatpush1.msra.mxu0 0.0
  %272 = vmatprep.subr.mxu0 0.0
  %273 = vmatpush1.msra.mxu0 0.0
  %274 = vmatprep.subr.mxu0 0.0
  %275 = vmatpush1.msra.mxu0 0.0
  %276 = vmatprep.subr.mxu0 0.0
  %277 = vmatpush1.msra.mxu0 0.0
  %278 = vmatprep.subr.mxu0 0.0
  %279 = vmatpush1.msra.mxu0 0.0
  %280 = vmatprep.subr.mxu0 0.0
  %281 = vmatpush1.msra.mxu0 0.0
  %282 = vmatprep.subr.mxu0 0.0
  %283 = vmatpush1.msra.mxu0 0.0
  %284 = vmatprep.subr.mxu0 0.0
  %285 = vmatpush1.msra.mxu0 0.0
  %286 = vmatprep.subr.mxu0 0.0
  %287 = vmatpush1.msra.mxu0 0.0
  %288 = vmatprep.mubr.f32.mxu0 0.0
  %289 = vmatmul.mubr.f32.gmra.mrb[0].mxu0 %v74
  %v290 = vpop.f32.mrb[0].mxu0
  %v291 = vadd.f32 0.0, %v290
  %v292 = vpop.f32.mrb[0].mxu0
  %293 = vmatprep.mubr.f32.mxu0 0.0
  %294 = vmatmul.mubr.f32.gmra.mrb[0].mxu0 %v77
  %v295 = vpop.f32.mrb[0].mxu0
  %v296 = vadd.f32 0.0, %v295
  %v297 = vpop.f32.mrb[0].mxu0
  %298 = vmatprep.mubr.f32.mxu0 0.0
  %299 = vmatmul.mubr.f32.gmra.mrb[0].mxu0 %v80
  %v300 = vpop.f32.mrb[0].mxu0
  %v301 = vadd.f32 0.0, %v300
  %v302 = vpop.f32.mrb[0].mxu0
  %303 = vmatprep.mubr.f32.mxu0 0.0
  %304 = vmatmul.mubr.f32.gmra.mrb[0].mxu0 %v83
  %v305 = vpop.f32.mrb[0].mxu0
  %v306 = vadd.f32 0.0, %v305
  %v307 = vpop.f32.mrb[0].mxu0
  %308 = vmatprep.mubr.f32.mxu0 0.0
  %309 = vmatmul.mubr.f32.gmra.mrb[0].mxu0 %v86
  %v310 = vpop.f32.mrb[0].mxu0
  %v311 = vadd.f32 0.0, %v310
  %v312 = vpop.f32.mrb[0].mxu0
  %313 = vmatprep.mubr.f32.mxu0 0.0
  %314 = vmatmul.mubr.f32.gmra.mrb[0].mxu0 %v89
  %v315 = vpop.f32.mrb[0].mxu0
  %v316 = vadd.f32 0.0, %v315
  %v317 = vpop.f32.mrb[0].mxu0
  %318 = vmatprep.mubr.f32.mxu0 0.0
  %319 = vmatmul.mubr.f32.gmra.mrb[0].mxu0 %v92
  %v320 = vpop.f32.mrb[0].mxu0
  %v321 = vadd.f32 0.0, %v320
  %v322 = vpop.f32.mrb[0].mxu0
  %323 = vmatprep.mubr.f32.mxu0 0.0
  %324 = vmatmul.mubr.f32.gmra.mrb[0].mxu0 %v95
  %v325 = vpop.f32.mrb[0].mxu0
  %v326 = vadd.f32 0.0, %v325
  %v327 = vpop.f32.mrb[0].mxu0
  %328 = vmatprep.mubr.f32.mxu0 0.0
  %329 = vmatmul.mubr.f32.gmra.mrb[0].mxu0 %v98
  %v330 = vpop.f32.mrb[0].mxu0
  %v331 = vadd.f32 0.0, %v330
  %v332 = vpop.f32.mrb[0].mxu0
  %333 = vmatprep.mubr.f32.mxu0 0.0
  %334 = vmatmul.mubr.f32.gmra.mrb[0].mxu0 %v101
  %v335 = vpop.f32.mrb[0].mxu0
  %v336 = vadd.f32 0.0, %v335
  %v337 = vpop.f32.mrb[0].mxu0
  %338 = vmatprep.mubr.f32.mxu0 0.0
  %339 = vmatmul.mubr.f32.gmra.mrb[0].mxu0 %v104
  %v340 = vpop.f32.mrb[0].mxu0
  %v341 = vadd.f32 0.0, %v340
  %v342 = vpop.f32.mrb[0].mxu0
  %343 = vmatprep.mubr.f32.mxu0 0.0
  %344 = vmatmul.mubr.f32.gmra.mrb[0].mxu0 %v107
  %v345 = vpop.f32.mrb[0].mxu0
  %v346 = vadd.f32 0.0, %v345
  %v347 = vpop.f32.mrb[0].mxu0
  %348 = vmatprep.mubr.f32.mxu0 0.0
  %349 = vmatmul.mubr.f32.gmra.mrb[0].mxu0 %v110
  %v350 = vpop.f32.mrb[0].mxu0
  %v351 = vadd.f32 0.0, %v350
  %v352 = vpop.f32.mrb[0].mxu0
  %353 = vmatprep.mubr.f32.mxu0 0.0
  %354 = vmatmul.mubr.f32.gmra.mrb[0].mxu0 %v113
  %v355 = vpop.f32.mrb[0].mxu0
  %v356 = vadd.f32 0.0, %v355
  %v357 = vpop.f32.mrb[0].mxu0
  %358 = vmatprep.mubr.f32.mxu0 0.0
  %359 = vmatmul.mubr.f32.gmra.mrb[0].mxu0 %v116
  %v360 = vpop.f32.mrb[0].mxu0
  %v361 = vadd.f32 0.0, %v360
  %v362 = vpop.f32.mrb[0].mxu0
  %363 = vmatprep.mubr.f32.mxu0 0.0
  %364 = vmatmul.mubr.f32.gmra.mrb[0].mxu0 %v119
  %v365 = vpop.f32.mrb[0].mxu0
  %v366 = vadd.f32 0.0, %v365
  %v367 = vpop.f32.mrb[0].mxu0
  %368 = vmatprep.mubr.f32.mxu0 0.0
  %369 = vmatmul.mubr.f32.gmra.mrb[0].mxu0 %v122
  %v370 = vpop.f32.mrb[0].mxu0
  %v371 = vadd.f32 0.0, %v370
  %v372 = vpop.f32.mrb[0].mxu0
  %373 = vmatprep.mubr.f32.mxu0 0.0
  %374 = vmatmul.mubr.f32.gmra.mrb[0].mxu0 %v125
  %v375 = vpop.f32.mrb[0].mxu0
  %v376 = vadd.f32 0.0, %v375
  %v377 = vpop.f32.mrb[0].mxu0
  %378 = vmatprep.mubr.f32.mxu0 0.0
  %379 = vmatmul.mubr.f32.gmra.mrb[0].mxu0 %v128
  %v380 = vpop.f32.mrb[0].mxu0
  %v381 = vadd.f32 0.0, %v380
  %v382 = vpop.f32.mrb[0].mxu0
  %383 = vmatprep.mubr.f32.mxu0 0.0
  %384 = vmatmul.mubr.f32.gmra.mrb[0].mxu0 %v131
  %v385 = vpop.f32.mrb[0].mxu0
  %v386 = vadd.f32 0.0, %v385
  %v387 = vpop.f32.mrb[0].mxu0
  %388 = vmatprep.mubr.f32.mxu0 0.0
  %389 = vmatmul.mubr.f32.gmra.mrb[0].mxu0 %v134
  %v390 = vpop.f32.mrb[0].mxu0
  %v391 = vadd.f32 0.0, %v390
  %v392 = vpop.f32.mrb[0].mxu0
  %393 = vmatprep.mubr.f32.mxu0 0.0
  %394 = vmatmul.mubr.f32.gmra.mrb[0].mxu0 %v137
  %v395 = vpop.f32.mrb[0].mxu0
  %v396 = vadd.f32 0.0, %v395
  %v397 = vpop.f32.mrb[0].mxu0
  %398 = vmatprep.mubr.f32.mxu0 0.0
  %399 = vmatmul.mubr.f32.gmra.mrb[0].mxu0 %v140
  %v400 = vpop.f32.mrb[0].mxu0
  %v401 = vadd.f32 0.0, %v400
  %v402 = vpop.f32.mrb[0].mxu0
  %403 = vmatprep.mubr.f32.mxu0 0.0
  %404 = vmatmul.mubr.f32.gmra.mrb[0].mxu0 %v143
  %v405 = vpop.f32.mrb[0].mxu0
  %v406 = vadd.f32 0.0, %v405
  %v407 = vpop.f32.mrb[0].mxu0
  %408 = vmatprep.mubr.f32.mxu0 0.0
  %409 = vmatmul.mubr.f32.gmra.mrb[0].mxu0 %v146
  %v410 = vpop.f32.mrb[0].mxu0
  %v411 = vadd.f32 0.0, %v410
  %v412 = vpop.f32.mrb[0].mxu0
  %413 = vmatprep.mubr.f32.mxu0 0.0
  %414 = vmatmul.mubr.f32.gmra.mrb[0].mxu0 %v149
  %v415 = vpop.f32.mrb[0].mxu0
  %v416 = vadd.f32 0.0, %v415
  %v417 = vpop.f32.mrb[0].mxu0
  %418 = vmatprep.mubr.f32.mxu0 0.0
  %419 = vmatmul.mubr.f32.gmra.mrb[0].mxu0 %v152
  %v420 = vpop.f32.mrb[0].mxu0
  %v421 = vadd.f32 0.0, %v420
  %v422 = vpop.f32.mrb[0].mxu0
  %423 = vmatprep.mubr.f32.mxu0 0.0
  %424 = vmatmul.mubr.f32.gmra.mrb[0].mxu0 %v155
  %v425 = vpop.f32.mrb[0].mxu0
  %v426 = vadd.f32 0.0, %v425
  %v427 = vpop.f32.mrb[0].mxu0
  %428 = vmatprep.mubr.f32.mxu0 0.0
  %429 = vmatmul.mubr.f32.gmra.mrb[0].mxu0 %v158
  %v430 = vpop.f32.mrb[0].mxu0
  %v431 = vadd.f32 0.0, %v430
  %v432 = vpop.f32.mrb[0].mxu0
  %433 = vmatprep.mubr.f32.mxu0 0.0
  %434 = vmatmul.mubr.f32.gmra.mrb[0].mxu0 %v161
  %v435 = vpop.f32.mrb[0].mxu0
  %v436 = vadd.f32 0.0, %v435
  %v437 = vpop.f32.mrb[0].mxu0
  %438 = vmatprep.mubr.f32.mxu0 0.0
  %439 = vmatmul.mubr.f32.gmra.mrb[0].mxu0 %v164
  %v440 = vpop.f32.mrb[0].mxu0
  %v441 = vadd.f32 0.0, %v440
  %v442 = vpop.f32.mrb[0].mxu0
  %443 = vmatprep.mubr.f32.mxu0 0.0
  %444 = vmatmul.mubr.f32.gmra.mrb[0].mxu0 %v167
  %v445 = vpop.f32.mrb[0].mxu0
  %v446 = vadd.f32 0.0, %v445
  %v447 = vpop.f32.mrb[0].mxu0
  %448 = vmatprep.mubr.f32.mxu0 0.0
  %449 = vmatmul.mubr.f32.gmra.mrb[0].mxu0 %v170
  %v450 = vpop.f32.mrb[0].mxu0
  %v451 = vadd.f32 0.0, %v450
  %v452 = vpop.f32.mrb[0].mxu0
  %453 = vmatprep.mubr.f32.mxu0 0.0
  %454 = vmatmul.mubr.f32.gmra.mrb[0].mxu0 %v173
  %v455 = vpop.f32.mrb[0].mxu0
  %v456 = vadd.f32 0.0, %v455
  %v457 = vpop.f32.mrb[0].mxu0
  %458 = vmatprep.mubr.f32.mxu0 0.0
  %459 = vmatmul.mubr.f32.gmra.mrb[0].mxu0 %v176
  %v460 = vpop.f32.mrb[0].mxu0
  %v461 = vadd.f32 0.0, %v460
  %v462 = vpop.f32.mrb[0].mxu0
  %463 = vmatprep.mubr.f32.mxu0 0.0
  %464 = vmatmul.mubr.f32.gmra.mrb[0].mxu0 %v179
  %v465 = vpop.f32.mrb[0].mxu0
  %v466 = vadd.f32 0.0, %v465
  %v467 = vpop.f32.mrb[0].mxu0
  %468 = vmatprep.mubr.f32.mxu0 0.0
  %469 = vmatmul.mubr.f32.gmra.mrb[0].mxu0 %v182
  %v470 = vpop.f32.mrb[0].mxu0
  %v471 = vadd.f32 0.0, %v470
  %v472 = vpop.f32.mrb[0].mxu0
  %473 = vmatprep.mubr.f32.mxu0 0.0
  %474 = vmatmul.mubr.f32.gmra.mrb[0].mxu0 %v185
  %v475 = vpop.f32.mrb[0].mxu0
  %v476 = vadd.f32 0.0, %v475
  %v477 = vpop.f32.mrb[0].mxu0
  %478 = vmatprep.mubr.f32.mxu0 0.0
  %479 = vmatmul.mubr.f32.gmra.mrb[0].mxu0 %v188
  %v480 = vpop.f32.mrb[0].mxu0
  %v481 = vadd.f32 0.0, %v480
  %v482 = vpop.f32.mrb[0].mxu0
  %483 = vmatprep.mubr.f32.mxu0 0.0
  %484 = vmatmul.mubr.f32.gmra.mrb[0].mxu0 %v191
  %v485 = vpop.f32.mrb[0].mxu0
  %v486 = vadd.f32 0.0, %v485
  %v487 = vpop.f32.mrb[0].mxu0
  %488 = vmatprep.mubr.f32.mxu0 0.0
  %489 = vmatmul.mubr.f32.gmra.mrb[0].mxu0 %v194
  %v490 = vpop.f32.mrb[0].mxu0
  %v491 = vadd.f32 0.0, %v490
  %v492 = vpop.f32.mrb[0].mxu0
  %493 = vmatprep.mubr.f32.mxu0 0.0
  %494 = vmatmul.mubr.f32.gmra.mrb[0].mxu0 %v197
  %v495 = vpop.f32.mrb[0].mxu0
  %v496 = vadd.f32 0.0, %v495
  %v497 = vpop.f32.mrb[0].mxu0
  %498 = vmatprep.mubr.f32.mxu0 0.0
  %499 = vmatmul.mubr.f32.gmra.mrb[0].mxu0 %v200
  %v500 = vpop.f32.mrb[0].mxu0
  %v501 = vadd.f32 0.0, %v500
  %v502 = vpop.f32.mrb[0].mxu0
  %503 = vmatprep.mubr.f32.mxu0 0.0
  %504 = vmatmul.mubr.f32.gmra.mrb[0].mxu0 %v203
  %v505 = vpop.f32.mrb[0].mxu0
  %v506 = vadd.f32 0.0, %v505
  %v507 = vpop.f32.mrb[0].mxu0
  %508 = vmatprep.mubr.f32.mxu0 0.0
  %509 = vmatmul.mubr.f32.gmra.mrb[0].mxu0 %v206
  %v510 = vpop.f32.mrb[0].mxu0
  %v511 = vadd.f32 0.0, %v510
  %v512 = vpop.f32.mrb[0].mxu0
  %513 = vmatprep.mubr.f32.mxu0 0.0
  %514 = vmatmul.mubr.f32.gmra.mrb[0].mxu0 %v209
  %v515 = vpop.f32.mrb[0].mxu0
  %v516 = vadd.f32 0.0, %v515
  %v517 = vpop.f32.mrb[0].mxu0
  %518 = vmatprep.mubr.f32.mxu0 0.0
  %519 = vmatmul.mubr.f32.gmra.mrb[0].mxu0 %v212
  %v520 = vpop.f32.mrb[0].mxu0
  %v521 = vadd.f32 0.0, %v520
  %v522 = vpop.f32.mrb[0].mxu0
  %523 = vmatprep.mubr.f32.mxu0 0.0
  %524 = vmatmul.mubr.f32.gmra.mrb[0].mxu0 %v215
  %v525 = vpop.f32.mrb[0].mxu0
  %v526 = vadd.f32 0.0, %v525
  %v527 = vpop.f32.mrb[0].mxu0
  %528 = vmatprep.mubr.f32.mxu0 0.0
  %529 = vmatmul.mubr.f32.gmra.mrb[0].mxu0 %v218
  %v530 = vpop.f32.mrb[0].mxu0
  %v531 = vadd.f32 0.0, %v530
  %v532 = vpop.f32.mrb[0].mxu0
  %533 = vdwg.mxu0
  %v535 = vlaneseq
  %v536 = vshrl.u32 %v535, 7
  %v537 = vsub.s32 0, %v536
  %v538 = vrot.slane %v21, %v537
  %v540 = vmul.f32 %v291, %v538
  %v541 = vmul.f32 %v296, %v538
  %v542 = vmul.f32 %v301, %v538
  %v543 = vmul.f32 %v306, %v538
  %v544 = vmul.f32 %v311, %v538
  %v545 = vmul.f32 %v316, %v538
  %v546 = vmul.f32 %v321, %v538
  %v547 = vmul.f32 %v326, %v538
  %v548 = vmul.f32 %v331, %v538
  %v549 = vmul.f32 %v336, %v538
  %v550 = vmul.f32 %v341, %v538
  %v551 = vmul.f32 %v346, %v538
  %v552 = vmul.f32 %v351, %v538
  %v553 = vmul.f32 %v356, %v538
  %v554 = vmul.f32 %v361, %v538
  %v555 = vmul.f32 %v366, %v538
  %v556 = vmul.f32 %v371, %v538
  %v557 = vmul.f32 %v376, %v538
  %v558 = vmul.f32 %v381, %v538
  %v559 = vmul.f32 %v386, %v538
  %v560 = vmul.f32 %v391, %v538
  %v561 = vmul.f32 %v396, %v538
  %v562 = vmul.f32 %v401, %v538
  %v563 = vmul.f32 %v406, %v538
  %v564 = vmul.f32 %v411, %v538
  %v565 = vmul.f32 %v416, %v538
  %v566 = vmul.f32 %v421, %v538
  %v567 = vmul.f32 %v426, %v538
  %v568 = vmul.f32 %v431, %v538
  %v569 = vmul.f32 %v436, %v538
  %v570 = vmul.f32 %v441, %v538
  %v571 = vmul.f32 %v446, %v538
  %v572 = vmul.f32 %v451, %v538
  %v573 = vmul.f32 %v456, %v538
  %v574 = vmul.f32 %v461, %v538
  %v575 = vmul.f32 %v466, %v538
  %v576 = vmul.f32 %v471, %v538
  %v577 = vmul.f32 %v476, %v538
  %v578 = vmul.f32 %v481, %v538
  %v579 = vmul.f32 %v486, %v538
  %v580 = vmul.f32 %v491, %v538
  %v581 = vmul.f32 %v496, %v538
  %v582 = vmul.f32 %v501, %v538
  %v583 = vmul.f32 %v506, %v538
  %v584 = vmul.f32 %v511, %v538
  %v585 = vmul.f32 %v516, %v538
  %v586 = vmul.f32 %v521, %v538
  %v587 = vmul.f32 %v526, %v538
  %v588 = vmul.f32 %v531, %v538
  %v590 = vlaneseq
  %v591 = vshrl.u32 %v590, 7
  %v592 = vsub.s32 0, %v591
  %v593 = vrot.slane %v22, %v592
  %v595 = vadd.f32 %v540, %v593
  %v596 = vadd.f32 %v541, %v593
  %v597 = vadd.f32 %v542, %v593
  %v598 = vadd.f32 %v543, %v593
  %v599 = vadd.f32 %v544, %v593
  %v600 = vadd.f32 %v545, %v593
  %v601 = vadd.f32 %v546, %v593
  %v602 = vadd.f32 %v547, %v593
  %v603 = vadd.f32 %v548, %v593
  %v604 = vadd.f32 %v549, %v593
  %v605 = vadd.f32 %v550, %v593
  %v606 = vadd.f32 %v551, %v593
  %v607 = vadd.f32 %v552, %v593
  %v608 = vadd.f32 %v553, %v593
  %v609 = vadd.f32 %v554, %v593
  %v610 = vadd.f32 %v555, %v593
  %v611 = vadd.f32 %v556, %v593
  %v612 = vadd.f32 %v557, %v593
  %v613 = vadd.f32 %v558, %v593
  %v614 = vadd.f32 %v559, %v593
  %v615 = vadd.f32 %v560, %v593
  %v616 = vadd.f32 %v561, %v593
  %v617 = vadd.f32 %v562, %v593
  %v618 = vadd.f32 %v563, %v593
  %v619 = vadd.f32 %v564, %v593
  %v620 = vadd.f32 %v565, %v593
  %v621 = vadd.f32 %v566, %v593
  %v622 = vadd.f32 %v567, %v593
  %v623 = vadd.f32 %v568, %v593
  %v624 = vadd.f32 %v569, %v593
  %v625 = vadd.f32 %v570, %v593
  %v626 = vadd.f32 %v571, %v593
  %v627 = vadd.f32 %v572, %v593
  %v628 = vadd.f32 %v573, %v593
  %v629 = vadd.f32 %v574, %v593
  %v630 = vadd.f32 %v575, %v593
  %v631 = vadd.f32 %v576, %v593
  %v632 = vadd.f32 %v577, %v593
  %v633 = vadd.f32 %v578, %v593
  %v634 = vadd.f32 %v579, %v593
  %v635 = vadd.f32 %v580, %v593
  %v636 = vadd.f32 %v581, %v593
  %v637 = vadd.f32 %v582, %v593
  %v638 = vadd.f32 %v583, %v593
  %v639 = vadd.f32 %v584, %v593
  %v640 = vadd.f32 %v585, %v593
  %v641 = vadd.f32 %v586, %v593
  %v642 = vadd.f32 %v587, %v593
  %v643 = vadd.f32 %v588, %v593
  %v644 = vmax.f32 %v595, 0.0
  %v645 = vmax.f32 %v596, 0.0
  %v646 = vmax.f32 %v597, 0.0
  %v647 = vmax.f32 %v598, 0.0
  %v648 = vmax.f32 %v599, 0.0
  %v649 = vmax.f32 %v600, 0.0
  %v650 = vmax.f32 %v601, 0.0
  %v651 = vmax.f32 %v602, 0.0
  %v652 = vmax.f32 %v603, 0.0
  %v653 = vmax.f32 %v604, 0.0
  %v654 = vmax.f32 %v605, 0.0
  %v655 = vmax.f32 %v606, 0.0
  %v656 = vmax.f32 %v607, 0.0
  %v657 = vmax.f32 %v608, 0.0
  %v658 = vmax.f32 %v609, 0.0
  %v659 = vmax.f32 %v610, 0.0
  %v660 = vmax.f32 %v611, 0.0
  %v661 = vmax.f32 %v612, 0.0
  %v662 = vmax.f32 %v613, 0.0
  %v663 = vmax.f32 %v614, 0.0
  %v664 = vmax.f32 %v615, 0.0
  %v665 = vmax.f32 %v616, 0.0
  %v666 = vmax.f32 %v617, 0.0
  %v667 = vmax.f32 %v618, 0.0
  %v668 = vmax.f32 %v619, 0.0
  %v669 = vmax.f32 %v620, 0.0
  %v670 = vmax.f32 %v621, 0.0
  %v671 = vmax.f32 %v622, 0.0
  %v672 = vmax.f32 %v623, 0.0
  %v673 = vmax.f32 %v624, 0.0
  %v674 = vmax.f32 %v625, 0.0
  %v675 = vmax.f32 %v626, 0.0
  %v676 = vmax.f32 %v627, 0.0
  %v677 = vmax.f32 %v628, 0.0
  %v678 = vmax.f32 %v629, 0.0
  %v679 = vmax.f32 %v630, 0.0
  %v680 = vmax.f32 %v631, 0.0
  %v681 = vmax.f32 %v632, 0.0
  %v682 = vmax.f32 %v633, 0.0
  %v683 = vmax.f32 %v634, 0.0
  %v684 = vmax.f32 %v635, 0.0
  %v685 = vmax.f32 %v636, 0.0
  %v686 = vmax.f32 %v637, 0.0
  %v687 = vmax.f32 %v638, 0.0
  %v688 = vmax.f32 %v639, 0.0
  %v689 = vmax.f32 %v640, 0.0
  %v690 = vmax.f32 %v641, 0.0
  %v691 = vmax.f32 %v642, 0.0
  %v692 = vmax.f32 %v643, 0.0
  %s693 = scalar_lea.vmem %s0, 392
  %v694 = vld [vmem:[%s693] sm:$0xff]
  %v695 = vld [vmem:[%s693 + $0x8] sm:$0xff]
  %v696 = vld [vmem:[%s693 + $0x10] sm:$0xff]
  %v697 = vld [vmem:[%s693 + $0x18] sm:$0xff]
  %v698 = vld [vmem:[%s693 + $0x20] sm:$0xff]
  %v699 = vld [vmem:[%s693 + $0x28] sm:$0xff]
  %v700 = vld [vmem:[%s693 + $0x30] sm:$0xff]
  %v701 = vld [vmem:[%s693 + $0x38] sm:$0xff]
  %v702 = vld [vmem:[%s693 + $0x40] sm:$0xff]
  %v703 = vld [vmem:[%s693 + $0x48] sm:$0xff]
  %v704 = vld [vmem:[%s693 + $0x50] sm:$0xff]
  %v705 = vld [vmem:[%s693 + $0x58] sm:$0xff]
  %v706 = vld [vmem:[%s693 + $0x60] sm:$0xff]
  %v707 = vld [vmem:[%s693 + $0x68] sm:$0xff]
  %v708 = vld [vmem:[%s693 + $0x70] sm:$0xff]
  %v709 = vld [vmem:[%s693 + $0x78] sm:$0xff]
  %v710 = vld [vmem:[%s693 + $0x80] sm:$0xff]
  %v711 = vld [vmem:[%s693 + $0x88] sm:$0xff]
  %v712 = vld [vmem:[%s693 + $0x90] sm:$0xff]
  %v713 = vld [vmem:[%s693 + $0x98] sm:$0xff]
  %v714 = vld [vmem:[%s693 + $0xa0] sm:$0xff]
  %v715 = vld [vmem:[%s693 + $0xa8] sm:$0xff]
  %v716 = vld [vmem:[%s693 + $0xb0] sm:$0xff]
  %v717 = vld [vmem:[%s693 + $0xb8] sm:$0xff]
  %v718 = vld [vmem:[%s693 + $0xc0] sm:$0xff]
  %v719 = vld [vmem:[%s693 + $0xc8] sm:$0xff]
  %v720 = vld [vmem:[%s693 + $0xd0] sm:$0xff]
  %v721 = vld [vmem:[%s693 + $0xd8] sm:$0xff]
  %v722 = vld [vmem:[%s693 + $0xe0] sm:$0xff]
  %v723 = vld [vmem:[%s693 + $0xe8] sm:$0xff]
  %v724 = vld [vmem:[%s693 + $0xf0] sm:$0xff]
  %v725 = vld [vmem:[%s693 + $0xf8] sm:$0xff]
  %v726 = vld [vmem:[%s693 + $0x100] sm:$0xff]
  %v727 = vld [vmem:[%s693 + $0x108] sm:$0xff]
  %v728 = vld [vmem:[%s693 + $0x110] sm:$0xff]
  %v729 = vld [vmem:[%s693 + $0x118] sm:$0xff]
  %v730 = vld [vmem:[%s693 + $0x120] sm:$0xff]
  %v731 = vld [vmem:[%s693 + $0x128] sm:$0xff]
  %v732 = vld [vmem:[%s693 + $0x130] sm:$0xff]
  %v733 = vld [vmem:[%s693 + $0x138] sm:$0xff]
  %v734 = vld [vmem:[%s693 + $0x140] sm:$0xff]
  %v735 = vld [vmem:[%s693 + $0x148] sm:$0xff]
  %v736 = vld [vmem:[%s693 + $0x150] sm:$0xff]
  %v737 = vld [vmem:[%s693 + $0x158] sm:$0xff]
  %v738 = vld [vmem:[%s693 + $0x160] sm:$0xff]
  %v739 = vld [vmem:[%s693 + $0x168] sm:$0xff]
  %v740 = vld [vmem:[%s693 + $0x170] sm:$0xff]
  %v741 = vld [vmem:[%s693 + $0x178] sm:$0xff]
  %v742 = vld [vmem:[%s693 + $0x180] sm:$0xff]
  %v744 = vsel %vm72, %v694, 0
  %v747 = vsel %vm72, %v695, 0
  %v750 = vsel %vm72, %v696, 0
  %v753 = vsel %vm72, %v697, 0
  %v756 = vsel %vm72, %v698, 0
  %v759 = vsel %vm72, %v699, 0
  %v762 = vsel %vm72, %v700, 0
  %v765 = vsel %vm72, %v701, 0
  %v768 = vsel %vm72, %v702, 0
  %v771 = vsel %vm72, %v703, 0
  %v774 = vsel %vm72, %v704, 0
  %v777 = vsel %vm72, %v705, 0
  %v780 = vsel %vm72, %v706, 0
  %v783 = vsel %vm72, %v707, 0
  %v786 = vsel %vm72, %v708, 0
  %v789 = vsel %vm72, %v709, 0
  %v792 = vsel %vm72, %v710, 0
  %v795 = vsel %vm72, %v711, 0
  %v798 = vsel %vm72, %v712, 0
  %v801 = vsel %vm72, %v713, 0
  %v804 = vsel %vm72, %v714, 0
  %v807 = vsel %vm72, %v715, 0
  %v810 = vsel %vm72, %v716, 0
  %v813 = vsel %vm72, %v717, 0
  %v816 = vsel %vm72, %v718, 0
  %v819 = vsel %vm72, %v719, 0
  %v822 = vsel %vm72, %v720, 0
  %v825 = vsel %vm72, %v721, 0
  %v828 = vsel %vm72, %v722, 0
  %v831 = vsel %vm72, %v723, 0
  %v834 = vsel %vm72, %v724, 0
  %v837 = vsel %vm72, %v725, 0
  %v840 = vsel %vm72, %v726, 0
  %v843 = vsel %vm72, %v727, 0
  %v846 = vsel %vm72, %v728, 0
  %v849 = vsel %vm72, %v729, 0
  %v852 = vsel %vm72, %v730, 0
  %v855 = vsel %vm72, %v731, 0
  %v858 = vsel %vm72, %v732, 0
  %v861 = vsel %vm72, %v733, 0
  %v864 = vsel %vm72, %v734, 0
  %v867 = vsel %vm72, %v735, 0
  %v870 = vsel %vm72, %v736, 0
  %v873 = vsel %vm72, %v737, 0
  %v876 = vsel %vm72, %v738, 0
  %v879 = vsel %vm72, %v739, 0
  %v882 = vsel %vm72, %v740, 0
  %v885 = vsel %vm72, %v741, 0
  %v888 = vsel %vm72, %v742, 0
  %890 = vmatprep.subr.mxu0 0.0
  %891 = vmatpush1.msra.mxu0 %v17
  %892 = vmatprep.subr.mxu0 0.0
  %893 = vmatpush1.msra.mxu0 %v18
  %894 = vmatprep.subr.mxu0 0.0
  %895 = vmatpush1.msra.mxu0 %v19
  %896 = vmatprep.subr.mxu0 0.0
  %897 = vmatpush1.msra.mxu0 %v222
  %898 = vmatprep.subr.mxu0 0.0
  %899 = vmatpush1.msra.mxu0 0.0
  %900 = vmatprep.subr.mxu0 0.0
  %901 = vmatpush1.msra.mxu0 0.0
  %902 = vmatprep.subr.mxu0 0.0
  %903 = vmatpush1.msra.mxu0 0.0
  %904 = vmatprep.subr.mxu0 0.0
  %905 = vmatpush1.msra.mxu0 0.0
  %906 = vmatprep.subr.mxu0 0.0
  %907 = vmatpush1.msra.mxu0 0.0
  %908 = vmatprep.subr.mxu0 0.0
  %909 = vmatpush1.msra.mxu0 0.0
  %910 = vmatprep.subr.mxu0 0.0
  %911 = vmatpush1.msra.mxu0 0.0
  %912 = vmatprep.subr.mxu0 0.0
  %913 = vmatpush1.msra.mxu0 0.0
  %914 = vmatprep.subr.mxu0 0.0
  %915 = vmatpush1.msra.mxu0 0.0
  %916 = vmatprep.subr.mxu0 0.0
  %917 = vmatpush1.msra.mxu0 0.0
  %918 = vmatprep.subr.mxu0 0.0
  %919 = vmatpush1.msra.mxu0 0.0
  %920 = vmatprep.subr.mxu0 0.0
  %921 = vmatpush1.msra.mxu0 0.0
  %922 = vmatprep.subr.mxu0 0.0
  %923 = vmatpush1.msra.mxu0 0.0
  %924 = vmatprep.subr.mxu0 0.0
  %925 = vmatpush1.msra.mxu0 0.0
  %926 = vmatprep.subr.mxu0 0.0
  %927 = vmatpush1.msra.mxu0 0.0
  %928 = vmatprep.subr.mxu0 0.0
  %929 = vmatpush1.msra.mxu0 0.0
  %930 = vmatprep.subr.mxu0 0.0
  %931 = vmatpush1.msra.mxu0 0.0
  %932 = vmatprep.subr.mxu0 0.0
  %933 = vmatpush1.msra.mxu0 0.0
  %934 = vmatprep.subr.mxu0 0.0
  %935 = vmatpush1.msra.mxu0 0.0
  %936 = vmatprep.subr.mxu0 0.0
  %937 = vmatpush1.msra.mxu0 0.0
  %938 = vmatprep.subr.mxu0 0.0
  %939 = vmatpush1.msra.mxu0 0.0
  %940 = vmatprep.subr.mxu0 0.0
  %941 = vmatpush1.msra.mxu0 0.0
  %942 = vmatprep.subr.mxu0 0.0
  %943 = vmatpush1.msra.mxu0 0.0
  %944 = vmatprep.subr.mxu0 0.0
  %945 = vmatpush1.msra.mxu0 0.0
  %946 = vmatprep.subr.mxu0 0.0
  %947 = vmatpush1.msra.mxu0 0.0
  %948 = vmatprep.subr.mxu0 0.0
  %949 = vmatpush1.msra.mxu0 0.0
  %950 = vmatprep.subr.mxu0 0.0
  %951 = vmatpush1.msra.mxu0 0.0
  %952 = vmatprep.subr.mxu0 0.0
  %953 = vmatpush1.msra.mxu0 0.0
  %954 = vmatprep.mubr.f32.mxu0 0.0
  %955 = vmatmul.mubr.f32.gmra.mrb[0].mxu0 %v744
  %v956 = vpop.f32.mrb[0].mxu0
  %v957 = vadd.f32 0.0, %v956
  %v958 = vpop.f32.mrb[0].mxu0
  %959 = vmatprep.mubr.f32.mxu0 0.0
  %960 = vmatmul.mubr.f32.gmra.mrb[0].mxu0 %v747
  %v961 = vpop.f32.mrb[0].mxu0
  %v962 = vadd.f32 0.0, %v961
  %v963 = vpop.f32.mrb[0].mxu0
  %964 = vmatprep.mubr.f32.mxu0 0.0
  %965 = vmatmul.mubr.f32.gmra.mrb[0].mxu0 %v750
  %v966 = vpop.f32.mrb[0].mxu0
  %v967 = vadd.f32 0.0, %v966
  %v968 = vpop.f32.mrb[0].mxu0
  %969 = vmatprep.mubr.f32.mxu0 0.0
  %970 = vmatmul.mubr.f32.gmra.mrb[0].mxu0 %v753
  %v971 = vpop.f32.mrb[0].mxu0
  %v972 = vadd.f32 0.0, %v971
  %v973 = vpop.f32.mrb[0].mxu0
  %974 = vmatprep.mubr.f32.mxu0 0.0
  %975 = vmatmul.mubr.f32.gmra.mrb[0].mxu0 %v756
  %v976 = vpop.f32.mrb[0].mxu0
  %v977 = vadd.f32 0.0, %v976
  %v978 = vpop.f32.mrb[0].mxu0
  %979 = vmatprep.mubr.f32.mxu0 0.0
  %980 = vmatmul.mubr.f32.gmra.mrb[0].mxu0 %v759
  %v981 = vpop.f32.mrb[0].mxu0
  %v982 = vadd.f32 0.0, %v981
  %v983 = vpop.f32.mrb[0].mxu0
  %984 = vmatprep.mubr.f32.mxu0 0.0
  %985 = vmatmul.mubr.f32.gmra.mrb[0].mxu0 %v762
  %v986 = vpop.f32.mrb[0].mxu0
  %v987 = vadd.f32 0.0, %v986
  %v988 = vpop.f32.mrb[0].mxu0
  %989 = vmatprep.mubr.f32.mxu0 0.0
  %990 = vmatmul.mubr.f32.gmra.mrb[0].mxu0 %v765
  %v991 = vpop.f32.mrb[0].mxu0
  %v992 = vadd.f32 0.0, %v991
  %v993 = vpop.f32.mrb[0].mxu0
  %994 = vmatprep.mubr.f32.mxu0 0.0
  %995 = vmatmul.mubr.f32.gmra.mrb[0].mxu0 %v768
  %v996 = vpop.f32.mrb[0].mxu0
  %v997 = vadd.f32 0.0, %v996
  %v998 = vpop.f32.mrb[0].mxu0
  %999 = vmatprep.mubr.f32.mxu0 0.0
  %1000 = vmatmul.mubr.f32.gmra.mrb[0].mxu0 %v771
  %v1001 = vpop.f32.mrb[0].mxu0
  %v1002 = vadd.f32 0.0, %v1001
  %v1003 = vpop.f32.mrb[0].mxu0
  %1004 = vmatprep.mubr.f32.mxu0 0.0
  %1005 = vmatmul.mubr.f32.gmra.mrb[0].mxu0 %v774
  %v1006 = vpop.f32.mrb[0].mxu0
  %v1007 = vadd.f32 0.0, %v1006
  %v1008 = vpop.f32.mrb[0].mxu0
  %1009 = vmatprep.mubr.f32.mxu0 0.0
  %1010 = vmatmul.mubr.f32.gmra.mrb[0].mxu0 %v777
  %v1011 = vpop.f32.mrb[0].mxu0
  %v1012 = vadd.f32 0.0, %v1011
  %v1013 = vpop.f32.mrb[0].mxu0
  %1014 = vmatprep.mubr.f32.mxu0 0.0
  %1015 = vmatmul.mubr.f32.gmra.mrb[0].mxu0 %v780
  %v1016 = vpop.f32.mrb[0].mxu0
  %v1017 = vadd.f32 0.0, %v1016
  %v1018 = vpop.f32.mrb[0].mxu0
  %1019 = vmatprep.mubr.f32.mxu0 0.0
  %1020 = vmatmul.mubr.f32.gmra.mrb[0].mxu0 %v783
  %v1021 = vpop.f32.mrb[0].mxu0
  %v1022 = vadd.f32 0.0, %v1021
  %v1023 = vpop.f32.mrb[0].mxu0
  %1024 = vmatprep.mubr.f32.mxu0 0.0
  %1025 = vmatmul.mubr.f32.gmra.mrb[0].mxu0 %v786
  %v1026 = vpop.f32.mrb[0].mxu0
  %v1027 = vadd.f32 0.0, %v1026
  %v1028 = vpop.f32.mrb[0].mxu0
  %1029 = vmatprep.mubr.f32.mxu0 0.0
  %1030 = vmatmul.mubr.f32.gmra.mrb[0].mxu0 %v789
  %v1031 = vpop.f32.mrb[0].mxu0
  %v1032 = vadd.f32 0.0, %v1031
  %v1033 = vpop.f32.mrb[0].mxu0
  %1034 = vmatprep.mubr.f32.mxu0 0.0
  %1035 = vmatmul.mubr.f32.gmra.mrb[0].mxu0 %v792
  %v1036 = vpop.f32.mrb[0].mxu0
  %v1037 = vadd.f32 0.0, %v1036
  %v1038 = vpop.f32.mrb[0].mxu0
  %1039 = vmatprep.mubr.f32.mxu0 0.0
  %1040 = vmatmul.mubr.f32.gmra.mrb[0].mxu0 %v795
  %v1041 = vpop.f32.mrb[0].mxu0
  %v1042 = vadd.f32 0.0, %v1041
  %v1043 = vpop.f32.mrb[0].mxu0
  %1044 = vmatprep.mubr.f32.mxu0 0.0
  %1045 = vmatmul.mubr.f32.gmra.mrb[0].mxu0 %v798
  %v1046 = vpop.f32.mrb[0].mxu0
  %v1047 = vadd.f32 0.0, %v1046
  %v1048 = vpop.f32.mrb[0].mxu0
  %1049 = vmatprep.mubr.f32.mxu0 0.0
  %1050 = vmatmul.mubr.f32.gmra.mrb[0].mxu0 %v801
  %v1051 = vpop.f32.mrb[0].mxu0
  %v1052 = vadd.f32 0.0, %v1051
  %v1053 = vpop.f32.mrb[0].mxu0
  %1054 = vmatprep.mubr.f32.mxu0 0.0
  %1055 = vmatmul.mubr.f32.gmra.mrb[0].mxu0 %v804
  %v1056 = vpop.f32.mrb[0].mxu0
  %v1057 = vadd.f32 0.0, %v1056
  %v1058 = vpop.f32.mrb[0].mxu0
  %1059 = vmatprep.mubr.f32.mxu0 0.0
  %1060 = vmatmul.mubr.f32.gmra.mrb[0].mxu0 %v807
  %v1061 = vpop.f32.mrb[0].mxu0
  %v1062 = vadd.f32 0.0, %v1061
  %v1063 = vpop.f32.mrb[0].mxu0
  %1064 = vmatprep.mubr.f32.mxu0 0.0
  %1065 = vmatmul.mubr.f32.gmra.mrb[0].mxu0 %v810
  %v1066 = vpop.f32.mrb[0].mxu0
  %v1067 = vadd.f32 0.0, %v1066
  %v1068 = vpop.f32.mrb[0].mxu0
  %1069 = vmatprep.mubr.f32.mxu0 0.0
  %1070 = vmatmul.mubr.f32.gmra.mrb[0].mxu0 %v813
  %v1071 = vpop.f32.mrb[0].mxu0
  %v1072 = vadd.f32 0.0, %v1071
  %v1073 = vpop.f32.mrb[0].mxu0
  %1074 = vmatprep.mubr.f32.mxu0 0.0
  %1075 = vmatmul.mubr.f32.gmra.mrb[0].mxu0 %v816
  %v1076 = vpop.f32.mrb[0].mxu0
  %v1077 = vadd.f32 0.0, %v1076
  %v1078 = vpop.f32.mrb[0].mxu0
  %1079 = vmatprep.mubr.f32.mxu0 0.0
  %1080 = vmatmul.mubr.f32.gmra.mrb[0].mxu0 %v819
  %v1081 = vpop.f32.mrb[0].mxu0
  %v1082 = vadd.f32 0.0, %v1081
  %v1083 = vpop.f32.mrb[0].mxu0
  %1084 = vmatprep.mubr.f32.mxu0 0.0
  %1085 = vmatmul.mubr.f32.gmra.mrb[0].mxu0 %v822
  %v1086 = vpop.f32.mrb[0].mxu0
  %v1087 = vadd.f32 0.0, %v1086
  %v1088 = vpop.f32.mrb[0].mxu0
  %1089 = vmatprep.mubr.f32.mxu0 0.0
  %1090 = vmatmul.mubr.f32.gmra.mrb[0].mxu0 %v825
  %v1091 = vpop.f32.mrb[0].mxu0
  %v1092 = vadd.f32 0.0, %v1091
  %v1093 = vpop.f32.mrb[0].mxu0
  %1094 = vmatprep.mubr.f32.mxu0 0.0
  %1095 = vmatmul.mubr.f32.gmra.mrb[0].mxu0 %v828
  %v1096 = vpop.f32.mrb[0].mxu0
  %v1097 = vadd.f32 0.0, %v1096
  %v1098 = vpop.f32.mrb[0].mxu0
  %1099 = vmatprep.mubr.f32.mxu0 0.0
  %1100 = vmatmul.mubr.f32.gmra.mrb[0].mxu0 %v831
  %v1101 = vpop.f32.mrb[0].mxu0
  %v1102 = vadd.f32 0.0, %v1101
  %v1103 = vpop.f32.mrb[0].mxu0
  %1104 = vmatprep.mubr.f32.mxu0 0.0
  %1105 = vmatmul.mubr.f32.gmra.mrb[0].mxu0 %v834
  %v1106 = vpop.f32.mrb[0].mxu0
  %v1107 = vadd.f32 0.0, %v1106
  %v1108 = vpop.f32.mrb[0].mxu0
  %1109 = vmatprep.mubr.f32.mxu0 0.0
  %1110 = vmatmul.mubr.f32.gmra.mrb[0].mxu0 %v837
  %v1111 = vpop.f32.mrb[0].mxu0
  %v1112 = vadd.f32 0.0, %v1111
  %v1113 = vpop.f32.mrb[0].mxu0
  %1114 = vmatprep.mubr.f32.mxu0 0.0
  %1115 = vmatmul.mubr.f32.gmra.mrb[0].mxu0 %v840
  %v1116 = vpop.f32.mrb[0].mxu0
  %v1117 = vadd.f32 0.0, %v1116
  %v1118 = vpop.f32.mrb[0].mxu0
  %1119 = vmatprep.mubr.f32.mxu0 0.0
  %1120 = vmatmul.mubr.f32.gmra.mrb[0].mxu0 %v843
  %v1121 = vpop.f32.mrb[0].mxu0
  %v1122 = vadd.f32 0.0, %v1121
  %v1123 = vpop.f32.mrb[0].mxu0
  %1124 = vmatprep.mubr.f32.mxu0 0.0
  %1125 = vmatmul.mubr.f32.gmra.mrb[0].mxu0 %v846
  %v1126 = vpop.f32.mrb[0].mxu0
  %v1127 = vadd.f32 0.0, %v1126
  %v1128 = vpop.f32.mrb[0].mxu0
  %1129 = vmatprep.mubr.f32.mxu0 0.0
  %1130 = vmatmul.mubr.f32.gmra.mrb[0].mxu0 %v849
  %v1131 = vpop.f32.mrb[0].mxu0
  %v1132 = vadd.f32 0.0, %v1131
  %v1133 = vpop.f32.mrb[0].mxu0
  %1134 = vmatprep.mubr.f32.mxu0 0.0
  %1135 = vmatmul.mubr.f32.gmra.mrb[0].mxu0 %v852
  %v1136 = vpop.f32.mrb[0].mxu0
  %v1137 = vadd.f32 0.0, %v1136
  %v1138 = vpop.f32.mrb[0].mxu0
  %1139 = vmatprep.mubr.f32.mxu0 0.0
  %1140 = vmatmul.mubr.f32.gmra.mrb[0].mxu0 %v855
  %v1141 = vpop.f32.mrb[0].mxu0
  %v1142 = vadd.f32 0.0, %v1141
  %v1143 = vpop.f32.mrb[0].mxu0
  %1144 = vmatprep.mubr.f32.mxu0 0.0
  %1145 = vmatmul.mubr.f32.gmra.mrb[0].mxu0 %v858
  %v1146 = vpop.f32.mrb[0].mxu0
  %v1147 = vadd.f32 0.0, %v1146
  %v1148 = vpop.f32.mrb[0].mxu0
  %1149 = vmatprep.mubr.f32.mxu0 0.0
  %1150 = vmatmul.mubr.f32.gmra.mrb[0].mxu0 %v861
  %v1151 = vpop.f32.mrb[0].mxu0
  %v1152 = vadd.f32 0.0, %v1151
  %v1153 = vpop.f32.mrb[0].mxu0
  %1154 = vmatprep.mubr.f32.mxu0 0.0
  %1155 = vmatmul.mubr.f32.gmra.mrb[0].mxu0 %v864
  %v1156 = vpop.f32.mrb[0].mxu0
  %v1157 = vadd.f32 0.0, %v1156
  %v1158 = vpop.f32.mrb[0].mxu0
  %1159 = vmatprep.mubr.f32.mxu0 0.0
  %1160 = vmatmul.mubr.f32.gmra.mrb[0].mxu0 %v867
  %v1161 = vpop.f32.mrb[0].mxu0
  %v1162 = vadd.f32 0.0, %v1161
  %v1163 = vpop.f32.mrb[0].mxu0
  %1164 = vmatprep.mubr.f32.mxu0 0.0
  %1165 = vmatmul.mubr.f32.gmra.mrb[0].mxu0 %v870
  %v1166 = vpop.f32.mrb[0].mxu0
  %v1167 = vadd.f32 0.0, %v1166
  %v1168 = vpop.f32.mrb[0].mxu0
  %1169 = vmatprep.mubr.f32.mxu0 0.0
  %1170 = vmatmul.mubr.f32.gmra.mrb[0].mxu0 %v873
  %v1171 = vpop.f32.mrb[0].mxu0
  %v1172 = vadd.f32 0.0, %v1171
  %v1173 = vpop.f32.mrb[0].mxu0
  %1174 = vmatprep.mubr.f32.mxu0 0.0
  %1175 = vmatmul.mubr.f32.gmra.mrb[0].mxu0 %v876
  %v1176 = vpop.f32.mrb[0].mxu0
  %v1177 = vadd.f32 0.0, %v1176
  %v1178 = vpop.f32.mrb[0].mxu0
  %1179 = vmatprep.mubr.f32.mxu0 0.0
  %1180 = vmatmul.mubr.f32.gmra.mrb[0].mxu0 %v879
  %v1181 = vpop.f32.mrb[0].mxu0
  %v1182 = vadd.f32 0.0, %v1181
  %v1183 = vpop.f32.mrb[0].mxu0
  %1184 = vmatprep.mubr.f32.mxu0 0.0
  %1185 = vmatmul.mubr.f32.gmra.mrb[0].mxu0 %v882
  %v1186 = vpop.f32.mrb[0].mxu0
  %v1187 = vadd.f32 0.0, %v1186
  %v1188 = vpop.f32.mrb[0].mxu0
  %1189 = vmatprep.mubr.f32.mxu0 0.0
  %1190 = vmatmul.mubr.f32.gmra.mrb[0].mxu0 %v885
  %v1191 = vpop.f32.mrb[0].mxu0
  %v1192 = vadd.f32 0.0, %v1191
  %v1193 = vpop.f32.mrb[0].mxu0
  %1194 = vmatprep.mubr.f32.mxu0 0.0
  %1195 = vmatmul.mubr.f32.gmra.mrb[0].mxu0 %v888
  %v1196 = vpop.f32.mrb[0].mxu0
  %v1197 = vadd.f32 0.0, %v1196
  %v1198 = vpop.f32.mrb[0].mxu0
  %1199 = vdwg.mxu0
  %v1200 = vmul.f32 %v957, %v538
  %v1201 = vmul.f32 %v962, %v538
  %v1202 = vmul.f32 %v967, %v538
  %v1203 = vmul.f32 %v972, %v538
  %v1204 = vmul.f32 %v977, %v538
  %v1205 = vmul.f32 %v982, %v538
  %v1206 = vmul.f32 %v987, %v538
  %v1207 = vmul.f32 %v992, %v538
  %v1208 = vmul.f32 %v997, %v538
  %v1209 = vmul.f32 %v1002, %v538
  %v1210 = vmul.f32 %v1007, %v538
  %v1211 = vmul.f32 %v1012, %v538
  %v1212 = vmul.f32 %v1017, %v538
  %v1213 = vmul.f32 %v1022, %v538
  %v1214 = vmul.f32 %v1027, %v538
  %v1215 = vmul.f32 %v1032, %v538
  %v1216 = vmul.f32 %v1037, %v538
  %v1217 = vmul.f32 %v1042, %v538
  %v1218 = vmul.f32 %v1047, %v538
  %v1219 = vmul.f32 %v1052, %v538
  %v1220 = vmul.f32 %v1057, %v538
  %v1221 = vmul.f32 %v1062, %v538
  %v1222 = vmul.f32 %v1067, %v538
  %v1223 = vmul.f32 %v1072, %v538
  %v1224 = vmul.f32 %v1077, %v538
  %v1225 = vmul.f32 %v1082, %v538
  %v1226 = vmul.f32 %v1087, %v538
  %v1227 = vmul.f32 %v1092, %v538
  %v1228 = vmul.f32 %v1097, %v538
  %v1229 = vmul.f32 %v1102, %v538
  %v1230 = vmul.f32 %v1107, %v538
  %v1231 = vmul.f32 %v1112, %v538
  %v1232 = vmul.f32 %v1117, %v538
  %v1233 = vmul.f32 %v1122, %v538
  %v1234 = vmul.f32 %v1127, %v538
  %v1235 = vmul.f32 %v1132, %v538
  %v1236 = vmul.f32 %v1137, %v538
  %v1237 = vmul.f32 %v1142, %v538
  %v1238 = vmul.f32 %v1147, %v538
  %v1239 = vmul.f32 %v1152, %v538
  %v1240 = vmul.f32 %v1157, %v538
  %v1241 = vmul.f32 %v1162, %v538
  %v1242 = vmul.f32 %v1167, %v538
  %v1243 = vmul.f32 %v1172, %v538
  %v1244 = vmul.f32 %v1177, %v538
  %v1245 = vmul.f32 %v1182, %v538
  %v1246 = vmul.f32 %v1187, %v538
  %v1247 = vmul.f32 %v1192, %v538
  %v1248 = vmul.f32 %v1197, %v538
  %v1249 = vadd.f32 %v1200, %v593
  %v1250 = vadd.f32 %v1201, %v593
  %v1251 = vadd.f32 %v1202, %v593
  %v1252 = vadd.f32 %v1203, %v593
  %v1253 = vadd.f32 %v1204, %v593
  %v1254 = vadd.f32 %v1205, %v593
  %v1255 = vadd.f32 %v1206, %v593
  %v1256 = vadd.f32 %v1207, %v593
  %v1257 = vadd.f32 %v1208, %v593
  %v1258 = vadd.f32 %v1209, %v593
  %v1259 = vadd.f32 %v1210, %v593
  %v1260 = vadd.f32 %v1211, %v593
  %v1261 = vadd.f32 %v1212, %v593
  %v1262 = vadd.f32 %v1213, %v593
  %v1263 = vadd.f32 %v1214, %v593
  %v1264 = vadd.f32 %v1215, %v593
  %v1265 = vadd.f32 %v1216, %v593
  %v1266 = vadd.f32 %v1217, %v593
  %v1267 = vadd.f32 %v1218, %v593
  %v1268 = vadd.f32 %v1219, %v593
  %v1269 = vadd.f32 %v1220, %v593
  %v1270 = vadd.f32 %v1221, %v593
  %v1271 = vadd.f32 %v1222, %v593
  %v1272 = vadd.f32 %v1223, %v593
  %v1273 = vadd.f32 %v1224, %v593
  %v1274 = vadd.f32 %v1225, %v593
  %v1275 = vadd.f32 %v1226, %v593
  %v1276 = vadd.f32 %v1227, %v593
  %v1277 = vadd.f32 %v1228, %v593
  %v1278 = vadd.f32 %v1229, %v593
  %v1279 = vadd.f32 %v1230, %v593
  %v1280 = vadd.f32 %v1231, %v593
  %v1281 = vadd.f32 %v1232, %v593
  %v1282 = vadd.f32 %v1233, %v593
  %v1283 = vadd.f32 %v1234, %v593
  %v1284 = vadd.f32 %v1235, %v593
  %v1285 = vadd.f32 %v1236, %v593
  %v1286 = vadd.f32 %v1237, %v593
  %v1287 = vadd.f32 %v1238, %v593
  %v1288 = vadd.f32 %v1239, %v593
  %v1289 = vadd.f32 %v1240, %v593
  %v1290 = vadd.f32 %v1241, %v593
  %v1291 = vadd.f32 %v1242, %v593
  %v1292 = vadd.f32 %v1243, %v593
  %v1293 = vadd.f32 %v1244, %v593
  %v1294 = vadd.f32 %v1245, %v593
  %v1295 = vadd.f32 %v1246, %v593
  %v1296 = vadd.f32 %v1247, %v593
  %v1297 = vadd.f32 %v1248, %v593
  %v1298 = vmax.f32 %v1249, 0.0
  %v1299 = vmax.f32 %v1250, 0.0
  %v1300 = vmax.f32 %v1251, 0.0
  %v1301 = vmax.f32 %v1252, 0.0
  %v1302 = vmax.f32 %v1253, 0.0
  %v1303 = vmax.f32 %v1254, 0.0
  %v1304 = vmax.f32 %v1255, 0.0
  %v1305 = vmax.f32 %v1256, 0.0
  %v1306 = vmax.f32 %v1257, 0.0
  %v1307 = vmax.f32 %v1258, 0.0
  %v1308 = vmax.f32 %v1259, 0.0
  %v1309 = vmax.f32 %v1260, 0.0
  %v1310 = vmax.f32 %v1261, 0.0
  %v1311 = vmax.f32 %v1262, 0.0
  %v1312 = vmax.f32 %v1263, 0.0
  %v1313 = vmax.f32 %v1264, 0.0
  %v1314 = vmax.f32 %v1265, 0.0
  %v1315 = vmax.f32 %v1266, 0.0
  %v1316 = vmax.f32 %v1267, 0.0
  %v1317 = vmax.f32 %v1268, 0.0
  %v1318 = vmax.f32 %v1269, 0.0
  %v1319 = vmax.f32 %v1270, 0.0
  %v1320 = vmax.f32 %v1271, 0.0
  %v1321 = vmax.f32 %v1272, 0.0
  %v1322 = vmax.f32 %v1273, 0.0
  %v1323 = vmax.f32 %v1274, 0.0
  %v1324 = vmax.f32 %v1275, 0.0
  %v1325 = vmax.f32 %v1276, 0.0
  %v1326 = vmax.f32 %v1277, 0.0
  %v1327 = vmax.f32 %v1278, 0.0
  %v1328 = vmax.f32 %v1279, 0.0
  %v1329 = vmax.f32 %v1280, 0.0
  %v1330 = vmax.f32 %v1281, 0.0
  %v1331 = vmax.f32 %v1282, 0.0
  %v1332 = vmax.f32 %v1283, 0.0
  %v1333 = vmax.f32 %v1284, 0.0
  %v1334 = vmax.f32 %v1285, 0.0
  %v1335 = vmax.f32 %v1286, 0.0
  %v1336 = vmax.f32 %v1287, 0.0
  %v1337 = vmax.f32 %v1288, 0.0
  %v1338 = vmax.f32 %v1289, 0.0
  %v1339 = vmax.f32 %v1290, 0.0
  %v1340 = vmax.f32 %v1291, 0.0
  %v1341 = vmax.f32 %v1292, 0.0
  %v1342 = vmax.f32 %v1293, 0.0
  %v1343 = vmax.f32 %v1294, 0.0
  %v1344 = vmax.f32 %v1295, 0.0
  %v1345 = vmax.f32 %v1296, 0.0
  %v1346 = vmax.f32 %v1297, 0.0
  %v1347 = vmax.f32 %v644, %v1298
  %v1348 = vmax.f32 %v645, %v1299
  %v1349 = vmax.f32 %v646, %v1300
  %v1350 = vmax.f32 %v647, %v1301
  %v1351 = vmax.f32 %v648, %v1302
  %v1352 = vmax.f32 %v649, %v1303
  %v1353 = vmax.f32 %v650, %v1304
  %v1354 = vmax.f32 %v651, %v1305
  %v1355 = vmax.f32 %v652, %v1306
  %v1356 = vmax.f32 %v653, %v1307
  %v1357 = vmax.f32 %v654, %v1308
  %v1358 = vmax.f32 %v655, %v1309
  %v1359 = vmax.f32 %v656, %v1310
  %v1360 = vmax.f32 %v657, %v1311
  %v1361 = vmax.f32 %v658, %v1312
  %v1362 = vmax.f32 %v659, %v1313
  %v1363 = vmax.f32 %v660, %v1314
  %v1364 = vmax.f32 %v661, %v1315
  %v1365 = vmax.f32 %v662, %v1316
  %v1366 = vmax.f32 %v663, %v1317
  %v1367 = vmax.f32 %v664, %v1318
  %v1368 = vmax.f32 %v665, %v1319
  %v1369 = vmax.f32 %v666, %v1320
  %v1370 = vmax.f32 %v667, %v1321
  %v1371 = vmax.f32 %v668, %v1322
  %v1372 = vmax.f32 %v669, %v1323
  %v1373 = vmax.f32 %v670, %v1324
  %v1374 = vmax.f32 %v671, %v1325
  %v1375 = vmax.f32 %v672, %v1326
  %v1376 = vmax.f32 %v673, %v1327
  %v1377 = vmax.f32 %v674, %v1328
  %v1378 = vmax.f32 %v675, %v1329
  %v1379 = vmax.f32 %v676, %v1330
  %v1380 = vmax.f32 %v677, %v1331
  %v1381 = vmax.f32 %v678, %v1332
  %v1382 = vmax.f32 %v679, %v1333
  %v1383 = vmax.f32 %v680, %v1334
  %v1384 = vmax.f32 %v681, %v1335
  %v1385 = vmax.f32 %v682, %v1336
  %v1386 = vmax.f32 %v683, %v1337
  %v1387 = vmax.f32 %v684, %v1338
  %v1388 = vmax.f32 %v685, %v1339
  %v1389 = vmax.f32 %v686, %v1340
  %v1390 = vmax.f32 %v687, %v1341
  %v1391 = vmax.f32 %v688, %v1342
  %v1392 = vmax.f32 %v689, %v1343
  %v1393 = vmax.f32 %v690, %v1344
  %v1394 = vmax.f32 %v691, %v1345
  %v1395 = vmax.f32 %v692, %v1346
  %s1396 = scalar_lea.vmem %s0, 784
  %v1397 = vld [vmem:[%s1396] sm:$0xff]
  %v1398 = vld [vmem:[%s1396 + $0x8] sm:$0xff]
  %v1399 = vld [vmem:[%s1396 + $0x10] sm:$0xff]
  %v1400 = vld [vmem:[%s1396 + $0x18] sm:$0xff]
  %v1401 = vld [vmem:[%s1396 + $0x20] sm:$0xff]
  %v1402 = vld [vmem:[%s1396 + $0x28] sm:$0xff]
  %v1403 = vld [vmem:[%s1396 + $0x30] sm:$0xff]
  %v1404 = vld [vmem:[%s1396 + $0x38] sm:$0xff]
  %v1405 = vld [vmem:[%s1396 + $0x40] sm:$0xff]
  %v1406 = vld [vmem:[%s1396 + $0x48] sm:$0xff]
  %v1407 = vld [vmem:[%s1396 + $0x50] sm:$0xff]
  %v1408 = vld [vmem:[%s1396 + $0x58] sm:$0xff]
  %v1409 = vld [vmem:[%s1396 + $0x60] sm:$0xff]
  %v1410 = vld [vmem:[%s1396 + $0x68] sm:$0xff]
  %v1411 = vld [vmem:[%s1396 + $0x70] sm:$0xff]
  %v1412 = vld [vmem:[%s1396 + $0x78] sm:$0xff]
  %v1413 = vld [vmem:[%s1396 + $0x80] sm:$0xff]
  %v1414 = vld [vmem:[%s1396 + $0x88] sm:$0xff]
  %v1415 = vld [vmem:[%s1396 + $0x90] sm:$0xff]
  %v1416 = vld [vmem:[%s1396 + $0x98] sm:$0xff]
  %v1417 = vld [vmem:[%s1396 + $0xa0] sm:$0xff]
  %v1418 = vld [vmem:[%s1396 + $0xa8] sm:$0xff]
  %v1419 = vld [vmem:[%s1396 + $0xb0] sm:$0xff]
  %v1420 = vld [vmem:[%s1396 + $0xb8] sm:$0xff]
  %v1421 = vld [vmem:[%s1396 + $0xc0] sm:$0xff]
  %v1422 = vld [vmem:[%s1396 + $0xc8] sm:$0xff]
  %v1423 = vld [vmem:[%s1396 + $0xd0] sm:$0xff]
  %v1424 = vld [vmem:[%s1396 + $0xd8] sm:$0xff]
  %v1425 = vld [vmem:[%s1396 + $0xe0] sm:$0xff]
  %v1426 = vld [vmem:[%s1396 + $0xe8] sm:$0xff]
  %v1427 = vld [vmem:[%s1396 + $0xf0] sm:$0xff]
  %v1428 = vld [vmem:[%s1396 + $0xf8] sm:$0xff]
  %v1429 = vld [vmem:[%s1396 + $0x100] sm:$0xff]
  %v1430 = vld [vmem:[%s1396 + $0x108] sm:$0xff]
  %v1431 = vld [vmem:[%s1396 + $0x110] sm:$0xff]
  %v1432 = vld [vmem:[%s1396 + $0x118] sm:$0xff]
  %v1433 = vld [vmem:[%s1396 + $0x120] sm:$0xff]
  %v1434 = vld [vmem:[%s1396 + $0x128] sm:$0xff]
  %v1435 = vld [vmem:[%s1396 + $0x130] sm:$0xff]
  %v1436 = vld [vmem:[%s1396 + $0x138] sm:$0xff]
  %v1437 = vld [vmem:[%s1396 + $0x140] sm:$0xff]
  %v1438 = vld [vmem:[%s1396 + $0x148] sm:$0xff]
  %v1439 = vld [vmem:[%s1396 + $0x150] sm:$0xff]
  %v1440 = vld [vmem:[%s1396 + $0x158] sm:$0xff]
  %v1441 = vld [vmem:[%s1396 + $0x160] sm:$0xff]
  %v1442 = vld [vmem:[%s1396 + $0x168] sm:$0xff]
  %v1443 = vld [vmem:[%s1396 + $0x170] sm:$0xff]
  %v1444 = vld [vmem:[%s1396 + $0x178] sm:$0xff]
  %v1445 = vld [vmem:[%s1396 + $0x180] sm:$0xff]
  %v1447 = vsel %vm72, %v1397, 0
  %v1450 = vsel %vm72, %v1398, 0
  %v1453 = vsel %vm72, %v1399, 0
  %v1456 = vsel %vm72, %v1400, 0
  %v1459 = vsel %vm72, %v1401, 0
  %v1462 = vsel %vm72, %v1402, 0
  %v1465 = vsel %vm72, %v1403, 0
  %v1468 = vsel %vm72, %v1404, 0
  %v1471 = vsel %vm72, %v1405, 0
  %v1474 = vsel %vm72, %v1406, 0
  %v1477 = vsel %vm72, %v1407, 0
  %v1480 = vsel %vm72, %v1408, 0
  %v1483 = vsel %vm72, %v1409, 0
  %v1486 = vsel %vm72, %v1410, 0
  %v1489 = vsel %vm72, %v1411, 0
  %v1492 = vsel %vm72, %v1412, 0
  %v1495 = vsel %vm72, %v1413, 0
  %v1498 = vsel %vm72, %v1414, 0
  %v1501 = vsel %vm72, %v1415, 0
  %v1504 = vsel %vm72, %v1416, 0
  %v1507 = vsel %vm72, %v1417, 0
  %v1510 = vsel %vm72, %v1418, 0
  %v1513 = vsel %vm72, %v1419, 0
  %v1516 = vsel %vm72, %v1420, 0
  %v1519 = vsel %vm72, %v1421, 0
  %v1522 = vsel %vm72, %v1422, 0
  %v1525 = vsel %vm72, %v1423, 0
  %v1528 = vsel %vm72, %v1424, 0
  %v1531 = vsel %vm72, %v1425, 0
  %v1534 = vsel %vm72, %v1426, 0
  %v1537 = vsel %vm72, %v1427, 0
  %v1540 = vsel %vm72, %v1428, 0
  %v1543 = vsel %vm72, %v1429, 0
  %v1546 = vsel %vm72, %v1430, 0
  %v1549 = vsel %vm72, %v1431, 0
  %v1552 = vsel %vm72, %v1432, 0
  %v1555 = vsel %vm72, %v1433, 0
  %v1558 = vsel %vm72, %v1434, 0
  %v1561 = vsel %vm72, %v1435, 0
  %v1564 = vsel %vm72, %v1436, 0
  %v1567 = vsel %vm72, %v1437, 0
  %v1570 = vsel %vm72, %v1438, 0
  %v1573 = vsel %vm72, %v1439, 0
  %v1576 = vsel %vm72, %v1440, 0
  %v1579 = vsel %vm72, %v1441, 0
  %v1582 = vsel %vm72, %v1442, 0
  %v1585 = vsel %vm72, %v1443, 0
  %v1588 = vsel %vm72, %v1444, 0
  %v1591 = vsel %vm72, %v1445, 0
  %1593 = vmatprep.subr.mxu0 0.0
  %1594 = vmatpush1.msra.mxu0 %v17
  %1595 = vmatprep.subr.mxu0 0.0
  %1596 = vmatpush1.msra.mxu0 %v18
  %1597 = vmatprep.subr.mxu0 0.0
  %1598 = vmatpush1.msra.mxu0 %v19
  %1599 = vmatprep.subr.mxu0 0.0
  %1600 = vmatpush1.msra.mxu0 %v222
  %1601 = vmatprep.subr.mxu0 0.0
  %1602 = vmatpush1.msra.mxu0 0.0
  %1603 = vmatprep.subr.mxu0 0.0
  %1604 = vmatpush1.msra.mxu0 0.0
  %1605 = vmatprep.subr.mxu0 0.0
  %1606 = vmatpush1.msra.mxu0 0.0
  %1607 = vmatprep.subr.mxu0 0.0
  %1608 = vmatpush1.msra.mxu0 0.0
  %1609 = vmatprep.subr.mxu0 0.0
  %1610 = vmatpush1.msra.mxu0 0.0
  %1611 = vmatprep.subr.mxu0 0.0
  %1612 = vmatpush1.msra.mxu0 0.0
  %1613 = vmatprep.subr.mxu0 0.0
  %1614 = vmatpush1.msra.mxu0 0.0
  %1615 = vmatprep.subr.mxu0 0.0
  %1616 = vmatpush1.msra.mxu0 0.0
  %1617 = vmatprep.subr.mxu0 0.0
  %1618 = vmatpush1.msra.mxu0 0.0
  %1619 = vmatprep.subr.mxu0 0.0
  %1620 = vmatpush1.msra.mxu0 0.0
  %1621 = vmatprep.subr.mxu0 0.0
  %1622 = vmatpush1.msra.mxu0 0.0
  %1623 = vmatprep.subr.mxu0 0.0
  %1624 = vmatpush1.msra.mxu0 0.0
  %1625 = vmatprep.subr.mxu0 0.0
  %1626 = vmatpush1.msra.mxu0 0.0
  %1627 = vmatprep.subr.mxu0 0.0
  %1628 = vmatpush1.msra.mxu0 0.0
  %1629 = vmatprep.subr.mxu0 0.0
  %1630 = vmatpush1.msra.mxu0 0.0
  %1631 = vmatprep.subr.mxu0 0.0
  %1632 = vmatpush1.msra.mxu0 0.0
  %1633 = vmatprep.subr.mxu0 0.0
  %1634 = vmatpush1.msra.mxu0 0.0
  %1635 = vmatprep.subr.mxu0 0.0
  %1636 = vmatpush1.msra.mxu0 0.0
  %1637 = vmatprep.subr.mxu0 0.0
  %1638 = vmatpush1.msra.mxu0 0.0
  %1639 = vmatprep.subr.mxu0 0.0
  %1640 = vmatpush1.msra.mxu0 0.0
  %1641 = vmatprep.subr.mxu0 0.0
  %1642 = vmatpush1.msra.mxu0 0.0
  %1643 = vmatprep.subr.mxu0 0.0
  %1644 = vmatpush1.msra.mxu0 0.0
  %1645 = vmatprep.subr.mxu0 0.0
  %1646 = vmatpush1.msra.mxu0 0.0
  %1647 = vmatprep.subr.mxu0 0.0
  %1648 = vmatpush1.msra.mxu0 0.0
  %1649 = vmatprep.subr.mxu0 0.0
  %1650 = vmatpush1.msra.mxu0 0.0
  %1651 = vmatprep.subr.mxu0 0.0
  %1652 = vmatpush1.msra.mxu0 0.0
  %1653 = vmatprep.subr.mxu0 0.0
  %1654 = vmatpush1.msra.mxu0 0.0
  %1655 = vmatprep.subr.mxu0 0.0
  %1656 = vmatpush1.msra.mxu0 0.0
  %1657 = vmatprep.mubr.f32.mxu0 0.0
  %1658 = vmatmul.mubr.f32.gmra.mrb[0].mxu0 %v1447
  %v1659 = vpop.f32.mrb[0].mxu0
  %v1660 = vadd.f32 0.0, %v1659
  %v1661 = vpop.f32.mrb[0].mxu0
  %1662 = vmatprep.mubr.f32.mxu0 0.0
  %1663 = vmatmul.mubr.f32.gmra.mrb[0].mxu0 %v1450
  %v1664 = vpop.f32.mrb[0].mxu0
  %v1665 = vadd.f32 0.0, %v1664
  %v1666 = vpop.f32.mrb[0].mxu0
  %1667 = vmatprep.mubr.f32.mxu0 0.0
  %1668 = vmatmul.mubr.f32.gmra.mrb[0].mxu0 %v1453
  %v1669 = vpop.f32.mrb[0].mxu0
  %v1670 = vadd.f32 0.0, %v1669
  %v1671 = vpop.f32.mrb[0].mxu0
  %1672 = vmatprep.mubr.f32.mxu0 0.0
  %1673 = vmatmul.mubr.f32.gmra.mrb[0].mxu0 %v1456
  %v1674 = vpop.f32.mrb[0].mxu0
  %v1675 = vadd.f32 0.0, %v1674
  %v1676 = vpop.f32.mrb[0].mxu0
  %1677 = vmatprep.mubr.f32.mxu0 0.0
  %1678 = vmatmul.mubr.f32.gmra.mrb[0].mxu0 %v1459
  %v1679 = vpop.f32.mrb[0].mxu0
  %v1680 = vadd.f32 0.0, %v1679
  %v1681 = vpop.f32.mrb[0].mxu0
  %1682 = vmatprep.mubr.f32.mxu0 0.0
  %1683 = vmatmul.mubr.f32.gmra.mrb[0].mxu0 %v1462
  %v1684 = vpop.f32.mrb[0].mxu0
  %v1685 = vadd.f32 0.0, %v1684
  %v1686 = vpop.f32.mrb[0].mxu0
  %1687 = vmatprep.mubr.f32.mxu0 0.0
  %1688 = vmatmul.mubr.f32.gmra.mrb[0].mxu0 %v1465
  %v1689 = vpop.f32.mrb[0].mxu0
  %v1690 = vadd.f32 0.0, %v1689
  %v1691 = vpop.f32.mrb[0].mxu0
  %1692 = vmatprep.mubr.f32.mxu0 0.0
  %1693 = vmatmul.mubr.f32.gmra.mrb[0].mxu0 %v1468
  %v1694 = vpop.f32.mrb[0].mxu0
  %v1695 = vadd.f32 0.0, %v1694
  %v1696 = vpop.f32.mrb[0].mxu0
  %1697 = vmatprep.mubr.f32.mxu0 0.0
  %1698 = vmatmul.mubr.f32.gmra.mrb[0].mxu0 %v1471
  %v1699 = vpop.f32.mrb[0].mxu0
  %v1700 = vadd.f32 0.0, %v1699
  %v1701 = vpop.f32.mrb[0].mxu0
  %1702 = vmatprep.mubr.f32.mxu0 0.0
  %1703 = vmatmul.mubr.f32.gmra.mrb[0].mxu0 %v1474
  %v1704 = vpop.f32.mrb[0].mxu0
  %v1705 = vadd.f32 0.0, %v1704
  %v1706 = vpop.f32.mrb[0].mxu0
  %1707 = vmatprep.mubr.f32.mxu0 0.0
  %1708 = vmatmul.mubr.f32.gmra.mrb[0].mxu0 %v1477
  %v1709 = vpop.f32.mrb[0].mxu0
  %v1710 = vadd.f32 0.0, %v1709
  %v1711 = vpop.f32.mrb[0].mxu0
  %1712 = vmatprep.mubr.f32.mxu0 0.0
  %1713 = vmatmul.mubr.f32.gmra.mrb[0].mxu0 %v1480
  %v1714 = vpop.f32.mrb[0].mxu0
  %v1715 = vadd.f32 0.0, %v1714
  %v1716 = vpop.f32.mrb[0].mxu0
  %1717 = vmatprep.mubr.f32.mxu0 0.0
  %1718 = vmatmul.mubr.f32.gmra.mrb[0].mxu0 %v1483
  %v1719 = vpop.f32.mrb[0].mxu0
  %v1720 = vadd.f32 0.0, %v1719
  %v1721 = vpop.f32.mrb[0].mxu0
  %1722 = vmatprep.mubr.f32.mxu0 0.0
  %1723 = vmatmul.mubr.f32.gmra.mrb[0].mxu0 %v1486
  %v1724 = vpop.f32.mrb[0].mxu0
  %v1725 = vadd.f32 0.0, %v1724
  %v1726 = vpop.f32.mrb[0].mxu0
  %1727 = vmatprep.mubr.f32.mxu0 0.0
  %1728 = vmatmul.mubr.f32.gmra.mrb[0].mxu0 %v1489
  %v1729 = vpop.f32.mrb[0].mxu0
  %v1730 = vadd.f32 0.0, %v1729
  %v1731 = vpop.f32.mrb[0].mxu0
  %1732 = vmatprep.mubr.f32.mxu0 0.0
  %1733 = vmatmul.mubr.f32.gmra.mrb[0].mxu0 %v1492
  %v1734 = vpop.f32.mrb[0].mxu0
  %v1735 = vadd.f32 0.0, %v1734
  %v1736 = vpop.f32.mrb[0].mxu0
  %1737 = vmatprep.mubr.f32.mxu0 0.0
  %1738 = vmatmul.mubr.f32.gmra.mrb[0].mxu0 %v1495
  %v1739 = vpop.f32.mrb[0].mxu0
  %v1740 = vadd.f32 0.0, %v1739
  %v1741 = vpop.f32.mrb[0].mxu0
  %1742 = vmatprep.mubr.f32.mxu0 0.0
  %1743 = vmatmul.mubr.f32.gmra.mrb[0].mxu0 %v1498
  %v1744 = vpop.f32.mrb[0].mxu0
  %v1745 = vadd.f32 0.0, %v1744
  %v1746 = vpop.f32.mrb[0].mxu0
  %1747 = vmatprep.mubr.f32.mxu0 0.0
  %1748 = vmatmul.mubr.f32.gmra.mrb[0].mxu0 %v1501
  %v1749 = vpop.f32.mrb[0].mxu0
  %v1750 = vadd.f32 0.0, %v1749
  %v1751 = vpop.f32.mrb[0].mxu0
  %1752 = vmatprep.mubr.f32.mxu0 0.0
  %1753 = vmatmul.mubr.f32.gmra.mrb[0].mxu0 %v1504
  %v1754 = vpop.f32.mrb[0].mxu0
  %v1755 = vadd.f32 0.0, %v1754
  %v1756 = vpop.f32.mrb[0].mxu0
  %1757 = vmatprep.mubr.f32.mxu0 0.0
  %1758 = vmatmul.mubr.f32.gmra.mrb[0].mxu0 %v1507
  %v1759 = vpop.f32.mrb[0].mxu0
  %v1760 = vadd.f32 0.0, %v1759
  %v1761 = vpop.f32.mrb[0].mxu0
  %1762 = vmatprep.mubr.f32.mxu0 0.0
  %1763 = vmatmul.mubr.f32.gmra.mrb[0].mxu0 %v1510
  %v1764 = vpop.f32.mrb[0].mxu0
  %v1765 = vadd.f32 0.0, %v1764
  %v1766 = vpop.f32.mrb[0].mxu0
  %1767 = vmatprep.mubr.f32.mxu0 0.0
  %1768 = vmatmul.mubr.f32.gmra.mrb[0].mxu0 %v1513
  %v1769 = vpop.f32.mrb[0].mxu0
  %v1770 = vadd.f32 0.0, %v1769
  %v1771 = vpop.f32.mrb[0].mxu0
  %1772 = vmatprep.mubr.f32.mxu0 0.0
  %1773 = vmatmul.mubr.f32.gmra.mrb[0].mxu0 %v1516
  %v1774 = vpop.f32.mrb[0].mxu0
  %v1775 = vadd.f32 0.0, %v1774
  %v1776 = vpop.f32.mrb[0].mxu0
  %1777 = vmatprep.mubr.f32.mxu0 0.0
  %1778 = vmatmul.mubr.f32.gmra.mrb[0].mxu0 %v1519
  %v1779 = vpop.f32.mrb[0].mxu0
  %v1780 = vadd.f32 0.0, %v1779
  %v1781 = vpop.f32.mrb[0].mxu0
  %1782 = vmatprep.mubr.f32.mxu0 0.0
  %1783 = vmatmul.mubr.f32.gmra.mrb[0].mxu0 %v1522
  %v1784 = vpop.f32.mrb[0].mxu0
  %v1785 = vadd.f32 0.0, %v1784
  %v1786 = vpop.f32.mrb[0].mxu0
  %1787 = vmatprep.mubr.f32.mxu0 0.0
  %1788 = vmatmul.mubr.f32.gmra.mrb[0].mxu0 %v1525
  %v1789 = vpop.f32.mrb[0].mxu0
  %v1790 = vadd.f32 0.0, %v1789
  %v1791 = vpop.f32.mrb[0].mxu0
  %1792 = vmatprep.mubr.f32.mxu0 0.0
  %1793 = vmatmul.mubr.f32.gmra.mrb[0].mxu0 %v1528
  %v1794 = vpop.f32.mrb[0].mxu0
  %v1795 = vadd.f32 0.0, %v1794
  %v1796 = vpop.f32.mrb[0].mxu0
  %1797 = vmatprep.mubr.f32.mxu0 0.0
  %1798 = vmatmul.mubr.f32.gmra.mrb[0].mxu0 %v1531
  %v1799 = vpop.f32.mrb[0].mxu0
  %v1800 = vadd.f32 0.0, %v1799
  %v1801 = vpop.f32.mrb[0].mxu0
  %1802 = vmatprep.mubr.f32.mxu0 0.0
  %1803 = vmatmul.mubr.f32.gmra.mrb[0].mxu0 %v1534
  %v1804 = vpop.f32.mrb[0].mxu0
  %v1805 = vadd.f32 0.0, %v1804
  %v1806 = vpop.f32.mrb[0].mxu0
  %1807 = vmatprep.mubr.f32.mxu0 0.0
  %1808 = vmatmul.mubr.f32.gmra.mrb[0].mxu0 %v1537
  %v1809 = vpop.f32.mrb[0].mxu0
  %v1810 = vadd.f32 0.0, %v1809
  %v1811 = vpop.f32.mrb[0].mxu0
  %1812 = vmatprep.mubr.f32.mxu0 0.0
  %1813 = vmatmul.mubr.f32.gmra.mrb[0].mxu0 %v1540
  %v1814 = vpop.f32.mrb[0].mxu0
  %v1815 = vadd.f32 0.0, %v1814
  %v1816 = vpop.f32.mrb[0].mxu0
  %1817 = vmatprep.mubr.f32.mxu0 0.0
  %1818 = vmatmul.mubr.f32.gmra.mrb[0].mxu0 %v1543
  %v1819 = vpop.f32.mrb[0].mxu0
  %v1820 = vadd.f32 0.0, %v1819
  %v1821 = vpop.f32.mrb[0].mxu0
  %1822 = vmatprep.mubr.f32.mxu0 0.0
  %1823 = vmatmul.mubr.f32.gmra.mrb[0].mxu0 %v1546
  %v1824 = vpop.f32.mrb[0].mxu0
  %v1825 = vadd.f32 0.0, %v1824
  %v1826 = vpop.f32.mrb[0].mxu0
  %1827 = vmatprep.mubr.f32.mxu0 0.0
  %1828 = vmatmul.mubr.f32.gmra.mrb[0].mxu0 %v1549
  %v1829 = vpop.f32.mrb[0].mxu0
  %v1830 = vadd.f32 0.0, %v1829
  %v1831 = vpop.f32.mrb[0].mxu0
  %1832 = vmatprep.mubr.f32.mxu0 0.0
  %1833 = vmatmul.mubr.f32.gmra.mrb[0].mxu0 %v1552
  %v1834 = vpop.f32.mrb[0].mxu0
  %v1835 = vadd.f32 0.0, %v1834
  %v1836 = vpop.f32.mrb[0].mxu0
  %1837 = vmatprep.mubr.f32.mxu0 0.0
  %1838 = vmatmul.mubr.f32.gmra.mrb[0].mxu0 %v1555
  %v1839 = vpop.f32.mrb[0].mxu0
  %v1840 = vadd.f32 0.0, %v1839
  %v1841 = vpop.f32.mrb[0].mxu0
  %1842 = vmatprep.mubr.f32.mxu0 0.0
  %1843 = vmatmul.mubr.f32.gmra.mrb[0].mxu0 %v1558
  %v1844 = vpop.f32.mrb[0].mxu0
  %v1845 = vadd.f32 0.0, %v1844
  %v1846 = vpop.f32.mrb[0].mxu0
  %1847 = vmatprep.mubr.f32.mxu0 0.0
  %1848 = vmatmul.mubr.f32.gmra.mrb[0].mxu0 %v1561
  %v1849 = vpop.f32.mrb[0].mxu0
  %v1850 = vadd.f32 0.0, %v1849
  %v1851 = vpop.f32.mrb[0].mxu0
  %1852 = vmatprep.mubr.f32.mxu0 0.0
  %1853 = vmatmul.mubr.f32.gmra.mrb[0].mxu0 %v1564
  %v1854 = vpop.f32.mrb[0].mxu0
  %v1855 = vadd.f32 0.0, %v1854
  %v1856 = vpop.f32.mrb[0].mxu0
  %1857 = vmatprep.mubr.f32.mxu0 0.0
  %1858 = vmatmul.mubr.f32.gmra.mrb[0].mxu0 %v1567
  %v1859 = vpop.f32.mrb[0].mxu0
  %v1860 = vadd.f32 0.0, %v1859
  %v1861 = vpop.f32.mrb[0].mxu0
  %1862 = vmatprep.mubr.f32.mxu0 0.0
  %1863 = vmatmul.mubr.f32.gmra.mrb[0].mxu0 %v1570
  %v1864 = vpop.f32.mrb[0].mxu0
  %v1865 = vadd.f32 0.0, %v1864
  %v1866 = vpop.f32.mrb[0].mxu0
  %1867 = vmatprep.mubr.f32.mxu0 0.0
  %1868 = vmatmul.mubr.f32.gmra.mrb[0].mxu0 %v1573
  %v1869 = vpop.f32.mrb[0].mxu0
  %v1870 = vadd.f32 0.0, %v1869
  %v1871 = vpop.f32.mrb[0].mxu0
  %1872 = vmatprep.mubr.f32.mxu0 0.0
  %1873 = vmatmul.mubr.f32.gmra.mrb[0].mxu0 %v1576
  %v1874 = vpop.f32.mrb[0].mxu0
  %v1875 = vadd.f32 0.0, %v1874
  %v1876 = vpop.f32.mrb[0].mxu0
  %1877 = vmatprep.mubr.f32.mxu0 0.0
  %1878 = vmatmul.mubr.f32.gmra.mrb[0].mxu0 %v1579
  %v1879 = vpop.f32.mrb[0].mxu0
  %v1880 = vadd.f32 0.0, %v1879
  %v1881 = vpop.f32.mrb[0].mxu0
  %1882 = vmatprep.mubr.f32.mxu0 0.0
  %1883 = vmatmul.mubr.f32.gmra.mrb[0].mxu0 %v1582
  %v1884 = vpop.f32.mrb[0].mxu0
  %v1885 = vadd.f32 0.0, %v1884
  %v1886 = vpop.f32.mrb[0].mxu0
  %1887 = vmatprep.mubr.f32.mxu0 0.0
  %1888 = vmatmul.mubr.f32.gmra.mrb[0].mxu0 %v1585
  %v1889 = vpop.f32.mrb[0].mxu0
  %v1890 = vadd.f32 0.0, %v1889
  %v1891 = vpop.f32.mrb[0].mxu0
  %1892 = vmatprep.mubr.f32.mxu0 0.0
  %1893 = vmatmul.mubr.f32.gmra.mrb[0].mxu0 %v1588
  %v1894 = vpop.f32.mrb[0].mxu0
  %v1895 = vadd.f32 0.0, %v1894
  %v1896 = vpop.f32.mrb[0].mxu0
  %1897 = vmatprep.mubr.f32.mxu0 0.0
  %1898 = vmatmul.mubr.f32.gmra.mrb[0].mxu0 %v1591
  %v1899 = vpop.f32.mrb[0].mxu0
  %v1900 = vadd.f32 0.0, %v1899
  %v1901 = vpop.f32.mrb[0].mxu0
  %1902 = vdwg.mxu0
  %v1903 = vmul.f32 %v1660, %v538
  %v1904 = vmul.f32 %v1665, %v538
  %v1905 = vmul.f32 %v1670, %v538
  %v1906 = vmul.f32 %v1675, %v538
  %v1907 = vmul.f32 %v1680, %v538
  %v1908 = vmul.f32 %v1685, %v538
  %v1909 = vmul.f32 %v1690, %v538
  %v1910 = vmul.f32 %v1695, %v538
  %v1911 = vmul.f32 %v1700, %v538
  %v1912 = vmul.f32 %v1705, %v538
  %v1913 = vmul.f32 %v1710, %v538
  %v1914 = vmul.f32 %v1715, %v538
  %v1915 = vmul.f32 %v1720, %v538
  %v1916 = vmul.f32 %v1725, %v538
  %v1917 = vmul.f32 %v1730, %v538
  %v1918 = vmul.f32 %v1735, %v538
  %v1919 = vmul.f32 %v1740, %v538
  %v1920 = vmul.f32 %v1745, %v538
  %v1921 = vmul.f32 %v1750, %v538
  %v1922 = vmul.f32 %v1755, %v538
  %v1923 = vmul.f32 %v1760, %v538
  %v1924 = vmul.f32 %v1765, %v538
  %v1925 = vmul.f32 %v1770, %v538
  %v1926 = vmul.f32 %v1775, %v538
  %v1927 = vmul.f32 %v1780, %v538
  %v1928 = vmul.f32 %v1785, %v538
  %v1929 = vmul.f32 %v1790, %v538
  %v1930 = vmul.f32 %v1795, %v538
  %v1931 = vmul.f32 %v1800, %v538
  %v1932 = vmul.f32 %v1805, %v538
  %v1933 = vmul.f32 %v1810, %v538
  %v1934 = vmul.f32 %v1815, %v538
  %v1935 = vmul.f32 %v1820, %v538
  %v1936 = vmul.f32 %v1825, %v538
  %v1937 = vmul.f32 %v1830, %v538
  %v1938 = vmul.f32 %v1835, %v538
  %v1939 = vmul.f32 %v1840, %v538
  %v1940 = vmul.f32 %v1845, %v538
  %v1941 = vmul.f32 %v1850, %v538
  %v1942 = vmul.f32 %v1855, %v538
  %v1943 = vmul.f32 %v1860, %v538
  %v1944 = vmul.f32 %v1865, %v538
  %v1945 = vmul.f32 %v1870, %v538
  %v1946 = vmul.f32 %v1875, %v538
  %v1947 = vmul.f32 %v1880, %v538
  %v1948 = vmul.f32 %v1885, %v538
  %v1949 = vmul.f32 %v1890, %v538
  %v1950 = vmul.f32 %v1895, %v538
  %v1951 = vmul.f32 %v1900, %v538
  %v1952 = vadd.f32 %v1903, %v593
  %v1953 = vadd.f32 %v1904, %v593
  %v1954 = vadd.f32 %v1905, %v593
  %v1955 = vadd.f32 %v1906, %v593
  %v1956 = vadd.f32 %v1907, %v593
  %v1957 = vadd.f32 %v1908, %v593
  %v1958 = vadd.f32 %v1909, %v593
  %v1959 = vadd.f32 %v1910, %v593
  %v1960 = vadd.f32 %v1911, %v593
  %v1961 = vadd.f32 %v1912, %v593
  %v1962 = vadd.f32 %v1913, %v593
  %v1963 = vadd.f32 %v1914, %v593
  %v1964 = vadd.f32 %v1915, %v593
  %v1965 = vadd.f32 %v1916, %v593
  %v1966 = vadd.f32 %v1917, %v593
  %v1967 = vadd.f32 %v1918, %v593
  %v1968 = vadd.f32 %v1919, %v593
  %v1969 = vadd.f32 %v1920, %v593
  %v1970 = vadd.f32 %v1921, %v593
  %v1971 = vadd.f32 %v1922, %v593
  %v1972 = vadd.f32 %v1923, %v593
  %v1973 = vadd.f32 %v1924, %v593
  %v1974 = vadd.f32 %v1925, %v593
  %v1975 = vadd.f32 %v1926, %v593
  %v1976 = vadd.f32 %v1927, %v593
  %v1977 = vadd.f32 %v1928, %v593
  %v1978 = vadd.f32 %v1929, %v593
  %v1979 = vadd.f32 %v1930, %v593
  %v1980 = vadd.f32 %v1931, %v593
  %v1981 = vadd.f32 %v1932, %v593
  %v1982 = vadd.f32 %v1933, %v593
  %v1983 = vadd.f32 %v1934, %v593
  %v1984 = vadd.f32 %v1935, %v593
  %v1985 = vadd.f32 %v1936, %v593
  %v1986 = vadd.f32 %v1937, %v593
  %v1987 = vadd.f32 %v1938, %v593
  %v1988 = vadd.f32 %v1939, %v593
  %v1989 = vadd.f32 %v1940, %v593
  %v1990 = vadd.f32 %v1941, %v593
  %v1991 = vadd.f32 %v1942, %v593
  %v1992 = vadd.f32 %v1943, %v593
  %v1993 = vadd.f32 %v1944, %v593
  %v1994 = vadd.f32 %v1945, %v593
  %v1995 = vadd.f32 %v1946, %v593
  %v1996 = vadd.f32 %v1947, %v593
  %v1997 = vadd.f32 %v1948, %v593
  %v1998 = vadd.f32 %v1949, %v593
  %v1999 = vadd.f32 %v1950, %v593
  %v2000 = vadd.f32 %v1951, %v593
  %v2001 = vmax.f32 %v1952, 0.0
  %v2002 = vmax.f32 %v1953, 0.0
  %v2003 = vmax.f32 %v1954, 0.0
  %v2004 = vmax.f32 %v1955, 0.0
  %v2005 = vmax.f32 %v1956, 0.0
  %v2006 = vmax.f32 %v1957, 0.0
  %v2007 = vmax.f32 %v1958, 0.0
  %v2008 = vmax.f32 %v1959, 0.0
  %v2009 = vmax.f32 %v1960, 0.0
  %v2010 = vmax.f32 %v1961, 0.0
  %v2011 = vmax.f32 %v1962, 0.0
  %v2012 = vmax.f32 %v1963, 0.0
  %v2013 = vmax.f32 %v1964, 0.0
  %v2014 = vmax.f32 %v1965, 0.0
  %v2015 = vmax.f32 %v1966, 0.0
  %v2016 = vmax.f32 %v1967, 0.0
  %v2017 = vmax.f32 %v1968, 0.0
  %v2018 = vmax.f32 %v1969, 0.0
  %v2019 = vmax.f32 %v1970, 0.0
  %v2020 = vmax.f32 %v1971, 0.0
  %v2021 = vmax.f32 %v1972, 0.0
  %v2022 = vmax.f32 %v1973, 0.0
  %v2023 = vmax.f32 %v1974, 0.0
  %v2024 = vmax.f32 %v1975, 0.0
  %v2025 = vmax.f32 %v1976, 0.0
  %v2026 = vmax.f32 %v1977, 0.0
  %v2027 = vmax.f32 %v1978, 0.0
  %v2028 = vmax.f32 %v1979, 0.0
  %v2029 = vmax.f32 %v1980, 0.0
  %v2030 = vmax.f32 %v1981, 0.0
  %v2031 = vmax.f32 %v1982, 0.0
  %v2032 = vmax.f32 %v1983, 0.0
  %v2033 = vmax.f32 %v1984, 0.0
  %v2034 = vmax.f32 %v1985, 0.0
  %v2035 = vmax.f32 %v1986, 0.0
  %v2036 = vmax.f32 %v1987, 0.0
  %v2037 = vmax.f32 %v1988, 0.0
  %v2038 = vmax.f32 %v1989, 0.0
  %v2039 = vmax.f32 %v1990, 0.0
  %v2040 = vmax.f32 %v1991, 0.0
  %v2041 = vmax.f32 %v1992, 0.0
  %v2042 = vmax.f32 %v1993, 0.0
  %v2043 = vmax.f32 %v1994, 0.0
  %v2044 = vmax.f32 %v1995, 0.0
  %v2045 = vmax.f32 %v1996, 0.0
  %v2046 = vmax.f32 %v1997, 0.0
  %v2047 = vmax.f32 %v1998, 0.0
  %v2048 = vmax.f32 %v1999, 0.0
  %v2049 = vmax.f32 %v2000, 0.0
  %s2050 = scalar_lea.vmem %s0, 1176
  %v2051 = vld [vmem:[%s2050] sm:$0xff]
  %v2052 = vld [vmem:[%s2050 + $0x8] sm:$0xff]
  %v2053 = vld [vmem:[%s2050 + $0x10] sm:$0xff]
  %v2054 = vld [vmem:[%s2050 + $0x18] sm:$0xff]
  %v2055 = vld [vmem:[%s2050 + $0x20] sm:$0xff]
  %v2056 = vld [vmem:[%s2050 + $0x28] sm:$0xff]
  %v2057 = vld [vmem:[%s2050 + $0x30] sm:$0xff]
  %v2058 = vld [vmem:[%s2050 + $0x38] sm:$0xff]
  %v2059 = vld [vmem:[%s2050 + $0x40] sm:$0xff]
  %v2060 = vld [vmem:[%s2050 + $0x48] sm:$0xff]
  %v2061 = vld [vmem:[%s2050 + $0x50] sm:$0xff]
  %v2062 = vld [vmem:[%s2050 + $0x58] sm:$0xff]
  %v2063 = vld [vmem:[%s2050 + $0x60] sm:$0xff]
  %v2064 = vld [vmem:[%s2050 + $0x68] sm:$0xff]
  %v2065 = vld [vmem:[%s2050 + $0x70] sm:$0xff]
  %v2066 = vld [vmem:[%s2050 + $0x78] sm:$0xff]
  %v2067 = vld [vmem:[%s2050 + $0x80] sm:$0xff]
  %v2068 = vld [vmem:[%s2050 + $0x88] sm:$0xff]
  %v2069 = vld [vmem:[%s2050 + $0x90] sm:$0xff]
  %v2070 = vld [vmem:[%s2050 + $0x98] sm:$0xff]
  %v2071 = vld [vmem:[%s2050 + $0xa0] sm:$0xff]
  %v2072 = vld [vmem:[%s2050 + $0xa8] sm:$0xff]
  %v2073 = vld [vmem:[%s2050 + $0xb0] sm:$0xff]
  %v2074 = vld [vmem:[%s2050 + $0xb8] sm:$0xff]
  %v2075 = vld [vmem:[%s2050 + $0xc0] sm:$0xff]
  %v2076 = vld [vmem:[%s2050 + $0xc8] sm:$0xff]
  %v2077 = vld [vmem:[%s2050 + $0xd0] sm:$0xff]
  %v2078 = vld [vmem:[%s2050 + $0xd8] sm:$0xff]
  %v2079 = vld [vmem:[%s2050 + $0xe0] sm:$0xff]
  %v2080 = vld [vmem:[%s2050 + $0xe8] sm:$0xff]
  %v2081 = vld [vmem:[%s2050 + $0xf0] sm:$0xff]
  %v2082 = vld [vmem:[%s2050 + $0xf8] sm:$0xff]
  %v2083 = vld [vmem:[%s2050 + $0x100] sm:$0xff]
  %v2084 = vld [vmem:[%s2050 + $0x108] sm:$0xff]
  %v2085 = vld [vmem:[%s2050 + $0x110] sm:$0xff]
  %v2086 = vld [vmem:[%s2050 + $0x118] sm:$0xff]
  %v2087 = vld [vmem:[%s2050 + $0x120] sm:$0xff]
  %v2088 = vld [vmem:[%s2050 + $0x128] sm:$0xff]
  %v2089 = vld [vmem:[%s2050 + $0x130] sm:$0xff]
  %v2090 = vld [vmem:[%s2050 + $0x138] sm:$0xff]
  %v2091 = vld [vmem:[%s2050 + $0x140] sm:$0xff]
  %v2092 = vld [vmem:[%s2050 + $0x148] sm:$0xff]
  %v2093 = vld [vmem:[%s2050 + $0x150] sm:$0xff]
  %v2094 = vld [vmem:[%s2050 + $0x158] sm:$0xff]
  %v2095 = vld [vmem:[%s2050 + $0x160] sm:$0xff]
  %v2096 = vld [vmem:[%s2050 + $0x168] sm:$0xff]
  %v2097 = vld [vmem:[%s2050 + $0x170] sm:$0xff]
  %v2098 = vld [vmem:[%s2050 + $0x178] sm:$0xff]
  %v2099 = vld [vmem:[%s2050 + $0x180] sm:$0xff]
  %v2101 = vsel %vm72, %v2051, 0
  %v2104 = vsel %vm72, %v2052, 0
  %v2107 = vsel %vm72, %v2053, 0
  %v2110 = vsel %vm72, %v2054, 0
  %v2113 = vsel %vm72, %v2055, 0
  %v2116 = vsel %vm72, %v2056, 0
  %v2119 = vsel %vm72, %v2057, 0
  %v2122 = vsel %vm72, %v2058, 0
  %v2125 = vsel %vm72, %v2059, 0
  %v2128 = vsel %vm72, %v2060, 0
  %v2131 = vsel %vm72, %v2061, 0
  %v2134 = vsel %vm72, %v2062, 0
  %v2137 = vsel %vm72, %v2063, 0
  %v2140 = vsel %vm72, %v2064, 0
  %v2143 = vsel %vm72, %v2065, 0
  %v2146 = vsel %vm72, %v2066, 0
  %v2149 = vsel %vm72, %v2067, 0
  %v2152 = vsel %vm72, %v2068, 0
  %v2155 = vsel %vm72, %v2069, 0
  %v2158 = vsel %vm72, %v2070, 0
  %v2161 = vsel %vm72, %v2071, 0
  %v2164 = vsel %vm72, %v2072, 0
  %v2167 = vsel %vm72, %v2073, 0
  %v2170 = vsel %vm72, %v2074, 0
  %v2173 = vsel %vm72, %v2075, 0
  %v2176 = vsel %vm72, %v2076, 0
  %v2179 = vsel %vm72, %v2077, 0
  %v2182 = vsel %vm72, %v2078, 0
  %v2185 = vsel %vm72, %v2079, 0
  %v2188 = vsel %vm72, %v2080, 0
  %v2191 = vsel %vm72, %v2081, 0
  %v2194 = vsel %vm72, %v2082, 0
  %v2197 = vsel %vm72, %v2083, 0
  %v2200 = vsel %vm72, %v2084, 0
  %v2203 = vsel %vm72, %v2085, 0
  %v2206 = vsel %vm72, %v2086, 0
  %v2209 = vsel %vm72, %v2087, 0
  %v2212 = vsel %vm72, %v2088, 0
  %v2215 = vsel %vm72, %v2089, 0
  %v2218 = vsel %vm72, %v2090, 0
  %v2221 = vsel %vm72, %v2091, 0
  %v2224 = vsel %vm72, %v2092, 0
  %v2227 = vsel %vm72, %v2093, 0
  %v2230 = vsel %vm72, %v2094, 0
  %v2233 = vsel %vm72, %v2095, 0
  %v2236 = vsel %vm72, %v2096, 0
  %v2239 = vsel %vm72, %v2097, 0
  %v2242 = vsel %vm72, %v2098, 0
  %v2245 = vsel %vm72, %v2099, 0
  %2247 = vmatprep.subr.mxu0 0.0
  %2248 = vmatpush1.msra.mxu0 %v17
  %2249 = vmatprep.subr.mxu0 0.0
  %2250 = vmatpush1.msra.mxu0 %v18
  %2251 = vmatprep.subr.mxu0 0.0
  %2252 = vmatpush1.msra.mxu0 %v19
  %2253 = vmatprep.subr.mxu0 0.0
  %2254 = vmatpush1.msra.mxu0 %v222
  %2255 = vmatprep.subr.mxu0 0.0
  %2256 = vmatpush1.msra.mxu0 0.0
  %2257 = vmatprep.subr.mxu0 0.0
  %2258 = vmatpush1.msra.mxu0 0.0
  %2259 = vmatprep.subr.mxu0 0.0
  %2260 = vmatpush1.msra.mxu0 0.0
  %2261 = vmatprep.subr.mxu0 0.0
  %2262 = vmatpush1.msra.mxu0 0.0
  %2263 = vmatprep.subr.mxu0 0.0
  %2264 = vmatpush1.msra.mxu0 0.0
  %2265 = vmatprep.subr.mxu0 0.0
  %2266 = vmatpush1.msra.mxu0 0.0
  %2267 = vmatprep.subr.mxu0 0.0
  %2268 = vmatpush1.msra.mxu0 0.0
  %2269 = vmatprep.subr.mxu0 0.0
  %2270 = vmatpush1.msra.mxu0 0.0
  %2271 = vmatprep.subr.mxu0 0.0
  %2272 = vmatpush1.msra.mxu0 0.0
  %2273 = vmatprep.subr.mxu0 0.0
  %2274 = vmatpush1.msra.mxu0 0.0
  %2275 = vmatprep.subr.mxu0 0.0
  %2276 = vmatpush1.msra.mxu0 0.0
  %2277 = vmatprep.subr.mxu0 0.0
  %2278 = vmatpush1.msra.mxu0 0.0
  %2279 = vmatprep.subr.mxu0 0.0
  %2280 = vmatpush1.msra.mxu0 0.0
  %2281 = vmatprep.subr.mxu0 0.0
  %2282 = vmatpush1.msra.mxu0 0.0
  %2283 = vmatprep.subr.mxu0 0.0
  %2284 = vmatpush1.msra.mxu0 0.0
  %2285 = vmatprep.subr.mxu0 0.0
  %2286 = vmatpush1.msra.mxu0 0.0
  %2287 = vmatprep.subr.mxu0 0.0
  %2288 = vmatpush1.msra.mxu0 0.0
  %2289 = vmatprep.subr.mxu0 0.0
  %2290 = vmatpush1.msra.mxu0 0.0
  %2291 = vmatprep.subr.mxu0 0.0
  %2292 = vmatpush1.msra.mxu0 0.0
  %2293 = vmatprep.subr.mxu0 0.0
  %2294 = vmatpush1.msra.mxu0 0.0
  %2295 = vmatprep.subr.mxu0 0.0
  %2296 = vmatpush1.msra.mxu0 0.0
  %2297 = vmatprep.subr.mxu0 0.0
  %2298 = vmatpush1.msra.mxu0 0.0
  %2299 = vmatprep.subr.mxu0 0.0
  %2300 = vmatpush1.msra.mxu0 0.0
  %2301 = vmatprep.subr.mxu0 0.0
  %2302 = vmatpush1.msra.mxu0 0.0
  %2303 = vmatprep.subr.mxu0 0.0
  %2304 = vmatpush1.msra.mxu0 0.0
  %2305 = vmatprep.subr.mxu0 0.0
  %2306 = vmatpush1.msra.mxu0 0.0
  %2307 = vmatprep.subr.mxu0 0.0
  %2308 = vmatpush1.msra.mxu0 0.0
  %2309 = vmatprep.subr.mxu0 0.0
  %2310 = vmatpush1.msra.mxu0 0.0
  %2311 = vmatprep.mubr.f32.mxu0 0.0
  %2312 = vmatmul.mubr.f32.gmra.mrb[0].mxu0 %v2101
  %v2313 = vpop.f32.mrb[0].mxu0
  %v2314 = vadd.f32 0.0, %v2313
  %v2315 = vpop.f32.mrb[0].mxu0
  %2316 = vmatprep.mubr.f32.mxu0 0.0
  %2317 = vmatmul.mubr.f32.gmra.mrb[0].mxu0 %v2104
  %v2318 = vpop.f32.mrb[0].mxu0
  %v2319 = vadd.f32 0.0, %v2318
  %v2320 = vpop.f32.mrb[0].mxu0
  %2321 = vmatprep.mubr.f32.mxu0 0.0
  %2322 = vmatmul.mubr.f32.gmra.mrb[0].mxu0 %v2107
  %v2323 = vpop.f32.mrb[0].mxu0
  %v2324 = vadd.f32 0.0, %v2323
  %v2325 = vpop.f32.mrb[0].mxu0
  %2326 = vmatprep.mubr.f32.mxu0 0.0
  %2327 = vmatmul.mubr.f32.gmra.mrb[0].mxu0 %v2110
  %v2328 = vpop.f32.mrb[0].mxu0
  %v2329 = vadd.f32 0.0, %v2328
  %v2330 = vpop.f32.mrb[0].mxu0
  %2331 = vmatprep.mubr.f32.mxu0 0.0
  %2332 = vmatmul.mubr.f32.gmra.mrb[0].mxu0 %v2113
  %v2333 = vpop.f32.mrb[0].mxu0
  %v2334 = vadd.f32 0.0, %v2333
  %v2335 = vpop.f32.mrb[0].mxu0
  %2336 = vmatprep.mubr.f32.mxu0 0.0
  %2337 = vmatmul.mubr.f32.gmra.mrb[0].mxu0 %v2116
  %v2338 = vpop.f32.mrb[0].mxu0
  %v2339 = vadd.f32 0.0, %v2338
  %v2340 = vpop.f32.mrb[0].mxu0
  %2341 = vmatprep.mubr.f32.mxu0 0.0
  %2342 = vmatmul.mubr.f32.gmra.mrb[0].mxu0 %v2119
  %v2343 = vpop.f32.mrb[0].mxu0
  %v2344 = vadd.f32 0.0, %v2343
  %v2345 = vpop.f32.mrb[0].mxu0
  %2346 = vmatprep.mubr.f32.mxu0 0.0
  %2347 = vmatmul.mubr.f32.gmra.mrb[0].mxu0 %v2122
  %v2348 = vpop.f32.mrb[0].mxu0
  %v2349 = vadd.f32 0.0, %v2348
  %v2350 = vpop.f32.mrb[0].mxu0
  %2351 = vmatprep.mubr.f32.mxu0 0.0
  %2352 = vmatmul.mubr.f32.gmra.mrb[0].mxu0 %v2125
  %v2353 = vpop.f32.mrb[0].mxu0
  %v2354 = vadd.f32 0.0, %v2353
  %v2355 = vpop.f32.mrb[0].mxu0
  %2356 = vmatprep.mubr.f32.mxu0 0.0
  %2357 = vmatmul.mubr.f32.gmra.mrb[0].mxu0 %v2128
  %v2358 = vpop.f32.mrb[0].mxu0
  %v2359 = vadd.f32 0.0, %v2358
  %v2360 = vpop.f32.mrb[0].mxu0
  %2361 = vmatprep.mubr.f32.mxu0 0.0
  %2362 = vmatmul.mubr.f32.gmra.mrb[0].mxu0 %v2131
  %v2363 = vpop.f32.mrb[0].mxu0
  %v2364 = vadd.f32 0.0, %v2363
  %v2365 = vpop.f32.mrb[0].mxu0
  %2366 = vmatprep.mubr.f32.mxu0 0.0
  %2367 = vmatmul.mubr.f32.gmra.mrb[0].mxu0 %v2134
  %v2368 = vpop.f32.mrb[0].mxu0
  %v2369 = vadd.f32 0.0, %v2368
  %v2370 = vpop.f32.mrb[0].mxu0
  %2371 = vmatprep.mubr.f32.mxu0 0.0
  %2372 = vmatmul.mubr.f32.gmra.mrb[0].mxu0 %v2137
  %v2373 = vpop.f32.mrb[0].mxu0
  %v2374 = vadd.f32 0.0, %v2373
  %v2375 = vpop.f32.mrb[0].mxu0
  %2376 = vmatprep.mubr.f32.mxu0 0.0
  %2377 = vmatmul.mubr.f32.gmra.mrb[0].mxu0 %v2140
  %v2378 = vpop.f32.mrb[0].mxu0
  %v2379 = vadd.f32 0.0, %v2378
  %v2380 = vpop.f32.mrb[0].mxu0
  %2381 = vmatprep.mubr.f32.mxu0 0.0
  %2382 = vmatmul.mubr.f32.gmra.mrb[0].mxu0 %v2143
  %v2383 = vpop.f32.mrb[0].mxu0
  %v2384 = vadd.f32 0.0, %v2383
  %v2385 = vpop.f32.mrb[0].mxu0
  %2386 = vmatprep.mubr.f32.mxu0 0.0
  %2387 = vmatmul.mubr.f32.gmra.mrb[0].mxu0 %v2146
  %v2388 = vpop.f32.mrb[0].mxu0
  %v2389 = vadd.f32 0.0, %v2388
  %v2390 = vpop.f32.mrb[0].mxu0
  %2391 = vmatprep.mubr.f32.mxu0 0.0
  %2392 = vmatmul.mubr.f32.gmra.mrb[0].mxu0 %v2149
  %v2393 = vpop.f32.mrb[0].mxu0
  %v2394 = vadd.f32 0.0, %v2393
  %v2395 = vpop.f32.mrb[0].mxu0
  %2396 = vmatprep.mubr.f32.mxu0 0.0
  %2397 = vmatmul.mubr.f32.gmra.mrb[0].mxu0 %v2152
  %v2398 = vpop.f32.mrb[0].mxu0
  %v2399 = vadd.f32 0.0, %v2398
  %v2400 = vpop.f32.mrb[0].mxu0
  %2401 = vmatprep.mubr.f32.mxu0 0.0
  %2402 = vmatmul.mubr.f32.gmra.mrb[0].mxu0 %v2155
  %v2403 = vpop.f32.mrb[0].mxu0
  %v2404 = vadd.f32 0.0, %v2403
  %v2405 = vpop.f32.mrb[0].mxu0
  %2406 = vmatprep.mubr.f32.mxu0 0.0
  %2407 = vmatmul.mubr.f32.gmra.mrb[0].mxu0 %v2158
  %v2408 = vpop.f32.mrb[0].mxu0
  %v2409 = vadd.f32 0.0, %v2408
  %v2410 = vpop.f32.mrb[0].mxu0
  %2411 = vmatprep.mubr.f32.mxu0 0.0
  %2412 = vmatmul.mubr.f32.gmra.mrb[0].mxu0 %v2161
  %v2413 = vpop.f32.mrb[0].mxu0
  %v2414 = vadd.f32 0.0, %v2413
  %v2415 = vpop.f32.mrb[0].mxu0
  %2416 = vmatprep.mubr.f32.mxu0 0.0
  %2417 = vmatmul.mubr.f32.gmra.mrb[0].mxu0 %v2164
  %v2418 = vpop.f32.mrb[0].mxu0
  %v2419 = vadd.f32 0.0, %v2418
  %v2420 = vpop.f32.mrb[0].mxu0
  %2421 = vmatprep.mubr.f32.mxu0 0.0
  %2422 = vmatmul.mubr.f32.gmra.mrb[0].mxu0 %v2167
  %v2423 = vpop.f32.mrb[0].mxu0
  %v2424 = vadd.f32 0.0, %v2423
  %v2425 = vpop.f32.mrb[0].mxu0
  %2426 = vmatprep.mubr.f32.mxu0 0.0
  %2427 = vmatmul.mubr.f32.gmra.mrb[0].mxu0 %v2170
  %v2428 = vpop.f32.mrb[0].mxu0
  %v2429 = vadd.f32 0.0, %v2428
  %v2430 = vpop.f32.mrb[0].mxu0
  %2431 = vmatprep.mubr.f32.mxu0 0.0
  %2432 = vmatmul.mubr.f32.gmra.mrb[0].mxu0 %v2173
  %v2433 = vpop.f32.mrb[0].mxu0
  %v2434 = vadd.f32 0.0, %v2433
  %v2435 = vpop.f32.mrb[0].mxu0
  %2436 = vmatprep.mubr.f32.mxu0 0.0
  %2437 = vmatmul.mubr.f32.gmra.mrb[0].mxu0 %v2176
  %v2438 = vpop.f32.mrb[0].mxu0
  %v2439 = vadd.f32 0.0, %v2438
  %v2440 = vpop.f32.mrb[0].mxu0
  %2441 = vmatprep.mubr.f32.mxu0 0.0
  %2442 = vmatmul.mubr.f32.gmra.mrb[0].mxu0 %v2179
  %v2443 = vpop.f32.mrb[0].mxu0
  %v2444 = vadd.f32 0.0, %v2443
  %v2445 = vpop.f32.mrb[0].mxu0
  %2446 = vmatprep.mubr.f32.mxu0 0.0
  %2447 = vmatmul.mubr.f32.gmra.mrb[0].mxu0 %v2182
  %v2448 = vpop.f32.mrb[0].mxu0
  %v2449 = vadd.f32 0.0, %v2448
  %v2450 = vpop.f32.mrb[0].mxu0
  %2451 = vmatprep.mubr.f32.mxu0 0.0
  %2452 = vmatmul.mubr.f32.gmra.mrb[0].mxu0 %v2185
  %v2453 = vpop.f32.mrb[0].mxu0
  %v2454 = vadd.f32 0.0, %v2453
  %v2455 = vpop.f32.mrb[0].mxu0
  %2456 = vmatprep.mubr.f32.mxu0 0.0
  %2457 = vmatmul.mubr.f32.gmra.mrb[0].mxu0 %v2188
  %v2458 = vpop.f32.mrb[0].mxu0
  %v2459 = vadd.f32 0.0, %v2458
  %v2460 = vpop.f32.mrb[0].mxu0
  %2461 = vmatprep.mubr.f32.mxu0 0.0
  %2462 = vmatmul.mubr.f32.gmra.mrb[0].mxu0 %v2191
  %v2463 = vpop.f32.mrb[0].mxu0
  %v2464 = vadd.f32 0.0, %v2463
  %v2465 = vpop.f32.mrb[0].mxu0
  %2466 = vmatprep.mubr.f32.mxu0 0.0
  %2467 = vmatmul.mubr.f32.gmra.mrb[0].mxu0 %v2194
  %v2468 = vpop.f32.mrb[0].mxu0
  %v2469 = vadd.f32 0.0, %v2468
  %v2470 = vpop.f32.mrb[0].mxu0
  %2471 = vmatprep.mubr.f32.mxu0 0.0
  %2472 = vmatmul.mubr.f32.gmra.mrb[0].mxu0 %v2197
  %v2473 = vpop.f32.mrb[0].mxu0
  %v2474 = vadd.f32 0.0, %v2473
  %v2475 = vpop.f32.mrb[0].mxu0
  %2476 = vmatprep.mubr.f32.mxu0 0.0
  %2477 = vmatmul.mubr.f32.gmra.mrb[0].mxu0 %v2200
  %v2478 = vpop.f32.mrb[0].mxu0
  %v2479 = vadd.f32 0.0, %v2478
  %v2480 = vpop.f32.mrb[0].mxu0
  %2481 = vmatprep.mubr.f32.mxu0 0.0
  %2482 = vmatmul.mubr.f32.gmra.mrb[0].mxu0 %v2203
  %v2483 = vpop.f32.mrb[0].mxu0
  %v2484 = vadd.f32 0.0, %v2483
  %v2485 = vpop.f32.mrb[0].mxu0
  %2486 = vmatprep.mubr.f32.mxu0 0.0
  %2487 = vmatmul.mubr.f32.gmra.mrb[0].mxu0 %v2206
  %v2488 = vpop.f32.mrb[0].mxu0
  %v2489 = vadd.f32 0.0, %v2488
  %v2490 = vpop.f32.mrb[0].mxu0
  %2491 = vmatprep.mubr.f32.mxu0 0.0
  %2492 = vmatmul.mubr.f32.gmra.mrb[0].mxu0 %v2209
  %v2493 = vpop.f32.mrb[0].mxu0
  %v2494 = vadd.f32 0.0, %v2493
  %v2495 = vpop.f32.mrb[0].mxu0
  %2496 = vmatprep.mubr.f32.mxu0 0.0
  %2497 = vmatmul.mubr.f32.gmra.mrb[0].mxu0 %v2212
  %v2498 = vpop.f32.mrb[0].mxu0
  %v2499 = vadd.f32 0.0, %v2498
  %v2500 = vpop.f32.mrb[0].mxu0
  %2501 = vmatprep.mubr.f32.mxu0 0.0
  %2502 = vmatmul.mubr.f32.gmra.mrb[0].mxu0 %v2215
  %v2503 = vpop.f32.mrb[0].mxu0
  %v2504 = vadd.f32 0.0, %v2503
  %v2505 = vpop.f32.mrb[0].mxu0
  %2506 = vmatprep.mubr.f32.mxu0 0.0
  %2507 = vmatmul.mubr.f32.gmra.mrb[0].mxu0 %v2218
  %v2508 = vpop.f32.mrb[0].mxu0
  %v2509 = vadd.f32 0.0, %v2508
  %v2510 = vpop.f32.mrb[0].mxu0
  %2511 = vmatprep.mubr.f32.mxu0 0.0
  %2512 = vmatmul.mubr.f32.gmra.mrb[0].mxu0 %v2221
  %v2513 = vpop.f32.mrb[0].mxu0
  %v2514 = vadd.f32 0.0, %v2513
  %v2515 = vpop.f32.mrb[0].mxu0
  %2516 = vmatprep.mubr.f32.mxu0 0.0
  %2517 = vmatmul.mubr.f32.gmra.mrb[0].mxu0 %v2224
  %v2518 = vpop.f32.mrb[0].mxu0
  %v2519 = vadd.f32 0.0, %v2518
  %v2520 = vpop.f32.mrb[0].mxu0
  %2521 = vmatprep.mubr.f32.mxu0 0.0
  %2522 = vmatmul.mubr.f32.gmra.mrb[0].mxu0 %v2227
  %v2523 = vpop.f32.mrb[0].mxu0
  %v2524 = vadd.f32 0.0, %v2523
  %v2525 = vpop.f32.mrb[0].mxu0
  %2526 = vmatprep.mubr.f32.mxu0 0.0
  %2527 = vmatmul.mubr.f32.gmra.mrb[0].mxu0 %v2230
  %v2528 = vpop.f32.mrb[0].mxu0
  %v2529 = vadd.f32 0.0, %v2528
  %v2530 = vpop.f32.mrb[0].mxu0
  %2531 = vmatprep.mubr.f32.mxu0 0.0
  %2532 = vmatmul.mubr.f32.gmra.mrb[0].mxu0 %v2233
  %v2533 = vpop.f32.mrb[0].mxu0
  %v2534 = vadd.f32 0.0, %v2533
  %v2535 = vpop.f32.mrb[0].mxu0
  %2536 = vmatprep.mubr.f32.mxu0 0.0
  %2537 = vmatmul.mubr.f32.gmra.mrb[0].mxu0 %v2236
  %v2538 = vpop.f32.mrb[0].mxu0
  %v2539 = vadd.f32 0.0, %v2538
  %v2540 = vpop.f32.mrb[0].mxu0
  %2541 = vmatprep.mubr.f32.mxu0 0.0
  %2542 = vmatmul.mubr.f32.gmra.mrb[0].mxu0 %v2239
  %v2543 = vpop.f32.mrb[0].mxu0
  %v2544 = vadd.f32 0.0, %v2543
  %v2545 = vpop.f32.mrb[0].mxu0
  %2546 = vmatprep.mubr.f32.mxu0 0.0
  %2547 = vmatmul.mubr.f32.gmra.mrb[0].mxu0 %v2242
  %v2548 = vpop.f32.mrb[0].mxu0
  %v2549 = vadd.f32 0.0, %v2548
  %v2550 = vpop.f32.mrb[0].mxu0
  %2551 = vmatprep.mubr.f32.mxu0 0.0
  %2552 = vmatmul.mubr.f32.gmra.mrb[0].mxu0 %v2245
  %v2553 = vpop.f32.mrb[0].mxu0
  %v2554 = vadd.f32 0.0, %v2553
  %v2555 = vpop.f32.mrb[0].mxu0
  %2556 = vdwg.mxu0
  %v2557 = vmul.f32 %v2314, %v538
  %v2558 = vmul.f32 %v2319, %v538
  %v2559 = vmul.f32 %v2324, %v538
  %v2560 = vmul.f32 %v2329, %v538
  %v2561 = vmul.f32 %v2334, %v538
  %v2562 = vmul.f32 %v2339, %v538
  %v2563 = vmul.f32 %v2344, %v538
  %v2564 = vmul.f32 %v2349, %v538
  %v2565 = vmul.f32 %v2354, %v538
  %v2566 = vmul.f32 %v2359, %v538
  %v2567 = vmul.f32 %v2364, %v538
  %v2568 = vmul.f32 %v2369, %v538
  %v2569 = vmul.f32 %v2374, %v538
  %v2570 = vmul.f32 %v2379, %v538
  %v2571 = vmul.f32 %v2384, %v538
  %v2572 = vmul.f32 %v2389, %v538
  %v2573 = vmul.f32 %v2394, %v538
  %v2574 = vmul.f32 %v2399, %v538
  %v2575 = vmul.f32 %v2404, %v538
  %v2576 = vmul.f32 %v2409, %v538
  %v2577 = vmul.f32 %v2414, %v538
  %v2578 = vmul.f32 %v2419, %v538
  %v2579 = vmul.f32 %v2424, %v538
  %v2580 = vmul.f32 %v2429, %v538
  %v2581 = vmul.f32 %v2434, %v538
  %v2582 = vmul.f32 %v2439, %v538
  %v2583 = vmul.f32 %v2444, %v538
  %v2584 = vmul.f32 %v2449, %v538
  %v2585 = vmul.f32 %v2454, %v538
  %v2586 = vmul.f32 %v2459, %v538
  %v2587 = vmul.f32 %v2464, %v538
  %v2588 = vmul.f32 %v2469, %v538
  %v2589 = vmul.f32 %v2474, %v538
  %v2590 = vmul.f32 %v2479, %v538
  %v2591 = vmul.f32 %v2484, %v538
  %v2592 = vmul.f32 %v2489, %v538
  %v2593 = vmul.f32 %v2494, %v538
  %v2594 = vmul.f32 %v2499, %v538
  %v2595 = vmul.f32 %v2504, %v538
  %v2596 = vmul.f32 %v2509, %v538
  %v2597 = vmul.f32 %v2514, %v538
  %v2598 = vmul.f32 %v2519, %v538
  %v2599 = vmul.f32 %v2524, %v538
  %v2600 = vmul.f32 %v2529, %v538
  %v2601 = vmul.f32 %v2534, %v538
  %v2602 = vmul.f32 %v2539, %v538
  %v2603 = vmul.f32 %v2544, %v538
  %v2604 = vmul.f32 %v2549, %v538
  %v2605 = vmul.f32 %v2554, %v538
  %v2606 = vadd.f32 %v2557, %v593
  %v2607 = vadd.f32 %v2558, %v593
  %v2608 = vadd.f32 %v2559, %v593
  %v2609 = vadd.f32 %v2560, %v593
  %v2610 = vadd.f32 %v2561, %v593
  %v2611 = vadd.f32 %v2562, %v593
  %v2612 = vadd.f32 %v2563, %v593
  %v2613 = vadd.f32 %v2564, %v593
  %v2614 = vadd.f32 %v2565, %v593
  %v2615 = vadd.f32 %v2566, %v593
  %v2616 = vadd.f32 %v2567, %v593
  %v2617 = vadd.f32 %v2568, %v593
  %v2618 = vadd.f32 %v2569, %v593
  %v2619 = vadd.f32 %v2570, %v593
  %v2620 = vadd.f32 %v2571, %v593
  %v2621 = vadd.f32 %v2572, %v593
  %v2622 = vadd.f32 %v2573, %v593
  %v2623 = vadd.f32 %v2574, %v593
  %v2624 = vadd.f32 %v2575, %v593
  %v2625 = vadd.f32 %v2576, %v593
  %v2626 = vadd.f32 %v2577, %v593
  %v2627 = vadd.f32 %v2578, %v593
  %v2628 = vadd.f32 %v2579, %v593
  %v2629 = vadd.f32 %v2580, %v593
  %v2630 = vadd.f32 %v2581, %v593
  %v2631 = vadd.f32 %v2582, %v593
  %v2632 = vadd.f32 %v2583, %v593
  %v2633 = vadd.f32 %v2584, %v593
  %v2634 = vadd.f32 %v2585, %v593
  %v2635 = vadd.f32 %v2586, %v593
  %v2636 = vadd.f32 %v2587, %v593
  %v2637 = vadd.f32 %v2588, %v593
  %v2638 = vadd.f32 %v2589, %v593
  %v2639 = vadd.f32 %v2590, %v593
  %v2640 = vadd.f32 %v2591, %v593
  %v2641 = vadd.f32 %v2592, %v593
  %v2642 = vadd.f32 %v2593, %v593
  %v2643 = vadd.f32 %v2594, %v593
  %v2644 = vadd.f32 %v2595, %v593
  %v2645 = vadd.f32 %v2596, %v593
  %v2646 = vadd.f32 %v2597, %v593
  %v2647 = vadd.f32 %v2598, %v593
  %v2648 = vadd.f32 %v2599, %v593
  %v2649 = vadd.f32 %v2600, %v593
  %v2650 = vadd.f32 %v2601, %v593
  %v2651 = vadd.f32 %v2602, %v593
  %v2652 = vadd.f32 %v2603, %v593
  %v2653 = vadd.f32 %v2604, %v593
  %v2654 = vadd.f32 %v2605, %v593
  %v2655 = vmax.f32 %v2606, 0.0
  %v2656 = vmax.f32 %v2607, 0.0
  %v2657 = vmax.f32 %v2608, 0.0
  %v2658 = vmax.f32 %v2609, 0.0
  %v2659 = vmax.f32 %v2610, 0.0
  %v2660 = vmax.f32 %v2611, 0.0
  %v2661 = vmax.f32 %v2612, 0.0
  %v2662 = vmax.f32 %v2613, 0.0
  %v2663 = vmax.f32 %v2614, 0.0
  %v2664 = vmax.f32 %v2615, 0.0
  %v2665 = vmax.f32 %v2616, 0.0
  %v2666 = vmax.f32 %v2617, 0.0
  %v2667 = vmax.f32 %v2618, 0.0
  %v2668 = vmax.f32 %v2619, 0.0
  %v2669 = vmax.f32 %v2620, 0.0
  %v2670 = vmax.f32 %v2621, 0.0
  %v2671 = vmax.f32 %v2622, 0.0
  %v2672 = vmax.f32 %v2623, 0.0
  %v2673 = vmax.f32 %v2624, 0.0
  %v2674 = vmax.f32 %v2625, 0.0
  %v2675 = vmax.f32 %v2626, 0.0
  %v2676 = vmax.f32 %v2627, 0.0
  %v2677 = vmax.f32 %v2628, 0.0
  %v2678 = vmax.f32 %v2629, 0.0
  %v2679 = vmax.f32 %v2630, 0.0
  %v2680 = vmax.f32 %v2631, 0.0
  %v2681 = vmax.f32 %v2632, 0.0
  %v2682 = vmax.f32 %v2633, 0.0
  %v2683 = vmax.f32 %v2634, 0.0
  %v2684 = vmax.f32 %v2635, 0.0
  %v2685 = vmax.f32 %v2636, 0.0
  %v2686 = vmax.f32 %v2637, 0.0
  %v2687 = vmax.f32 %v2638, 0.0
  %v2688 = vmax.f32 %v2639, 0.0
  %v2689 = vmax.f32 %v2640, 0.0
  %v2690 = vmax.f32 %v2641, 0.0
  %v2691 = vmax.f32 %v2642, 0.0
  %v2692 = vmax.f32 %v2643, 0.0
  %v2693 = vmax.f32 %v2644, 0.0
  %v2694 = vmax.f32 %v2645, 0.0
  %v2695 = vmax.f32 %v2646, 0.0
  %v2696 = vmax.f32 %v2647, 0.0
  %v2697 = vmax.f32 %v2648, 0.0
  %v2698 = vmax.f32 %v2649, 0.0
  %v2699 = vmax.f32 %v2650, 0.0
  %v2700 = vmax.f32 %v2651, 0.0
  %v2701 = vmax.f32 %v2652, 0.0
  %v2702 = vmax.f32 %v2653, 0.0
  %v2703 = vmax.f32 %v2654, 0.0
  %v2704 = vmax.f32 %v2001, %v2655
  %v2705 = vmax.f32 %v2002, %v2656
  %v2706 = vmax.f32 %v2003, %v2657
  %v2707 = vmax.f32 %v2004, %v2658
  %v2708 = vmax.f32 %v2005, %v2659
  %v2709 = vmax.f32 %v2006, %v2660
  %v2710 = vmax.f32 %v2007, %v2661
  %v2711 = vmax.f32 %v2008, %v2662
  %v2712 = vmax.f32 %v2009, %v2663
  %v2713 = vmax.f32 %v2010, %v2664
  %v2714 = vmax.f32 %v2011, %v2665
  %v2715 = vmax.f32 %v2012, %v2666
  %v2716 = vmax.f32 %v2013, %v2667
  %v2717 = vmax.f32 %v2014, %v2668
  %v2718 = vmax.f32 %v2015, %v2669
  %v2719 = vmax.f32 %v2016, %v2670
  %v2720 = vmax.f32 %v2017, %v2671
  %v2721 = vmax.f32 %v2018, %v2672
  %v2722 = vmax.f32 %v2019, %v2673
  %v2723 = vmax.f32 %v2020, %v2674
  %v2724 = vmax.f32 %v2021, %v2675
  %v2725 = vmax.f32 %v2022, %v2676
  %v2726 = vmax.f32 %v2023, %v2677
  %v2727 = vmax.f32 %v2024, %v2678
  %v2728 = vmax.f32 %v2025, %v2679
  %v2729 = vmax.f32 %v2026, %v2680
  %v2730 = vmax.f32 %v2027, %v2681
  %v2731 = vmax.f32 %v2028, %v2682
  %v2732 = vmax.f32 %v2029, %v2683
  %v2733 = vmax.f32 %v2030, %v2684
  %v2734 = vmax.f32 %v2031, %v2685
  %v2735 = vmax.f32 %v2032, %v2686
  %v2736 = vmax.f32 %v2033, %v2687
  %v2737 = vmax.f32 %v2034, %v2688
  %v2738 = vmax.f32 %v2035, %v2689
  %v2739 = vmax.f32 %v2036, %v2690
  %v2740 = vmax.f32 %v2037, %v2691
  %v2741 = vmax.f32 %v2038, %v2692
  %v2742 = vmax.f32 %v2039, %v2693
  %v2743 = vmax.f32 %v2040, %v2694
  %v2744 = vmax.f32 %v2041, %v2695
  %v2745 = vmax.f32 %v2042, %v2696
  %v2746 = vmax.f32 %v2043, %v2697
  %v2747 = vmax.f32 %v2044, %v2698
  %v2748 = vmax.f32 %v2045, %v2699
  %v2749 = vmax.f32 %v2046, %v2700
  %v2750 = vmax.f32 %v2047, %v2701
  %v2751 = vmax.f32 %v2048, %v2702
  %v2752 = vmax.f32 %v2049, %v2703
  %v2753 = vmax.f32 %v1347, %v2704
  %v2754 = vmax.f32 %v1348, %v2705
  %v2755 = vmax.f32 %v1349, %v2706
  %v2756 = vmax.f32 %v1350, %v2707
  %v2757 = vmax.f32 %v1351, %v2708
  %v2758 = vmax.f32 %v1352, %v2709
  %v2759 = vmax.f32 %v1353, %v2710
  %v2760 = vmax.f32 %v1354, %v2711
  %v2761 = vmax.f32 %v1355, %v2712
  %v2762 = vmax.f32 %v1356, %v2713
  %v2763 = vmax.f32 %v1357, %v2714
  %v2764 = vmax.f32 %v1358, %v2715
  %v2765 = vmax.f32 %v1359, %v2716
  %v2766 = vmax.f32 %v1360, %v2717
  %v2767 = vmax.f32 %v1361, %v2718
  %v2768 = vmax.f32 %v1362, %v2719
  %v2769 = vmax.f32 %v1363, %v2720
  %v2770 = vmax.f32 %v1364, %v2721
  %v2771 = vmax.f32 %v1365, %v2722
  %v2772 = vmax.f32 %v1366, %v2723
  %v2773 = vmax.f32 %v1367, %v2724
  %v2774 = vmax.f32 %v1368, %v2725
  %v2775 = vmax.f32 %v1369, %v2726
  %v2776 = vmax.f32 %v1370, %v2727
  %v2777 = vmax.f32 %v1371, %v2728
  %v2778 = vmax.f32 %v1372, %v2729
  %v2779 = vmax.f32 %v1373, %v2730
  %v2780 = vmax.f32 %v1374, %v2731
  %v2781 = vmax.f32 %v1375, %v2732
  %v2782 = vmax.f32 %v1376, %v2733
  %v2783 = vmax.f32 %v1377, %v2734
  %v2784 = vmax.f32 %v1378, %v2735
  %v2785 = vmax.f32 %v1379, %v2736
  %v2786 = vmax.f32 %v1380, %v2737
  %v2787 = vmax.f32 %v1381, %v2738
  %v2788 = vmax.f32 %v1382, %v2739
  %v2789 = vmax.f32 %v1383, %v2740
  %v2790 = vmax.f32 %v1384, %v2741
  %v2791 = vmax.f32 %v1385, %v2742
  %v2792 = vmax.f32 %v1386, %v2743
  %v2793 = vmax.f32 %v1387, %v2744
  %v2794 = vmax.f32 %v1388, %v2745
  %v2795 = vmax.f32 %v1389, %v2746
  %v2796 = vmax.f32 %v1390, %v2747
  %v2797 = vmax.f32 %v1391, %v2748
  %v2798 = vmax.f32 %v1392, %v2749
  %v2799 = vmax.f32 %v1393, %v2750
  %v2800 = vmax.f32 %v1394, %v2751
  %v2801 = vmax.f32 %v1395, %v2752
  %vm2802 = vcmask 130048
  %2803 = vst.msk [vmem:[%s4] sm:$0xff] %vm2802, %v2753
  %2804 = vst.msk [vmem:[%s4 + $0x8] sm:$0xff] %vm2802, %v2754
  %2805 = vst.msk [vmem:[%s4 + $0x10] sm:$0xff] %vm2802, %v2755
  %2806 = vst.msk [vmem:[%s4 + $0x18] sm:$0xff] %vm2802, %v2756
  %2807 = vst.msk [vmem:[%s4 + $0x20] sm:$0xff] %vm2802, %v2757
  %2808 = vst.msk [vmem:[%s4 + $0x28] sm:$0xff] %vm2802, %v2758
  %2809 = vst.msk [vmem:[%s4 + $0x30] sm:$0xff] %vm2802, %v2759
  %2810 = vst.msk [vmem:[%s4 + $0x38] sm:$0xff] %vm2802, %v2760
  %2811 = vst.msk [vmem:[%s4 + $0x40] sm:$0xff] %vm2802, %v2761
  %2812 = vst.msk [vmem:[%s4 + $0x48] sm:$0xff] %vm2802, %v2762
  %2813 = vst.msk [vmem:[%s4 + $0x50] sm:$0xff] %vm2802, %v2763
  %2814 = vst.msk [vmem:[%s4 + $0x58] sm:$0xff] %vm2802, %v2764
  %2815 = vst.msk [vmem:[%s4 + $0x60] sm:$0xff] %vm2802, %v2765
  %2816 = vst.msk [vmem:[%s4 + $0x68] sm:$0xff] %vm2802, %v2766
  %2817 = vst.msk [vmem:[%s4 + $0x70] sm:$0xff] %vm2802, %v2767
  %2818 = vst.msk [vmem:[%s4 + $0x78] sm:$0xff] %vm2802, %v2768
  %2819 = vst.msk [vmem:[%s4 + $0x80] sm:$0xff] %vm2802, %v2769
  %2820 = vst.msk [vmem:[%s4 + $0x88] sm:$0xff] %vm2802, %v2770
  %2821 = vst.msk [vmem:[%s4 + $0x90] sm:$0xff] %vm2802, %v2771
  %2822 = vst.msk [vmem:[%s4 + $0x98] sm:$0xff] %vm2802, %v2772
  %2823 = vst.msk [vmem:[%s4 + $0xa0] sm:$0xff] %vm2802, %v2773
  %2824 = vst.msk [vmem:[%s4 + $0xa8] sm:$0xff] %vm2802, %v2774
  %2825 = vst.msk [vmem:[%s4 + $0xb0] sm:$0xff] %vm2802, %v2775
  %2826 = vst.msk [vmem:[%s4 + $0xb8] sm:$0xff] %vm2802, %v2776
  %2827 = vst.msk [vmem:[%s4 + $0xc0] sm:$0xff] %vm2802, %v2777
  %2828 = vst.msk [vmem:[%s4 + $0xc8] sm:$0xff] %vm2802, %v2778
  %2829 = vst.msk [vmem:[%s4 + $0xd0] sm:$0xff] %vm2802, %v2779
  %2830 = vst.msk [vmem:[%s4 + $0xd8] sm:$0xff] %vm2802, %v2780
  %2831 = vst.msk [vmem:[%s4 + $0xe0] sm:$0xff] %vm2802, %v2781
  %2832 = vst.msk [vmem:[%s4 + $0xe8] sm:$0xff] %vm2802, %v2782
  %2833 = vst.msk [vmem:[%s4 + $0xf0] sm:$0xff] %vm2802, %v2783
  %2834 = vst.msk [vmem:[%s4 + $0xf8] sm:$0xff] %vm2802, %v2784
  %2835 = vst.msk [vmem:[%s4 + $0x100] sm:$0xff] %vm2802, %v2785
  %2836 = vst.msk [vmem:[%s4 + $0x108] sm:$0xff] %vm2802, %v2786
  %2837 = vst.msk [vmem:[%s4 + $0x110] sm:$0xff] %vm2802, %v2787
  %2838 = vst.msk [vmem:[%s4 + $0x118] sm:$0xff] %vm2802, %v2788
  %2839 = vst.msk [vmem:[%s4 + $0x120] sm:$0xff] %vm2802, %v2789
  %2840 = vst.msk [vmem:[%s4 + $0x128] sm:$0xff] %vm2802, %v2790
  %2841 = vst.msk [vmem:[%s4 + $0x130] sm:$0xff] %vm2802, %v2791
  %2842 = vst.msk [vmem:[%s4 + $0x138] sm:$0xff] %vm2802, %v2792
  %2843 = vst.msk [vmem:[%s4 + $0x140] sm:$0xff] %vm2802, %v2793
  %2844 = vst.msk [vmem:[%s4 + $0x148] sm:$0xff] %vm2802, %v2794
  %2845 = vst.msk [vmem:[%s4 + $0x150] sm:$0xff] %vm2802, %v2795
  %2846 = vst.msk [vmem:[%s4 + $0x158] sm:$0xff] %vm2802, %v2796
  %2847 = vst.msk [vmem:[%s4 + $0x160] sm:$0xff] %vm2802, %v2797
  %2848 = vst.msk [vmem:[%s4 + $0x168] sm:$0xff] %vm2802, %v2798
  %2849 = vst.msk [vmem:[%s4 + $0x170] sm:$0xff] %vm2802, %v2799
  %2850 = vst.msk [vmem:[%s4 + $0x178] sm:$0xff] %vm2802, %v2800
  %2851 = vst.msk [vmem:[%s4 + $0x180] sm:$0xff] %vm2802, %v2801
  // Predicated region
  $region18: #{cnn_fashion_mnist_forward.3} parent=0 // pred_check
    _
  $region19: #{cnn_fashion_mnist_forward.3} parent=0 // pred_check_branch
    %2853 = sbr.rel (0) target = $region21
  $region20: #{cnn_fashion_mnist_forward.3} parent=0 // pred_region
    _
  $region21: #{cnn_fashion_mnist_forward.3} parent=0 // pred_fallthru
    _
  // Predicated region
  $region22: #{cnn_fashion_mnist_forward.3} parent=0 // pred_check
    _
  $region23: #{cnn_fashion_mnist_forward.3} parent=0 // pred_check_branch
    %2855 = sbr.rel (0) target = $region25
  $region24: #{cnn_fashion_mnist_forward.3} parent=0 // pred_region
    _
  $region25: #{cnn_fashion_mnist_forward.3} parent=0 // pred_fallthru
    _

// kernel: cnn_fashion_mnist_forward.4
$region0: #{cnn_fashion_mnist_forward.4}
  #allocation0 [shape = 'u32[]', space=smem, size = 0x4, offset = 0x4, fixed_abs, tag = 'smem constant byte address 0x4 - core index']
  #allocation1 [shape = 'u32[144,128]{1,0:T(1,128)}', space=vmem, size = 0x12000, scoped, tag = 'internal scratch']
  %s0 = inlined_call_operand.vmem [shape: f32[4,98,400], index: 0, kind: input, shape index: {}]
  %s1 = inlined_call_operand.vmem [shape: f32[400,32], index: 1, kind: input, shape index: {}]
  %s2 = inlined_call_operand.vmem [shape: f32[1,32], index: 2, kind: input, shape index: {}]
  %s3 = inlined_call_operand.vmem [shape: f32[1,32], index: 3, kind: input, shape index: {}]
  %s4 = inlined_call_operand.vmem [shape: f32[98,32], index: 4, kind: output, shape index: {}]
  %s5 = sld [smem:[#allocation0]]
  $region26: #{cnn_fashion_mnist_forward.4} parent=0
    _
  %s7 = ssub.s32 1, %s5
  %s8 = scalar_select 0, %s7, %s5
  // Predicated region
  $region2: #{cnn_fashion_mnist_forward.4} parent=0 // pred_check
    _
  $region3: #{cnn_fashion_mnist_forward.4} parent=0 // pred_check_branch
    %10 = sbr.rel (0) target = $region5
  $region4: #{cnn_fashion_mnist_forward.4} parent=0 // pred_region
    _
  $region5: #{cnn_fashion_mnist_forward.4} parent=0 // pred_fallthru
    _
  // Predicated region
  $region6: #{cnn_fashion_mnist_forward.4} parent=0 // pred_check
    _
  $region7: #{cnn_fashion_mnist_forward.4} parent=0 // pred_check_branch
    %12 = sbr.rel (0) target = $region9
  $region8: #{cnn_fashion_mnist_forward.4} parent=0 // pred_region
    _
  $region9: #{cnn_fashion_mnist_forward.4} parent=0 // pred_fallthru
    _
  // Predicated region
  $region10: #{cnn_fashion_mnist_forward.4} parent=0 // pred_check
    _
  $region11: #{cnn_fashion_mnist_forward.4} parent=0 // pred_check_branch
    %14 = sbr.rel (0) target = $region13
  $region12: #{cnn_fashion_mnist_forward.4} parent=0 // pred_region
    _
  $region13: #{cnn_fashion_mnist_forward.4} parent=0 // pred_fallthru
    _
  // Predicated region
  $region14: #{cnn_fashion_mnist_forward.4} parent=0 // pred_check
    _
  $region15: #{cnn_fashion_mnist_forward.4} parent=0 // pred_check_branch
    %16 = sbr.rel (0) target = $region17
  $region16: #{cnn_fashion_mnist_forward.4} parent=0 // pred_region
    _
  $region17: #{cnn_fashion_mnist_forward.4} parent=0 // pred_fallthru
    _
  %v17 = vld [vmem:[%s1] sm:$0xff]
  %v18 = vld [vmem:[%s1 + $0x8] sm:$0xff]
  %v19 = vld [vmem:[%s1 + $0x10] sm:$0xff]
  %v20 = vld [vmem:[%s1 + $0x18] sm:$0xff]
  %v21 = vld [vmem:[%s1 + $0x20] sm:$0xff]
  %v22 = vld [vmem:[%s1 + $0x28] sm:$0xff]
  %v23 = vld [vmem:[%s1 + $0x30] sm:$0xff]
  %v24 = vld [vmem:[%s1 + $0x38] sm:$0xff]
  %v25 = vld [vmem:[%s1 + $0x40] sm:$0xff]
  %v26 = vld [vmem:[%s1 + $0x48] sm:$0xff]
  %v27 = vld [vmem:[%s1 + $0x50] sm:$0xff]
  %v28 = vld [vmem:[%s1 + $0x58] sm:$0xff]
  %v29 = vld [vmem:[%s1 + $0x60] sm:$0xff]
  %v30 = vld [vmem:[%s1 + $0x68] sm:$0xff]
  %v31 = vld [vmem:[%s1 + $0x70] sm:$0xff]
  %v32 = vld [vmem:[%s1 + $0x78] sm:$0xff]
  %v33 = vld [vmem:[%s1 + $0x80] sm:$0xff]
  %v34 = vld [vmem:[%s1 + $0x88] sm:$0xff]
  %v35 = vld [vmem:[%s1 + $0x90] sm:$0xff]
  %v36 = vld [vmem:[%s1 + $0x98] sm:$0xff]
  %v37 = vld [vmem:[%s1 + $0xa0] sm:$0xff]
  %v38 = vld [vmem:[%s1 + $0xa8] sm:$0xff]
  %v39 = vld [vmem:[%s1 + $0xb0] sm:$0xff]
  %v40 = vld [vmem:[%s1 + $0xb8] sm:$0xff]
  %v41 = vld [vmem:[%s1 + $0xc0] sm:$0xff]
  %v42 = vld [vmem:[%s1 + $0xc8] sm:$0xff]
  %v43 = vld [vmem:[%s1 + $0xd0] sm:$0xff]
  %v44 = vld [vmem:[%s1 + $0xd8] sm:$0xff]
  %v45 = vld [vmem:[%s1 + $0xe0] sm:$0xff]
  %v46 = vld [vmem:[%s1 + $0xe8] sm:$0xff]
  %v47 = vld [vmem:[%s1 + $0xf0] sm:$0xff]
  %v48 = vld [vmem:[%s1 + $0xf8] sm:$0xff]
  %v49 = vld [vmem:[%s1 + $0x100] sm:$0xff]
  %v50 = vld [vmem:[%s1 + $0x108] sm:$0xff]
  %v51 = vld [vmem:[%s1 + $0x110] sm:$0xff]
  %v52 = vld [vmem:[%s1 + $0x118] sm:$0xff]
  %v53 = vld [vmem:[%s1 + $0x120] sm:$0xff]
  %v54 = vld [vmem:[%s1 + $0x128] sm:$0xff]
  %v55 = vld [vmem:[%s1 + $0x130] sm:$0xff]
  %v56 = vld [vmem:[%s1 + $0x138] sm:$0xff]
  %v57 = vld [vmem:[%s1 + $0x140] sm:$0xff]
  %v58 = vld [vmem:[%s1 + $0x148] sm:$0xff]
  %v59 = vld [vmem:[%s1 + $0x150] sm:$0xff]
  %v60 = vld [vmem:[%s1 + $0x158] sm:$0xff]
  %v61 = vld [vmem:[%s1 + $0x160] sm:$0xff]
  %v62 = vld [vmem:[%s1 + $0x168] sm:$0xff]
  %v63 = vld [vmem:[%s1 + $0x170] sm:$0xff]
  %v64 = vld [vmem:[%s1 + $0x178] sm:$0xff]
  %v65 = vld [vmem:[%s1 + $0x180] sm:$0xff]
  %v66 = vld [vmem:[%s1 + $0x188] sm:$0xff]
  %v67 = vld [vmem:[%s2] sm:$0x1]
  %v68 = vld [vmem:[%s3] sm:$0x1]
  %v69 = vld [vmem:[%s0] sm:$0xff]
  %v70 = vld [vmem:[%s0 + $0x8] sm:$0xff]
  %v71 = vld [vmem:[%s0 + $0x10] sm:$0xff]
  %v72 = vld [vmem:[%s0 + $0x18] sm:$0xff]
  %v73 = vld [vmem:[%s0 + $0x20] sm:$0xff]
  %v74 = vld [vmem:[%s0 + $0x28] sm:$0xff]
  %v75 = vld [vmem:[%s0 + $0x30] sm:$0xff]
  %v76 = vld [vmem:[%s0 + $0x38] sm:$0xff]
  %v77 = vld [vmem:[%s0 + $0x40] sm:$0xff]
  %v78 = vld [vmem:[%s0 + $0x48] sm:$0xff]
  %v79 = vld [vmem:[%s0 + $0x50] sm:$0xff]
  %v80 = vld [vmem:[%s0 + $0x58] sm:$0xff]
  %v81 = vld [vmem:[%s0 + $0x60] sm:$0xff]
  %v82 = vld [vmem:[%s0 + $0x68] sm:$0xff]
  %v83 = vld [vmem:[%s0 + $0x70] sm:$0xff]
  %v84 = vld [vmem:[%s0 + $0x78] sm:$0xff]
  %v85 = vld [vmem:[%s0 + $0x80] sm:$0xff]
  %v86 = vld [vmem:[%s0 + $0x88] sm:$0xff]
  %v87 = vld [vmem:[%s0 + $0x90] sm:$0xff]
  %v88 = vld [vmem:[%s0 + $0x98] sm:$0xff]
  %v89 = vld [vmem:[%s0 + $0xa0] sm:$0xff]
  %v90 = vld [vmem:[%s0 + $0xa8] sm:$0xff]
  %v91 = vld [vmem:[%s0 + $0xb0] sm:$0xff]
  %v92 = vld [vmem:[%s0 + $0xb8] sm:$0xff]
  %v93 = vld [vmem:[%s0 + $0xc0] sm:$0xff]
  %v94 = vld [vmem:[%s0 + $0xc8] sm:$0xff]
  %v95 = vld [vmem:[%s0 + $0xd0] sm:$0xff]
  %v96 = vld [vmem:[%s0 + $0xd8] sm:$0xff]
  %v97 = vld [vmem:[%s0 + $0xe0] sm:$0xff]
  %v98 = vld [vmem:[%s0 + $0xe8] sm:$0xff]
  %v99 = vld [vmem:[%s0 + $0xf0] sm:$0xff]
  %v100 = vld [vmem:[%s0 + $0xf8] sm:$0xff]
  %v101 = vld [vmem:[%s0 + $0x100] sm:$0xff]
  %v102 = vld [vmem:[%s0 + $0x108] sm:$0xff]
  %v103 = vld [vmem:[%s0 + $0x110] sm:$0xff]
  %v104 = vld [vmem:[%s0 + $0x118] sm:$0xff]
  %v105 = vld [vmem:[%s0 + $0x120] sm:$0xff]
  %v106 = vld [vmem:[%s0 + $0x128] sm:$0xff]
  %v107 = vld [vmem:[%s0 + $0x130] sm:$0xff]
  %v108 = vld [vmem:[%s0 + $0x138] sm:$0xff]
  %v109 = vld [vmem:[%s0 + $0x140] sm:$0xff]
  %v110 = vld [vmem:[%s0 + $0x148] sm:$0xff]
  %v111 = vld [vmem:[%s0 + $0x150] sm:$0xff]
  %v112 = vld [vmem:[%s0 + $0x158] sm:$0xff]
  %v113 = vld [vmem:[%s0 + $0x160] sm:$0xff]
  %v114 = vld [vmem:[%s0 + $0x168] sm:$0xff]
  %v115 = vld [vmem:[%s0 + $0x170] sm:$0xff]
  %v116 = vld [vmem:[%s0 + $0x178] sm:$0xff]
  %v117 = vld [vmem:[%s0 + $0x180] sm:$0x3]
  %v118 = vld [vmem:[%s0 + $0x188] sm:$0x3]
  %v119 = vld [vmem:[%s0 + $0x190] sm:$0x3]
  %v120 = vld [vmem:[%s0 + $0x198] sm:$0x3]
  %vm121 = vcmask 130048
  %v123 = vsel %vm121, %v72, 0
  %v126 = vsel %vm121, %v76, 0
  %v129 = vsel %vm121, %v80, 0
  %v132 = vsel %vm121, %v84, 0
  %v135 = vsel %vm121, %v88, 0
  %v138 = vsel %vm121, %v92, 0
  %v141 = vsel %vm121, %v96, 0
  %v144 = vsel %vm121, %v100, 0
  %v147 = vsel %vm121, %v104, 0
  %v150 = vsel %vm121, %v108, 0
  %v153 = vsel %vm121, %v112, 0
  %v156 = vsel %vm121, %v116, 0
  %v159 = vsel %vm121, %v120, 0
  %161 = vmatprep.subr.mxu0 0.0
  %162 = vmatpush1.msra.mxu0 %v17
  %163 = vmatprep.subr.mxu0 0.0
  %164 = vmatpush1.msra.mxu0 %v18
  %165 = vmatprep.subr.mxu0 0.0
  %166 = vmatpush1.msra.mxu0 %v19
  %167 = vmatprep.subr.mxu0 0.0
  %168 = vmatpush1.msra.mxu0 %v20
  %169 = vmatprep.subr.mxu0 0.0
  %170 = vmatpush1.msra.mxu0 %v21
  %171 = vmatprep.subr.mxu0 0.0
  %172 = vmatpush1.msra.mxu0 %v22
  %173 = vmatprep.subr.mxu0 0.0
  %174 = vmatpush1.msra.mxu0 %v23
  %175 = vmatprep.subr.mxu0 0.0
  %176 = vmatpush1.msra.mxu0 %v24
  %177 = vmatprep.subr.mxu0 0.0
  %178 = vmatpush1.msra.mxu0 %v25
  %179 = vmatprep.subr.mxu0 0.0
  %180 = vmatpush1.msra.mxu0 %v26
  %181 = vmatprep.subr.mxu0 0.0
  %182 = vmatpush1.msra.mxu0 %v27
  %183 = vmatprep.subr.mxu0 0.0
  %184 = vmatpush1.msra.mxu0 %v28
  %185 = vmatprep.subr.mxu0 0.0
  %186 = vmatpush1.msra.mxu0 %v29
  %187 = vmatprep.subr.mxu0 0.0
  %188 = vmatpush1.msra.mxu0 %v30
  %189 = vmatprep.subr.mxu0 0.0
  %190 = vmatpush1.msra.mxu0 %v31
  %191 = vmatprep.subr.mxu0 0.0
  %192 = vmatpush1.msra.mxu0 %v32
  %193 = vmatprep.subr.mxu0 0.0
  %194 = vmatpush1.msra.mxu0 %v33
  %195 = vmatprep.subr.mxu0 0.0
  %196 = vmatpush1.msra.mxu0 %v34
  %197 = vmatprep.subr.mxu0 0.0
  %198 = vmatpush1.msra.mxu0 %v35
  %199 = vmatprep.subr.mxu0 0.0
  %200 = vmatpush1.msra.mxu0 %v36
  %201 = vmatprep.subr.mxu0 0.0
  %202 = vmatpush1.msra.mxu0 %v37
  %203 = vmatprep.subr.mxu0 0.0
  %204 = vmatpush1.msra.mxu0 %v38
  %205 = vmatprep.subr.mxu0 0.0
  %206 = vmatpush1.msra.mxu0 %v39
  %207 = vmatprep.subr.mxu0 0.0
  %208 = vmatpush1.msra.mxu0 %v40
  %209 = vmatprep.subr.mxu0 0.0
  %210 = vmatpush1.msra.mxu0 %v41
  %211 = vmatprep.subr.mxu0 0.0
  %212 = vmatpush1.msra.mxu0 %v42
  %213 = vmatprep.subr.mxu0 0.0
  %214 = vmatpush1.msra.mxu0 %v43
  %215 = vmatprep.subr.mxu0 0.0
  %216 = vmatpush1.msra.mxu0 %v44
  %217 = vmatprep.subr.mxu0 0.0
  %218 = vmatpush1.msra.mxu0 %v45
  %219 = vmatprep.subr.mxu0 0.0
  %220 = vmatpush1.msra.mxu0 %v46
  %221 = vmatprep.subr.mxu0 0.0
  %222 = vmatpush1.msra.mxu0 %v47
  %223 = vmatprep.subr.mxu0 0.0
  %224 = vmatpush1.msra.mxu0 %v48
  %225 = vmatprep.mubr.f32.mxu0 %v70
  %226 = vmatmul.mubr.f32.gmra.mrb[0].mxu0 %v69
  %v227 = vpop.f32.mrb[0].mxu0
  %v228 = vadd.f32 0.0, %v227
  %v229 = vpop.f32.mrb[0].mxu0
  %230 = vmatprep.mubr.f32.mxu0 %v74
  %231 = vmatmul.mubr.f32.gmra.mrb[0].mxu0 %v73
  %v232 = vpop.f32.mrb[0].mxu0
  %v233 = vadd.f32 0.0, %v232
  %v234 = vpop.f32.mrb[0].mxu0
  %235 = vmatprep.mubr.f32.mxu0 %v78
  %236 = vmatmul.mubr.f32.gmra.mrb[0].mxu0 %v77
  %v237 = vpop.f32.mrb[0].mxu0
  %v238 = vadd.f32 0.0, %v237
  %v239 = vpop.f32.mrb[0].mxu0
  %240 = vmatprep.mubr.f32.mxu0 %v82
  %241 = vmatmul.mubr.f32.gmra.mrb[0].mxu0 %v81
  %v242 = vpop.f32.mrb[0].mxu0
  %v243 = vadd.f32 0.0, %v242
  %v244 = vpop.f32.mrb[0].mxu0
  %245 = vmatprep.mubr.f32.mxu0 %v86
  %246 = vmatmul.mubr.f32.gmra.mrb[0].mxu0 %v85
  %v247 = vpop.f32.mrb[0].mxu0
  %v248 = vadd.f32 0.0, %v247
  %v249 = vpop.f32.mrb[0].mxu0
  %250 = vmatprep.mubr.f32.mxu0 %v90
  %251 = vmatmul.mubr.f32.gmra.mrb[0].mxu0 %v89
  %v252 = vpop.f32.mrb[0].mxu0
  %v253 = vadd.f32 0.0, %v252
  %v254 = vpop.f32.mrb[0].mxu0
  %255 = vmatprep.mubr.f32.mxu0 %v94
  %256 = vmatmul.mubr.f32.gmra.mrb[0].mxu0 %v93
  %v257 = vpop.f32.mrb[0].mxu0
  %v258 = vadd.f32 0.0, %v257
  %v259 = vpop.f32.mrb[0].mxu0
  %260 = vmatprep.mubr.f32.mxu0 %v98
  %261 = vmatmul.mubr.f32.gmra.mrb[0].mxu0 %v97
  %v262 = vpop.f32.mrb[0].mxu0
  %v263 = vadd.f32 0.0, %v262
  %v264 = vpop.f32.mrb[0].mxu0
  %265 = vmatprep.mubr.f32.mxu0 %v102
  %266 = vmatmul.mubr.f32.gmra.mrb[0].mxu0 %v101
  %v267 = vpop.f32.mrb[0].mxu0
  %v268 = vadd.f32 0.0, %v267
  %v269 = vpop.f32.mrb[0].mxu0
  %270 = vmatprep.mubr.f32.mxu0 %v106
  %271 = vmatmul.mubr.f32.gmra.mrb[0].mxu0 %v105
  %v272 = vpop.f32.mrb[0].mxu0
  %v273 = vadd.f32 0.0, %v272
  %v274 = vpop.f32.mrb[0].mxu0
  %275 = vmatprep.mubr.f32.mxu0 %v110
  %276 = vmatmul.mubr.f32.gmra.mrb[0].mxu0 %v109
  %v277 = vpop.f32.mrb[0].mxu0
  %v278 = vadd.f32 0.0, %v277
  %v279 = vpop.f32.mrb[0].mxu0
  %280 = vmatprep.mubr.f32.mxu0 %v114
  %281 = vmatmul.mubr.f32.gmra.mrb[0].mxu0 %v113
  %v282 = vpop.f32.mrb[0].mxu0
  %v283 = vadd.f32 0.0, %v282
  %v284 = vpop.f32.mrb[0].mxu0
  %285 = vmatprep.mubr.f32.mxu0 %v118
  %286 = vmatmul.mubr.f32.gmra.mrb[0].mxu0 %v117
  %v287 = vpop.f32.mrb[0].mxu0
  %v288 = vadd.f32 0.0, %v287
  %v289 = vpop.f32.mrb[0].mxu0
  %290 = vdwg.mxu0
  %291 = vmatprep.subr.mxu0 0.0
  %292 = vmatpush1.msra.mxu0 %v49
  %293 = vmatprep.subr.mxu0 0.0
  %294 = vmatpush1.msra.mxu0 %v50
  %295 = vmatprep.subr.mxu0 0.0
  %296 = vmatpush1.msra.mxu0 %v51
  %297 = vmatprep.subr.mxu0 0.0
  %298 = vmatpush1.msra.mxu0 %v52
  %299 = vmatprep.subr.mxu0 0.0
  %300 = vmatpush1.msra.mxu0 %v53
  %301 = vmatprep.subr.mxu0 0.0
  %302 = vmatpush1.msra.mxu0 %v54
  %303 = vmatprep.subr.mxu0 0.0
  %304 = vmatpush1.msra.mxu0 %v55
  %305 = vmatprep.subr.mxu0 0.0
  %306 = vmatpush1.msra.mxu0 %v56
  %307 = vmatprep.subr.mxu0 0.0
  %308 = vmatpush1.msra.mxu0 %v57
  %309 = vmatprep.subr.mxu0 0.0
  %310 = vmatpush1.msra.mxu0 %v58
  %311 = vmatprep.subr.mxu0 0.0
  %312 = vmatpush1.msra.mxu0 %v59
  %313 = vmatprep.subr.mxu0 0.0
  %314 = vmatpush1.msra.mxu0 %v60
  %315 = vmatprep.subr.mxu0 0.0
  %316 = vmatpush1.msra.mxu0 %v61
  %317 = vmatprep.subr.mxu0 0.0
  %318 = vmatpush1.msra.mxu0 %v62
  %319 = vmatprep.subr.mxu0 0.0
  %320 = vmatpush1.msra.mxu0 %v63
  %321 = vmatprep.subr.mxu0 0.0
  %322 = vmatpush1.msra.mxu0 %v64
  %323 = vmatprep.subr.mxu0 0.0
  %324 = vmatpush1.msra.mxu0 %v65
  %325 = vmatprep.subr.mxu0 0.0
  %326 = vmatpush1.msra.mxu0 %v66
  %327 = vmatprep.subr.mxu0 0.0
  %328 = vmatpush1.msra.mxu0 0.0
  %329 = vmatprep.subr.mxu0 0.0
  %330 = vmatpush1.msra.mxu0 0.0
  %331 = vmatprep.subr.mxu0 0.0
  %332 = vmatpush1.msra.mxu0 0.0
  %333 = vmatprep.subr.mxu0 0.0
  %334 = vmatpush1.msra.mxu0 0.0
  %335 = vmatprep.subr.mxu0 0.0
  %336 = vmatpush1.msra.mxu0 0.0
  %337 = vmatprep.subr.mxu0 0.0
  %338 = vmatpush1.msra.mxu0 0.0
  %339 = vmatprep.subr.mxu0 0.0
  %340 = vmatpush1.msra.mxu0 0.0
  %341 = vmatprep.subr.mxu0 0.0
  %342 = vmatpush1.msra.mxu0 0.0
  %343 = vmatprep.subr.mxu0 0.0
  %344 = vmatpush1.msra.mxu0 0.0
  %345 = vmatprep.subr.mxu0 0.0
  %346 = vmatpush1.msra.mxu0 0.0
  %347 = vmatprep.subr.mxu0 0.0
  %348 = vmatpush1.msra.mxu0 0.0
  %349 = vmatprep.subr.mxu0 0.0
  %350 = vmatpush1.msra.mxu0 0.0
  %351 = vmatprep.subr.mxu0 0.0
  %352 = vmatpush1.msra.mxu0 0.0
  %353 = vmatprep.subr.mxu0 0.0
  %354 = vmatpush1.msra.mxu0 0.0
  %355 = vmatprep.mubr.f32.mxu0 %v123
  %356 = vmatmul.mubr.f32.gmra.mrb[0].mxu0 %v71
  %v357 = vpop.f32.mrb[0].mxu0
  %v358 = vadd.f32 %v228, %v357
  %v359 = vpop.f32.mrb[0].mxu0
  %360 = vmatprep.mubr.f32.mxu0 %v126
  %361 = vmatmul.mubr.f32.gmra.mrb[0].mxu0 %v75
  %v362 = vpop.f32.mrb[0].mxu0
  %v363 = vadd.f32 %v233, %v362
  %v364 = vpop.f32.mrb[0].mxu0
  %365 = vmatprep.mubr.f32.mxu0 %v129
  %366 = vmatmul.mubr.f32.gmra.mrb[0].mxu0 %v79
  %v367 = vpop.f32.mrb[0].mxu0
  %v368 = vadd.f32 %v238, %v367
  %v369 = vpop.f32.mrb[0].mxu0
  %370 = vmatprep.mubr.f32.mxu0 %v132
  %371 = vmatmul.mubr.f32.gmra.mrb[0].mxu0 %v83
  %v372 = vpop.f32.mrb[0].mxu0
  %v373 = vadd.f32 %v243, %v372
  %v374 = vpop.f32.mrb[0].mxu0
  %375 = vmatprep.mubr.f32.mxu0 %v135
  %376 = vmatmul.mubr.f32.gmra.mrb[0].mxu0 %v87
  %v377 = vpop.f32.mrb[0].mxu0
  %v378 = vadd.f32 %v248, %v377
  %v379 = vpop.f32.mrb[0].mxu0
  %380 = vmatprep.mubr.f32.mxu0 %v138
  %381 = vmatmul.mubr.f32.gmra.mrb[0].mxu0 %v91
  %v382 = vpop.f32.mrb[0].mxu0
  %v383 = vadd.f32 %v253, %v382
  %v384 = vpop.f32.mrb[0].mxu0
  %385 = vmatprep.mubr.f32.mxu0 %v141
  %386 = vmatmul.mubr.f32.gmra.mrb[0].mxu0 %v95
  %v387 = vpop.f32.mrb[0].mxu0
  %v388 = vadd.f32 %v258, %v387
  %v389 = vpop.f32.mrb[0].mxu0
  %390 = vmatprep.mubr.f32.mxu0 %v144
  %391 = vmatmul.mubr.f32.gmra.mrb[0].mxu0 %v99
  %v392 = vpop.f32.mrb[0].mxu0
  %v393 = vadd.f32 %v263, %v392
  %v394 = vpop.f32.mrb[0].mxu0
  %395 = vmatprep.mubr.f32.mxu0 %v147
  %396 = vmatmul.mubr.f32.gmra.mrb[0].mxu0 %v103
  %v397 = vpop.f32.mrb[0].mxu0
  %v398 = vadd.f32 %v268, %v397
  %v399 = vpop.f32.mrb[0].mxu0
  %400 = vmatprep.mubr.f32.mxu0 %v150
  %401 = vmatmul.mubr.f32.gmra.mrb[0].mxu0 %v107
  %v402 = vpop.f32.mrb[0].mxu0
  %v403 = vadd.f32 %v273, %v402
  %v404 = vpop.f32.mrb[0].mxu0
  %405 = vmatprep.mubr.f32.mxu0 %v153
  %406 = vmatmul.mubr.f32.gmra.mrb[0].mxu0 %v111
  %v407 = vpop.f32.mrb[0].mxu0
  %v408 = vadd.f32 %v278, %v407
  %v409 = vpop.f32.mrb[0].mxu0
  %410 = vmatprep.mubr.f32.mxu0 %v156
  %411 = vmatmul.mubr.f32.gmra.mrb[0].mxu0 %v115
  %v412 = vpop.f32.mrb[0].mxu0
  %v413 = vadd.f32 %v283, %v412
  %v414 = vpop.f32.mrb[0].mxu0
  %415 = vmatprep.mubr.f32.mxu0 %v159
  %416 = vmatmul.mubr.f32.gmra.mrb[0].mxu0 %v119
  %v417 = vpop.f32.mrb[0].mxu0
  %v418 = vadd.f32 %v288, %v417
  %v419 = vpop.f32.mrb[0].mxu0
  %420 = vdwg.mxu0
  %v422 = vlaneseq
  %v423 = vshrl.u32 %v422, 7
  %v424 = vsub.s32 0, %v423
  %v425 = vrot.slane %v67, %v424
  %v427 = vmul.f32 %v358, %v425
  %v428 = vmul.f32 %v363, %v425
  %v429 = vmul.f32 %v368, %v425
  %v430 = vmul.f32 %v373, %v425
  %v431 = vmul.f32 %v378, %v425
  %v432 = vmul.f32 %v383, %v425
  %v433 = vmul.f32 %v388, %v425
  %v434 = vmul.f32 %v393, %v425
  %v435 = vmul.f32 %v398, %v425
  %v436 = vmul.f32 %v403, %v425
  %v437 = vmul.f32 %v408, %v425
  %v438 = vmul.f32 %v413, %v425
  %v439 = vmul.f32 %v418, %v425
  %v441 = vlaneseq
  %v442 = vshrl.u32 %v441, 7
  %v443 = vsub.s32 0, %v442
  %v444 = vrot.slane %v68, %v443
  %v446 = vadd.f32 %v427, %v444
  %v447 = vadd.f32 %v428, %v444
  %v448 = vadd.f32 %v429, %v444
  %v449 = vadd.f32 %v430, %v444
  %v450 = vadd.f32 %v431, %v444
  %v451 = vadd.f32 %v432, %v444
  %v452 = vadd.f32 %v433, %v444
  %v453 = vadd.f32 %v434, %v444
  %v454 = vadd.f32 %v435, %v444
  %v455 = vadd.f32 %v436, %v444
  %v456 = vadd.f32 %v437, %v444
  %v457 = vadd.f32 %v438, %v444
  %v458 = vadd.f32 %v439, %v444
  %v459 = vmax.f32 %v446, 0.0
  %v460 = vmax.f32 %v447, 0.0
  %v461 = vmax.f32 %v448, 0.0
  %v462 = vmax.f32 %v449, 0.0
  %v463 = vmax.f32 %v450, 0.0
  %v464 = vmax.f32 %v451, 0.0
  %v465 = vmax.f32 %v452, 0.0
  %v466 = vmax.f32 %v453, 0.0
  %v467 = vmax.f32 %v454, 0.0
  %v468 = vmax.f32 %v455, 0.0
  %v469 = vmax.f32 %v456, 0.0
  %v470 = vmax.f32 %v457, 0.0
  %v471 = vmax.f32 %v458, 0.0
  %s472 = scalar_lea.vmem %s0, 416
  %v473 = vld [vmem:[%s472] sm:$0xff]
  %v474 = vld [vmem:[%s472 + $0x8] sm:$0xff]
  %v475 = vld [vmem:[%s472 + $0x10] sm:$0xff]
  %v476 = vld [vmem:[%s472 + $0x18] sm:$0xff]
  %v477 = vld [vmem:[%s472 + $0x20] sm:$0xff]
  %v478 = vld [vmem:[%s472 + $0x28] sm:$0xff]
  %v479 = vld [vmem:[%s472 + $0x30] sm:$0xff]
  %v480 = vld [vmem:[%s472 + $0x38] sm:$0xff]
  %v481 = vld [vmem:[%s472 + $0x40] sm:$0xff]
  %v482 = vld [vmem:[%s472 + $0x48] sm:$0xff]
  %v483 = vld [vmem:[%s472 + $0x50] sm:$0xff]
  %v484 = vld [vmem:[%s472 + $0x58] sm:$0xff]
  %v485 = vld [vmem:[%s472 + $0x60] sm:$0xff]
  %v486 = vld [vmem:[%s472 + $0x68] sm:$0xff]
  %v487 = vld [vmem:[%s472 + $0x70] sm:$0xff]
  %v488 = vld [vmem:[%s472 + $0x78] sm:$0xff]
  %v489 = vld [vmem:[%s472 + $0x80] sm:$0xff]
  %v490 = vld [vmem:[%s472 + $0x88] sm:$0xff]
  %v491 = vld [vmem:[%s472 + $0x90] sm:$0xff]
  %v492 = vld [vmem:[%s472 + $0x98] sm:$0xff]
  %v493 = vld [vmem:[%s472 + $0xa0] sm:$0xff]
  %v494 = vld [vmem:[%s472 + $0xa8] sm:$0xff]
  %v495 = vld [vmem:[%s472 + $0xb0] sm:$0xff]
  %v496 = vld [vmem:[%s472 + $0xb8] sm:$0xff]
  %v497 = vld [vmem:[%s472 + $0xc0] sm:$0xff]
  %v498 = vld [vmem:[%s472 + $0xc8] sm:$0xff]
  %v499 = vld [vmem:[%s472 + $0xd0] sm:$0xff]
  %v500 = vld [vmem:[%s472 + $0xd8] sm:$0xff]
  %v501 = vld [vmem:[%s472 + $0xe0] sm:$0xff]
  %v502 = vld [vmem:[%s472 + $0xe8] sm:$0xff]
  %v503 = vld [vmem:[%s472 + $0xf0] sm:$0xff]
  %v504 = vld [vmem:[%s472 + $0xf8] sm:$0xff]
  %v505 = vld [vmem:[%s472 + $0x100] sm:$0xff]
  %v506 = vld [vmem:[%s472 + $0x108] sm:$0xff]
  %v507 = vld [vmem:[%s472 + $0x110] sm:$0xff]
  %v508 = vld [vmem:[%s472 + $0x118] sm:$0xff]
  %v509 = vld [vmem:[%s472 + $0x120] sm:$0xff]
  %v510 = vld [vmem:[%s472 + $0x128] sm:$0xff]
  %v511 = vld [vmem:[%s472 + $0x130] sm:$0xff]
  %v512 = vld [vmem:[%s472 + $0x138] sm:$0xff]
  %v513 = vld [vmem:[%s472 + $0x140] sm:$0xff]
  %v514 = vld [vmem:[%s472 + $0x148] sm:$0xff]
  %v515 = vld [vmem:[%s472 + $0x150] sm:$0xff]
  %v516 = vld [vmem:[%s472 + $0x158] sm:$0xff]
  %v517 = vld [vmem:[%s472 + $0x160] sm:$0xff]
  %v518 = vld [vmem:[%s472 + $0x168] sm:$0xff]
  %v519 = vld [vmem:[%s472 + $0x170] sm:$0xff]
  %v520 = vld [vmem:[%s472 + $0x178] sm:$0xff]
  %v521 = vld [vmem:[%s472 + $0x180] sm:$0x3]
  %v522 = vld [vmem:[%s472 + $0x188] sm:$0x3]
  %v523 = vld [vmem:[%s472 + $0x190] sm:$0x3]
  %v524 = vld [vmem:[%s472 + $0x198] sm:$0x3]
  %v526 = vsel %vm121, %v476, 0
  %v529 = vsel %vm121, %v480, 0
  %v532 = vsel %vm121, %v484, 0
  %v535 = vsel %vm121, %v488, 0
  %v538 = vsel %vm121, %v492, 0
  %v541 = vsel %vm121, %v496, 0
  %v544 = vsel %vm121, %v500, 0
  %v547 = vsel %vm121, %v504, 0
  %v550 = vsel %vm121, %v508, 0
  %v553 = vsel %vm121, %v512, 0
  %v556 = vsel %vm121, %v516, 0
  %v559 = vsel %vm121, %v520, 0
  %v562 = vsel %vm121, %v524, 0
  %564 = vmatprep.subr.mxu0 0.0
  %565 = vmatpush1.msra.mxu0 %v17
  %566 = vmatprep.subr.mxu0 0.0
  %567 = vmatpush1.msra.mxu0 %v18
  %568 = vmatprep.subr.mxu0 0.0
  %569 = vmatpush1.msra.mxu0 %v19
  %570 = vmatprep.subr.mxu0 0.0
  %571 = vmatpush1.msra.mxu0 %v20
  %572 = vmatprep.subr.mxu0 0.0
  %573 = vmatpush1.msra.mxu0 %v21
  %574 = vmatprep.subr.mxu0 0.0
  %575 = vmatpush1.msra.mxu0 %v22
  %576 = vmatprep.subr.mxu0 0.0
  %577 = vmatpush1.msra.mxu0 %v23
  %578 = vmatprep.subr.mxu0 0.0
  %579 = vmatpush1.msra.mxu0 %v24
  %580 = vmatprep.subr.mxu0 0.0
  %581 = vmatpush1.msra.mxu0 %v25
  %582 = vmatprep.subr.mxu0 0.0
  %583 = vmatpush1.msra.mxu0 %v26
  %584 = vmatprep.subr.mxu0 0.0
  %585 = vmatpush1.msra.mxu0 %v27
  %586 = vmatprep.subr.mxu0 0.0
  %587 = vmatpush1.msra.mxu0 %v28
  %588 = vmatprep.subr.mxu0 0.0
  %589 = vmatpush1.msra.mxu0 %v29
  %590 = vmatprep.subr.mxu0 0.0
  %591 = vmatpush1.msra.mxu0 %v30
  %592 = vmatprep.subr.mxu0 0.0
  %593 = vmatpush1.msra.mxu0 %v31
  %594 = vmatprep.subr.mxu0 0.0
  %595 = vmatpush1.msra.mxu0 %v32
  %596 = vmatprep.subr.mxu0 0.0
  %597 = vmatpush1.msra.mxu0 %v33
  %598 = vmatprep.subr.mxu0 0.0
  %599 = vmatpush1.msra.mxu0 %v34
  %600 = vmatprep.subr.mxu0 0.0
  %601 = vmatpush1.msra.mxu0 %v35
  %602 = vmatprep.subr.mxu0 0.0
  %603 = vmatpush1.msra.mxu0 %v36
  %604 = vmatprep.subr.mxu0 0.0
  %605 = vmatpush1.msra.mxu0 %v37
  %606 = vmatprep.subr.mxu0 0.0
  %607 = vmatpush1.msra.mxu0 %v38
  %608 = vmatprep.subr.mxu0 0.0
  %609 = vmatpush1.msra.mxu0 %v39
  %610 = vmatprep.subr.mxu0 0.0
  %611 = vmatpush1.msra.mxu0 %v40
  %612 = vmatprep.subr.mxu0 0.0
  %613 = vmatpush1.msra.mxu0 %v41
  %614 = vmatprep.subr.mxu0 0.0
  %615 = vmatpush1.msra.mxu0 %v42
  %616 = vmatprep.subr.mxu0 0.0
  %617 = vmatpush1.msra.mxu0 %v43
  %618 = vmatprep.subr.mxu0 0.0
  %619 = vmatpush1.msra.mxu0 %v44
  %620 = vmatprep.subr.mxu0 0.0
  %621 = vmatpush1.msra.mxu0 %v45
  %622 = vmatprep.subr.mxu0 0.0
  %623 = vmatpush1.msra.mxu0 %v46
  %624 = vmatprep.subr.mxu0 0.0
  %625 = vmatpush1.msra.mxu0 %v47
  %626 = vmatprep.subr.mxu0 0.0
  %627 = vmatpush1.msra.mxu0 %v48
  %628 = vmatprep.mubr.f32.mxu0 %v474
  %629 = vmatmul.mubr.f32.gmra.mrb[0].mxu0 %v473
  %v630 = vpop.f32.mrb[0].mxu0
  %v631 = vadd.f32 0.0, %v630
  %v632 = vpop.f32.mrb[0].mxu0
  %633 = vmatprep.mubr.f32.mxu0 %v478
  %634 = vmatmul.mubr.f32.gmra.mrb[0].mxu0 %v477
  %v635 = vpop.f32.mrb[0].mxu0
  %v636 = vadd.f32 0.0, %v635
  %v637 = vpop.f32.mrb[0].mxu0
  %638 = vmatprep.mubr.f32.mxu0 %v482
  %639 = vmatmul.mubr.f32.gmra.mrb[0].mxu0 %v481
  %v640 = vpop.f32.mrb[0].mxu0
  %v641 = vadd.f32 0.0, %v640
  %v642 = vpop.f32.mrb[0].mxu0
  %643 = vmatprep.mubr.f32.mxu0 %v486
  %644 = vmatmul.mubr.f32.gmra.mrb[0].mxu0 %v485
  %v645 = vpop.f32.mrb[0].mxu0
  %v646 = vadd.f32 0.0, %v645
  %v647 = vpop.f32.mrb[0].mxu0
  %648 = vmatprep.mubr.f32.mxu0 %v490
  %649 = vmatmul.mubr.f32.gmra.mrb[0].mxu0 %v489
  %v650 = vpop.f32.mrb[0].mxu0
  %v651 = vadd.f32 0.0, %v650
  %v652 = vpop.f32.mrb[0].mxu0
  %653 = vmatprep.mubr.f32.mxu0 %v494
  %654 = vmatmul.mubr.f32.gmra.mrb[0].mxu0 %v493
  %v655 = vpop.f32.mrb[0].mxu0
  %v656 = vadd.f32 0.0, %v655
  %v657 = vpop.f32.mrb[0].mxu0
  %658 = vmatprep.mubr.f32.mxu0 %v498
  %659 = vmatmul.mubr.f32.gmra.mrb[0].mxu0 %v497
  %v660 = vpop.f32.mrb[0].mxu0
  %v661 = vadd.f32 0.0, %v660
  %v662 = vpop.f32.mrb[0].mxu0
  %663 = vmatprep.mubr.f32.mxu0 %v502
  %664 = vmatmul.mubr.f32.gmra.mrb[0].mxu0 %v501
  %v665 = vpop.f32.mrb[0].mxu0
  %v666 = vadd.f32 0.0, %v665
  %v667 = vpop.f32.mrb[0].mxu0
  %668 = vmatprep.mubr.f32.mxu0 %v506
  %669 = vmatmul.mubr.f32.gmra.mrb[0].mxu0 %v505
  %v670 = vpop.f32.mrb[0].mxu0
  %v671 = vadd.f32 0.0, %v670
  %v672 = vpop.f32.mrb[0].mxu0
  %673 = vmatprep.mubr.f32.mxu0 %v510
  %674 = vmatmul.mubr.f32.gmra.mrb[0].mxu0 %v509
  %v675 = vpop.f32.mrb[0].mxu0
  %v676 = vadd.f32 0.0, %v675
  %v677 = vpop.f32.mrb[0].mxu0
  %678 = vmatprep.mubr.f32.mxu0 %v514
  %679 = vmatmul.mubr.f32.gmra.mrb[0].mxu0 %v513
  %v680 = vpop.f32.mrb[0].mxu0
  %v681 = vadd.f32 0.0, %v680
  %v682 = vpop.f32.mrb[0].mxu0
  %683 = vmatprep.mubr.f32.mxu0 %v518
  %684 = vmatmul.mubr.f32.gmra.mrb[0].mxu0 %v517
  %v685 = vpop.f32.mrb[0].mxu0
  %v686 = vadd.f32 0.0, %v685
  %v687 = vpop.f32.mrb[0].mxu0
  %688 = vmatprep.mubr.f32.mxu0 %v522
  %689 = vmatmul.mubr.f32.gmra.mrb[0].mxu0 %v521
  %v690 = vpop.f32.mrb[0].mxu0
  %v691 = vadd.f32 0.0, %v690
  %v692 = vpop.f32.mrb[0].mxu0
  %693 = vdwg.mxu0
  %694 = vmatprep.subr.mxu0 0.0
  %695 = vmatpush1.msra.mxu0 %v49
  %696 = vmatprep.subr.mxu0 0.0
  %697 = vmatpush1.msra.mxu0 %v50
  %698 = vmatprep.subr.mxu0 0.0
  %699 = vmatpush1.msra.mxu0 %v51
  %700 = vmatprep.subr.mxu0 0.0
  %701 = vmatpush1.msra.mxu0 %v52
  %702 = vmatprep.subr.mxu0 0.0
  %703 = vmatpush1.msra.mxu0 %v53
  %704 = vmatprep.subr.mxu0 0.0
  %705 = vmatpush1.msra.mxu0 %v54
  %706 = vmatprep.subr.mxu0 0.0
  %707 = vmatpush1.msra.mxu0 %v55
  %708 = vmatprep.subr.mxu0 0.0
  %709 = vmatpush1.msra.mxu0 %v56
  %710 = vmatprep.subr.mxu0 0.0
  %711 = vmatpush1.msra.mxu0 %v57
  %712 = vmatprep.subr.mxu0 0.0
  %713 = vmatpush1.msra.mxu0 %v58
  %714 = vmatprep.subr.mxu0 0.0
  %715 = vmatpush1.msra.mxu0 %v59
  %716 = vmatprep.subr.mxu0 0.0
  %717 = vmatpush1.msra.mxu0 %v60
  %718 = vmatprep.subr.mxu0 0.0
  %719 = vmatpush1.msra.mxu0 %v61
  %720 = vmatprep.subr.mxu0 0.0
  %721 = vmatpush1.msra.mxu0 %v62
  %722 = vmatprep.subr.mxu0 0.0
  %723 = vmatpush1.msra.mxu0 %v63
  %724 = vmatprep.subr.mxu0 0.0
  %725 = vmatpush1.msra.mxu0 %v64
  %726 = vmatprep.subr.mxu0 0.0
  %727 = vmatpush1.msra.mxu0 %v65
  %728 = vmatprep.subr.mxu0 0.0
  %729 = vmatpush1.msra.mxu0 %v66
  %730 = vmatprep.subr.mxu0 0.0
  %731 = vmatpush1.msra.mxu0 0.0
  %732 = vmatprep.subr.mxu0 0.0
  %733 = vmatpush1.msra.mxu0 0.0
  %734 = vmatprep.subr.mxu0 0.0
  %735 = vmatpush1.msra.mxu0 0.0
  %736 = vmatprep.subr.mxu0 0.0
  %737 = vmatpush1.msra.mxu0 0.0
  %738 = vmatprep.subr.mxu0 0.0
  %739 = vmatpush1.msra.mxu0 0.0
  %740 = vmatprep.subr.mxu0 0.0
  %741 = vmatpush1.msra.mxu0 0.0
  %742 = vmatprep.subr.mxu0 0.0
  %743 = vmatpush1.msra.mxu0 0.0
  %744 = vmatprep.subr.mxu0 0.0
  %745 = vmatpush1.msra.mxu0 0.0
  %746 = vmatprep.subr.mxu0 0.0
  %747 = vmatpush1.msra.mxu0 0.0
  %748 = vmatprep.subr.mxu0 0.0
  %749 = vmatpush1.msra.mxu0 0.0
  %750 = vmatprep.subr.mxu0 0.0
  %751 = vmatpush1.msra.mxu0 0.0
  %752 = vmatprep.subr.mxu0 0.0
  %753 = vmatpush1.msra.mxu0 0.0
  %754 = vmatprep.subr.mxu0 0.0
  %755 = vmatpush1.msra.mxu0 0.0
  %756 = vmatprep.subr.mxu0 0.0
  %757 = vmatpush1.msra.mxu0 0.0
  %758 = vmatprep.mubr.f32.mxu0 %v526
  %759 = vmatmul.mubr.f32.gmra.mrb[0].mxu0 %v475
  %v760 = vpop.f32.mrb[0].mxu0
  %v761 = vadd.f32 %v631, %v760
  %v762 = vpop.f32.mrb[0].mxu0
  %763 = vmatprep.mubr.f32.mxu0 %v529
  %764 = vmatmul.mubr.f32.gmra.mrb[0].mxu0 %v479
  %v765 = vpop.f32.mrb[0].mxu0
  %v766 = vadd.f32 %v636, %v765
  %v767 = vpop.f32.mrb[0].mxu0
  %768 = vmatprep.mubr.f32.mxu0 %v532
  %769 = vmatmul.mubr.f32.gmra.mrb[0].mxu0 %v483
  %v770 = vpop.f32.mrb[0].mxu0
  %v771 = vadd.f32 %v641, %v770
  %v772 = vpop.f32.mrb[0].mxu0
  %773 = vmatprep.mubr.f32.mxu0 %v535
  %774 = vmatmul.mubr.f32.gmra.mrb[0].mxu0 %v487
  %v775 = vpop.f32.mrb[0].mxu0
  %v776 = vadd.f32 %v646, %v775
  %v777 = vpop.f32.mrb[0].mxu0
  %778 = vmatprep.mubr.f32.mxu0 %v538
  %779 = vmatmul.mubr.f32.gmra.mrb[0].mxu0 %v491
  %v780 = vpop.f32.mrb[0].mxu0
  %v781 = vadd.f32 %v651, %v780
  %v782 = vpop.f32.mrb[0].mxu0
  %783 = vmatprep.mubr.f32.mxu0 %v541
  %784 = vmatmul.mubr.f32.gmra.mrb[0].mxu0 %v495
  %v785 = vpop.f32.mrb[0].mxu0
  %v786 = vadd.f32 %v656, %v785
  %v787 = vpop.f32.mrb[0].mxu0
  %788 = vmatprep.mubr.f32.mxu0 %v544
  %789 = vmatmul.mubr.f32.gmra.mrb[0].mxu0 %v499
  %v790 = vpop.f32.mrb[0].mxu0
  %v791 = vadd.f32 %v661, %v790
  %v792 = vpop.f32.mrb[0].mxu0
  %793 = vmatprep.mubr.f32.mxu0 %v547
  %794 = vmatmul.mubr.f32.gmra.mrb[0].mxu0 %v503
  %v795 = vpop.f32.mrb[0].mxu0
  %v796 = vadd.f32 %v666, %v795
  %v797 = vpop.f32.mrb[0].mxu0
  %798 = vmatprep.mubr.f32.mxu0 %v550
  %799 = vmatmul.mubr.f32.gmra.mrb[0].mxu0 %v507
  %v800 = vpop.f32.mrb[0].mxu0
  %v801 = vadd.f32 %v671, %v800
  %v802 = vpop.f32.mrb[0].mxu0
  %803 = vmatprep.mubr.f32.mxu0 %v553
  %804 = vmatmul.mubr.f32.gmra.mrb[0].mxu0 %v511
  %v805 = vpop.f32.mrb[0].mxu0
  %v806 = vadd.f32 %v676, %v805
  %v807 = vpop.f32.mrb[0].mxu0
  %808 = vmatprep.mubr.f32.mxu0 %v556
  %809 = vmatmul.mubr.f32.gmra.mrb[0].mxu0 %v515
  %v810 = vpop.f32.mrb[0].mxu0
  %v811 = vadd.f32 %v681, %v810
  %v812 = vpop.f32.mrb[0].mxu0
  %813 = vmatprep.mubr.f32.mxu0 %v559
  %814 = vmatmul.mubr.f32.gmra.mrb[0].mxu0 %v519
  %v815 = vpop.f32.mrb[0].mxu0
  %v816 = vadd.f32 %v686, %v815
  %v817 = vpop.f32.mrb[0].mxu0
  %818 = vmatprep.mubr.f32.mxu0 %v562
  %819 = vmatmul.mubr.f32.gmra.mrb[0].mxu0 %v523
  %v820 = vpop.f32.mrb[0].mxu0
  %v821 = vadd.f32 %v691, %v820
  %v822 = vpop.f32.mrb[0].mxu0
  %823 = vdwg.mxu0
  %v824 = vmul.f32 %v761, %v425
  %v825 = vmul.f32 %v766, %v425
  %v826 = vmul.f32 %v771, %v425
  %v827 = vmul.f32 %v776, %v425
  %v828 = vmul.f32 %v781, %v425
  %v829 = vmul.f32 %v786, %v425
  %v830 = vmul.f32 %v791, %v425
  %v831 = vmul.f32 %v796, %v425
  %v832 = vmul.f32 %v801, %v425
  %v833 = vmul.f32 %v806, %v425
  %v834 = vmul.f32 %v811, %v425
  %v835 = vmul.f32 %v816, %v425
  %v836 = vmul.f32 %v821, %v425
  %v837 = vadd.f32 %v824, %v444
  %v838 = vadd.f32 %v825, %v444
  %v839 = vadd.f32 %v826, %v444
  %v840 = vadd.f32 %v827, %v444
  %v841 = vadd.f32 %v828, %v444
  %v842 = vadd.f32 %v829, %v444
  %v843 = vadd.f32 %v830, %v444
  %v844 = vadd.f32 %v831, %v444
  %v845 = vadd.f32 %v832, %v444
  %v846 = vadd.f32 %v833, %v444
  %v847 = vadd.f32 %v834, %v444
  %v848 = vadd.f32 %v835, %v444
  %v849 = vadd.f32 %v836, %v444
  %v850 = vmax.f32 %v837, 0.0
  %v851 = vmax.f32 %v838, 0.0
  %v852 = vmax.f32 %v839, 0.0
  %v853 = vmax.f32 %v840, 0.0
  %v854 = vmax.f32 %v841, 0.0
  %v855 = vmax.f32 %v842, 0.0
  %v856 = vmax.f32 %v843, 0.0
  %v857 = vmax.f32 %v844, 0.0
  %v858 = vmax.f32 %v845, 0.0
  %v859 = vmax.f32 %v846, 0.0
  %v860 = vmax.f32 %v847, 0.0
  %v861 = vmax.f32 %v848, 0.0
  %v862 = vmax.f32 %v849, 0.0
  %v863 = vmax.f32 %v459, %v850
  %v864 = vmax.f32 %v460, %v851
  %v865 = vmax.f32 %v461, %v852
  %v866 = vmax.f32 %v462, %v853
  %v867 = vmax.f32 %v463, %v854
  %v868 = vmax.f32 %v464, %v855
  %v869 = vmax.f32 %v465, %v856
  %v870 = vmax.f32 %v466, %v857
  %v871 = vmax.f32 %v467, %v858
  %v872 = vmax.f32 %v468, %v859
  %v873 = vmax.f32 %v469, %v860
  %v874 = vmax.f32 %v470, %v861
  %v875 = vmax.f32 %v471, %v862
  %s876 = scalar_lea.vmem %s0, 832
  %v877 = vld [vmem:[%s876] sm:$0xff]
  %v878 = vld [vmem:[%s876 + $0x8] sm:$0xff]
  %v879 = vld [vmem:[%s876 + $0x10] sm:$0xff]
  %v880 = vld [vmem:[%s876 + $0x18] sm:$0xff]
  %v881 = vld [vmem:[%s876 + $0x20] sm:$0xff]
  %v882 = vld [vmem:[%s876 + $0x28] sm:$0xff]
  %v883 = vld [vmem:[%s876 + $0x30] sm:$0xff]
  %v884 = vld [vmem:[%s876 + $0x38] sm:$0xff]
  %v885 = vld [vmem:[%s876 + $0x40] sm:$0xff]
  %v886 = vld [vmem:[%s876 + $0x48] sm:$0xff]
  %v887 = vld [vmem:[%s876 + $0x50] sm:$0xff]
  %v888 = vld [vmem:[%s876 + $0x58] sm:$0xff]
  %v889 = vld [vmem:[%s876 + $0x60] sm:$0xff]
  %v890 = vld [vmem:[%s876 + $0x68] sm:$0xff]
  %v891 = vld [vmem:[%s876 + $0x70] sm:$0xff]
  %v892 = vld [vmem:[%s876 + $0x78] sm:$0xff]
  %v893 = vld [vmem:[%s876 + $0x80] sm:$0xff]
  %v894 = vld [vmem:[%s876 + $0x88] sm:$0xff]
  %v895 = vld [vmem:[%s876 + $0x90] sm:$0xff]
  %v896 = vld [vmem:[%s876 + $0x98] sm:$0xff]
  %v897 = vld [vmem:[%s876 + $0xa0] sm:$0xff]
  %v898 = vld [vmem:[%s876 + $0xa8] sm:$0xff]
  %v899 = vld [vmem:[%s876 + $0xb0] sm:$0xff]
  %v900 = vld [vmem:[%s876 + $0xb8] sm:$0xff]
  %v901 = vld [vmem:[%s876 + $0xc0] sm:$0xff]
  %v902 = vld [vmem:[%s876 + $0xc8] sm:$0xff]
  %v903 = vld [vmem:[%s876 + $0xd0] sm:$0xff]
  %v904 = vld [vmem:[%s876 + $0xd8] sm:$0xff]
  %v905 = vld [vmem:[%s876 + $0xe0] sm:$0xff]
  %v906 = vld [vmem:[%s876 + $0xe8] sm:$0xff]
  %v907 = vld [vmem:[%s876 + $0xf0] sm:$0xff]
  %v908 = vld [vmem:[%s876 + $0xf8] sm:$0xff]
  %v909 = vld [vmem:[%s876 + $0x100] sm:$0xff]
  %v910 = vld [vmem:[%s876 + $0x108] sm:$0xff]
  %v911 = vld [vmem:[%s876 + $0x110] sm:$0xff]
  %v912 = vld [vmem:[%s876 + $0x118] sm:$0xff]
  %v913 = vld [vmem:[%s876 + $0x120] sm:$0xff]
  %v914 = vld [vmem:[%s876 + $0x128] sm:$0xff]
  %v915 = vld [vmem:[%s876 + $0x130] sm:$0xff]
  %v916 = vld [vmem:[%s876 + $0x138] sm:$0xff]
  %v917 = vld [vmem:[%s876 + $0x140] sm:$0xff]
  %v918 = vld [vmem:[%s876 + $0x148] sm:$0xff]
  %v919 = vld [vmem:[%s876 + $0x150] sm:$0xff]
  %v920 = vld [vmem:[%s876 + $0x158] sm:$0xff]
  %v921 = vld [vmem:[%s876 + $0x160] sm:$0xff]
  %v922 = vld [vmem:[%s876 + $0x168] sm:$0xff]
  %v923 = vld [vmem:[%s876 + $0x170] sm:$0xff]
  %v924 = vld [vmem:[%s876 + $0x178] sm:$0xff]
  %v925 = vld [vmem:[%s876 + $0x180] sm:$0x3]
  %v926 = vld [vmem:[%s876 + $0x188] sm:$0x3]
  %v927 = vld [vmem:[%s876 + $0x190] sm:$0x3]
  %v928 = vld [vmem:[%s876 + $0x198] sm:$0x3]
  %v930 = vsel %vm121, %v880, 0
  %v933 = vsel %vm121, %v884, 0
  %v936 = vsel %vm121, %v888, 0
  %v939 = vsel %vm121, %v892, 0
  %v942 = vsel %vm121, %v896, 0
  %v945 = vsel %vm121, %v900, 0
  %v948 = vsel %vm121, %v904, 0
  %v951 = vsel %vm121, %v908, 0
  %v954 = vsel %vm121, %v912, 0
  %v957 = vsel %vm121, %v916, 0
  %v960 = vsel %vm121, %v920, 0
  %v963 = vsel %vm121, %v924, 0
  %v966 = vsel %vm121, %v928, 0
  %968 = vmatprep.subr.mxu0 0.0
  %969 = vmatpush1.msra.mxu0 %v17
  %970 = vmatprep.subr.mxu0 0.0
  %971 = vmatpush1.msra.mxu0 %v18
  %972 = vmatprep.subr.mxu0 0.0
  %973 = vmatpush1.msra.mxu0 %v19
  %974 = vmatprep.subr.mxu0 0.0
  %975 = vmatpush1.msra.mxu0 %v20
  %976 = vmatprep.subr.mxu0 0.0
  %977 = vmatpush1.msra.mxu0 %v21
  %978 = vmatprep.subr.mxu0 0.0
  %979 = vmatpush1.msra.mxu0 %v22
  %980 = vmatprep.subr.mxu0 0.0
  %981 = vmatpush1.msra.mxu0 %v23
  %982 = vmatprep.subr.mxu0 0.0
  %983 = vmatpush1.msra.mxu0 %v24
  %984 = vmatprep.subr.mxu0 0.0
  %985 = vmatpush1.msra.mxu0 %v25
  %986 = vmatprep.subr.mxu0 0.0
  %987 = vmatpush1.msra.mxu0 %v26
  %988 = vmatprep.subr.mxu0 0.0
  %989 = vmatpush1.msra.mxu0 %v27
  %990 = vmatprep.subr.mxu0 0.0
  %991 = vmatpush1.msra.mxu0 %v28
  %992 = vmatprep.subr.mxu0 0.0
  %993 = vmatpush1.msra.mxu0 %v29
  %994 = vmatprep.subr.mxu0 0.0
  %995 = vmatpush1.msra.mxu0 %v30
  %996 = vmatprep.subr.mxu0 0.0
  %997 = vmatpush1.msra.mxu0 %v31
  %998 = vmatprep.subr.mxu0 0.0
  %999 = vmatpush1.msra.mxu0 %v32
  %1000 = vmatprep.subr.mxu0 0.0
  %1001 = vmatpush1.msra.mxu0 %v33
  %1002 = vmatprep.subr.mxu0 0.0
  %1003 = vmatpush1.msra.mxu0 %v34
  %1004 = vmatprep.subr.mxu0 0.0
  %1005 = vmatpush1.msra.mxu0 %v35
  %1006 = vmatprep.subr.mxu0 0.0
  %1007 = vmatpush1.msra.mxu0 %v36
  %1008 = vmatprep.subr.mxu0 0.0
  %1009 = vmatpush1.msra.mxu0 %v37
  %1010 = vmatprep.subr.mxu0 0.0
  %1011 = vmatpush1.msra.mxu0 %v38
  %1012 = vmatprep.subr.mxu0 0.0
  %1013 = vmatpush1.msra.mxu0 %v39
  %1014 = vmatprep.subr.mxu0 0.0
  %1015 = vmatpush1.msra.mxu0 %v40
  %1016 = vmatprep.subr.mxu0 0.0
  %1017 = vmatpush1.msra.mxu0 %v41
  %1018 = vmatprep.subr.mxu0 0.0
  %1019 = vmatpush1.msra.mxu0 %v42
  %1020 = vmatprep.subr.mxu0 0.0
  %1021 = vmatpush1.msra.mxu0 %v43
  %1022 = vmatprep.subr.mxu0 0.0
  %1023 = vmatpush1.msra.mxu0 %v44
  %1024 = vmatprep.subr.mxu0 0.0
  %1025 = vmatpush1.msra.mxu0 %v45
  %1026 = vmatprep.subr.mxu0 0.0
  %1027 = vmatpush1.msra.mxu0 %v46
  %1028 = vmatprep.subr.mxu0 0.0
  %1029 = vmatpush1.msra.mxu0 %v47
  %1030 = vmatprep.subr.mxu0 0.0
  %1031 = vmatpush1.msra.mxu0 %v48
  %1032 = vmatprep.mubr.f32.mxu0 %v878
  %1033 = vmatmul.mubr.f32.gmra.mrb[0].mxu0 %v877
  %v1034 = vpop.f32.mrb[0].mxu0
  %v1035 = vadd.f32 0.0, %v1034
  %v1036 = vpop.f32.mrb[0].mxu0
  %1037 = vmatprep.mubr.f32.mxu0 %v882
  %1038 = vmatmul.mubr.f32.gmra.mrb[0].mxu0 %v881
  %v1039 = vpop.f32.mrb[0].mxu0
  %v1040 = vadd.f32 0.0, %v1039
  %v1041 = vpop.f32.mrb[0].mxu0
  %1042 = vmatprep.mubr.f32.mxu0 %v886
  %1043 = vmatmul.mubr.f32.gmra.mrb[0].mxu0 %v885
  %v1044 = vpop.f32.mrb[0].mxu0
  %v1045 = vadd.f32 0.0, %v1044
  %v1046 = vpop.f32.mrb[0].mxu0
  %1047 = vmatprep.mubr.f32.mxu0 %v890
  %1048 = vmatmul.mubr.f32.gmra.mrb[0].mxu0 %v889
  %v1049 = vpop.f32.mrb[0].mxu0
  %v1050 = vadd.f32 0.0, %v1049
  %v1051 = vpop.f32.mrb[0].mxu0
  %1052 = vmatprep.mubr.f32.mxu0 %v894
  %1053 = vmatmul.mubr.f32.gmra.mrb[0].mxu0 %v893
  %v1054 = vpop.f32.mrb[0].mxu0
  %v1055 = vadd.f32 0.0, %v1054
  %v1056 = vpop.f32.mrb[0].mxu0
  %1057 = vmatprep.mubr.f32.mxu0 %v898
  %1058 = vmatmul.mubr.f32.gmra.mrb[0].mxu0 %v897
  %v1059 = vpop.f32.mrb[0].mxu0
  %v1060 = vadd.f32 0.0, %v1059
  %v1061 = vpop.f32.mrb[0].mxu0
  %1062 = vmatprep.mubr.f32.mxu0 %v902
  %1063 = vmatmul.mubr.f32.gmra.mrb[0].mxu0 %v901
  %v1064 = vpop.f32.mrb[0].mxu0
  %v1065 = vadd.f32 0.0, %v1064
  %v1066 = vpop.f32.mrb[0].mxu0
  %1067 = vmatprep.mubr.f32.mxu0 %v906
  %1068 = vmatmul.mubr.f32.gmra.mrb[0].mxu0 %v905
  %v1069 = vpop.f32.mrb[0].mxu0
  %v1070 = vadd.f32 0.0, %v1069
  %v1071 = vpop.f32.mrb[0].mxu0
  %1072 = vmatprep.mubr.f32.mxu0 %v910
  %1073 = vmatmul.mubr.f32.gmra.mrb[0].mxu0 %v909
  %v1074 = vpop.f32.mrb[0].mxu0
  %v1075 = vadd.f32 0.0, %v1074
  %v1076 = vpop.f32.mrb[0].mxu0
  %1077 = vmatprep.mubr.f32.mxu0 %v914
  %1078 = vmatmul.mubr.f32.gmra.mrb[0].mxu0 %v913
  %v1079 = vpop.f32.mrb[0].mxu0
  %v1080 = vadd.f32 0.0, %v1079
  %v1081 = vpop.f32.mrb[0].mxu0
  %1082 = vmatprep.mubr.f32.mxu0 %v918
  %1083 = vmatmul.mubr.f32.gmra.mrb[0].mxu0 %v917
  %v1084 = vpop.f32.mrb[0].mxu0
  %v1085 = vadd.f32 0.0, %v1084
  %v1086 = vpop.f32.mrb[0].mxu0
  %1087 = vmatprep.mubr.f32.mxu0 %v922
  %1088 = vmatmul.mubr.f32.gmra.mrb[0].mxu0 %v921
  %v1089 = vpop.f32.mrb[0].mxu0
  %v1090 = vadd.f32 0.0, %v1089
  %v1091 = vpop.f32.mrb[0].mxu0
  %1092 = vmatprep.mubr.f32.mxu0 %v926
  %1093 = vmatmul.mubr.f32.gmra.mrb[0].mxu0 %v925
  %v1094 = vpop.f32.mrb[0].mxu0
  %v1095 = vadd.f32 0.0, %v1094
  %v1096 = vpop.f32.mrb[0].mxu0
  %1097 = vdwg.mxu0
  %1098 = vmatprep.subr.mxu0 0.0
  %1099 = vmatpush1.msra.mxu0 %v49
  %1100 = vmatprep.subr.mxu0 0.0
  %1101 = vmatpush1.msra.mxu0 %v50
  %1102 = vmatprep.subr.mxu0 0.0
  %1103 = vmatpush1.msra.mxu0 %v51
  %1104 = vmatprep.subr.mxu0 0.0
  %1105 = vmatpush1.msra.mxu0 %v52
  %1106 = vmatprep.subr.mxu0 0.0
  %1107 = vmatpush1.msra.mxu0 %v53
  %1108 = vmatprep.subr.mxu0 0.0
  %1109 = vmatpush1.msra.mxu0 %v54
  %1110 = vmatprep.subr.mxu0 0.0
  %1111 = vmatpush1.msra.mxu0 %v55
  %1112 = vmatprep.subr.mxu0 0.0
  %1113 = vmatpush1.msra.mxu0 %v56
  %1114 = vmatprep.subr.mxu0 0.0
  %1115 = vmatpush1.msra.mxu0 %v57
  %1116 = vmatprep.subr.mxu0 0.0
  %1117 = vmatpush1.msra.mxu0 %v58
  %1118 = vmatprep.subr.mxu0 0.0
  %1119 = vmatpush1.msra.mxu0 %v59
  %1120 = vmatprep.subr.mxu0 0.0
  %1121 = vmatpush1.msra.mxu0 %v60
  %1122 = vmatprep.subr.mxu0 0.0
  %1123 = vmatpush1.msra.mxu0 %v61
  %1124 = vmatprep.subr.mxu0 0.0
  %1125 = vmatpush1.msra.mxu0 %v62
  %1126 = vmatprep.subr.mxu0 0.0
  %1127 = vmatpush1.msra.mxu0 %v63
  %1128 = vmatprep.subr.mxu0 0.0
  %1129 = vmatpush1.msra.mxu0 %v64
  %1130 = vmatprep.subr.mxu0 0.0
  %1131 = vmatpush1.msra.mxu0 %v65
  %1132 = vmatprep.subr.mxu0 0.0
  %1133 = vmatpush1.msra.mxu0 %v66
  %1134 = vmatprep.subr.mxu0 0.0
  %1135 = vmatpush1.msra.mxu0 0.0
  %1136 = vmatprep.subr.mxu0 0.0
  %1137 = vmatpush1.msra.mxu0 0.0
  %1138 = vmatprep.subr.mxu0 0.0
  %1139 = vmatpush1.msra.mxu0 0.0
  %1140 = vmatprep.subr.mxu0 0.0
  %1141 = vmatpush1.msra.mxu0 0.0
  %1142 = vmatprep.subr.mxu0 0.0
  %1143 = vmatpush1.msra.mxu0 0.0
  %1144 = vmatprep.subr.mxu0 0.0
  %1145 = vmatpush1.msra.mxu0 0.0
  %1146 = vmatprep.subr.mxu0 0.0
  %1147 = vmatpush1.msra.mxu0 0.0
  %1148 = vmatprep.subr.mxu0 0.0
  %1149 = vmatpush1.msra.mxu0 0.0
  %1150 = vmatprep.subr.mxu0 0.0
  %1151 = vmatpush1.msra.mxu0 0.0
  %1152 = vmatprep.subr.mxu0 0.0
  %1153 = vmatpush1.msra.mxu0 0.0
  %1154 = vmatprep.subr.mxu0 0.0
  %1155 = vmatpush1.msra.mxu0 0.0
  %1156 = vmatprep.subr.mxu0 0.0
  %1157 = vmatpush1.msra.mxu0 0.0
  %1158 = vmatprep.subr.mxu0 0.0
  %1159 = vmatpush1.msra.mxu0 0.0
  %1160 = vmatprep.subr.mxu0 0.0
  %1161 = vmatpush1.msra.mxu0 0.0
  %1162 = vmatprep.mubr.f32.mxu0 %v930
  %1163 = vmatmul.mubr.f32.gmra.mrb[0].mxu0 %v879
  %v1164 = vpop.f32.mrb[0].mxu0
  %v1165 = vadd.f32 %v1035, %v1164
  %v1166 = vpop.f32.mrb[0].mxu0
  %1167 = vmatprep.mubr.f32.mxu0 %v933
  %1168 = vmatmul.mubr.f32.gmra.mrb[0].mxu0 %v883
  %v1169 = vpop.f32.mrb[0].mxu0
  %v1170 = vadd.f32 %v1040, %v1169
  %v1171 = vpop.f32.mrb[0].mxu0
  %1172 = vmatprep.mubr.f32.mxu0 %v936
  %1173 = vmatmul.mubr.f32.gmra.mrb[0].mxu0 %v887
  %v1174 = vpop.f32.mrb[0].mxu0
  %v1175 = vadd.f32 %v1045, %v1174
  %v1176 = vpop.f32.mrb[0].mxu0
  %1177 = vmatprep.mubr.f32.mxu0 %v939
  %1178 = vmatmul.mubr.f32.gmra.mrb[0].mxu0 %v891
  %v1179 = vpop.f32.mrb[0].mxu0
  %v1180 = vadd.f32 %v1050, %v1179
  %v1181 = vpop.f32.mrb[0].mxu0
  %1182 = vmatprep.mubr.f32.mxu0 %v942
  %1183 = vmatmul.mubr.f32.gmra.mrb[0].mxu0 %v895
  %v1184 = vpop.f32.mrb[0].mxu0
  %v1185 = vadd.f32 %v1055, %v1184
  %v1186 = vpop.f32.mrb[0].mxu0
  %1187 = vmatprep.mubr.f32.mxu0 %v945
  %1188 = vmatmul.mubr.f32.gmra.mrb[0].mxu0 %v899
  %v1189 = vpop.f32.mrb[0].mxu0
  %v1190 = vadd.f32 %v1060, %v1189
  %v1191 = vpop.f32.mrb[0].mxu0
  %1192 = vmatprep.mubr.f32.mxu0 %v948
  %1193 = vmatmul.mubr.f32.gmra.mrb[0].mxu0 %v903
  %v1194 = vpop.f32.mrb[0].mxu0
  %v1195 = vadd.f32 %v1065, %v1194
  %v1196 = vpop.f32.mrb[0].mxu0
  %1197 = vmatprep.mubr.f32.mxu0 %v951
  %1198 = vmatmul.mubr.f32.gmra.mrb[0].mxu0 %v907
  %v1199 = vpop.f32.mrb[0].mxu0
  %v1200 = vadd.f32 %v1070, %v1199
  %v1201 = vpop.f32.mrb[0].mxu0
  %1202 = vmatprep.mubr.f32.mxu0 %v954
  %1203 = vmatmul.mubr.f32.gmra.mrb[0].mxu0 %v911
  %v1204 = vpop.f32.mrb[0].mxu0
  %v1205 = vadd.f32 %v1075, %v1204
  %v1206 = vpop.f32.mrb[0].mxu0
  %1207 = vmatprep.mubr.f32.mxu0 %v957
  %1208 = vmatmul.mubr.f32.gmra.mrb[0].mxu0 %v915
  %v1209 = vpop.f32.mrb[0].mxu0
  %v1210 = vadd.f32 %v1080, %v1209
  %v1211 = vpop.f32.mrb[0].mxu0
  %1212 = vmatprep.mubr.f32.mxu0 %v960
  %1213 = vmatmul.mubr.f32.gmra.mrb[0].mxu0 %v919
  %v1214 = vpop.f32.mrb[0].mxu0
  %v1215 = vadd.f32 %v1085, %v1214
  %v1216 = vpop.f32.mrb[0].mxu0
  %1217 = vmatprep.mubr.f32.mxu0 %v963
  %1218 = vmatmul.mubr.f32.gmra.mrb[0].mxu0 %v923
  %v1219 = vpop.f32.mrb[0].mxu0
  %v1220 = vadd.f32 %v1090, %v1219
  %v1221 = vpop.f32.mrb[0].mxu0
  %1222 = vmatprep.mubr.f32.mxu0 %v966
  %1223 = vmatmul.mubr.f32.gmra.mrb[0].mxu0 %v927
  %v1224 = vpop.f32.mrb[0].mxu0
  %v1225 = vadd.f32 %v1095, %v1224
  %v1226 = vpop.f32.mrb[0].mxu0
  %1227 = vdwg.mxu0
  %v1228 = vmul.f32 %v1165, %v425
  %v1229 = vmul.f32 %v1170, %v425
  %v1230 = vmul.f32 %v1175, %v425
  %v1231 = vmul.f32 %v1180, %v425
  %v1232 = vmul.f32 %v1185, %v425
  %v1233 = vmul.f32 %v1190, %v425
  %v1234 = vmul.f32 %v1195, %v425
  %v1235 = vmul.f32 %v1200, %v425
  %v1236 = vmul.f32 %v1205, %v425
  %v1237 = vmul.f32 %v1210, %v425
  %v1238 = vmul.f32 %v1215, %v425
  %v1239 = vmul.f32 %v1220, %v425
  %v1240 = vmul.f32 %v1225, %v425
  %v1241 = vadd.f32 %v1228, %v444
  %v1242 = vadd.f32 %v1229, %v444
  %v1243 = vadd.f32 %v1230, %v444
  %v1244 = vadd.f32 %v1231, %v444
  %v1245 = vadd.f32 %v1232, %v444
  %v1246 = vadd.f32 %v1233, %v444
  %v1247 = vadd.f32 %v1234, %v444
  %v1248 = vadd.f32 %v1235, %v444
  %v1249 = vadd.f32 %v1236, %v444
  %v1250 = vadd.f32 %v1237, %v444
  %v1251 = vadd.f32 %v1238, %v444
  %v1252 = vadd.f32 %v1239, %v444
  %v1253 = vadd.f32 %v1240, %v444
  %v1254 = vmax.f32 %v1241, 0.0
  %v1255 = vmax.f32 %v1242, 0.0
  %v1256 = vmax.f32 %v1243, 0.0
  %v1257 = vmax.f32 %v1244, 0.0
  %v1258 = vmax.f32 %v1245, 0.0
  %v1259 = vmax.f32 %v1246, 0.0
  %v1260 = vmax.f32 %v1247, 0.0
  %v1261 = vmax.f32 %v1248, 0.0
  %v1262 = vmax.f32 %v1249, 0.0
  %v1263 = vmax.f32 %v1250, 0.0
  %v1264 = vmax.f32 %v1251, 0.0
  %v1265 = vmax.f32 %v1252, 0.0
  %v1266 = vmax.f32 %v1253, 0.0
  %s1267 = scalar_lea.vmem %s0, 1248
  %v1268 = vld [vmem:[%s1267] sm:$0xff]
  %v1269 = vld [vmem:[%s1267 + $0x8] sm:$0xff]
  %v1270 = vld [vmem:[%s1267 + $0x10] sm:$0xff]
  %v1271 = vld [vmem:[%s1267 + $0x18] sm:$0xff]
  %v1272 = vld [vmem:[%s1267 + $0x20] sm:$0xff]
  %v1273 = vld [vmem:[%s1267 + $0x28] sm:$0xff]
  %v1274 = vld [vmem:[%s1267 + $0x30] sm:$0xff]
  %v1275 = vld [vmem:[%s1267 + $0x38] sm:$0xff]
  %v1276 = vld [vmem:[%s1267 + $0x40] sm:$0xff]
  %v1277 = vld [vmem:[%s1267 + $0x48] sm:$0xff]
  %v1278 = vld [vmem:[%s1267 + $0x50] sm:$0xff]
  %v1279 = vld [vmem:[%s1267 + $0x58] sm:$0xff]
  %v1280 = vld [vmem:[%s1267 + $0x60] sm:$0xff]
  %v1281 = vld [vmem:[%s1267 + $0x68] sm:$0xff]
  %v1282 = vld [vmem:[%s1267 + $0x70] sm:$0xff]
  %v1283 = vld [vmem:[%s1267 + $0x78] sm:$0xff]
  %v1284 = vld [vmem:[%s1267 + $0x80] sm:$0xff]
  %v1285 = vld [vmem:[%s1267 + $0x88] sm:$0xff]
  %v1286 = vld [vmem:[%s1267 + $0x90] sm:$0xff]
  %v1287 = vld [vmem:[%s1267 + $0x98] sm:$0xff]
  %v1288 = vld [vmem:[%s1267 + $0xa0] sm:$0xff]
  %v1289 = vld [vmem:[%s1267 + $0xa8] sm:$0xff]
  %v1290 = vld [vmem:[%s1267 + $0xb0] sm:$0xff]
  %v1291 = vld [vmem:[%s1267 + $0xb8] sm:$0xff]
  %v1292 = vld [vmem:[%s1267 + $0xc0] sm:$0xff]
  %v1293 = vld [vmem:[%s1267 + $0xc8] sm:$0xff]
  %v1294 = vld [vmem:[%s1267 + $0xd0] sm:$0xff]
  %v1295 = vld [vmem:[%s1267 + $0xd8] sm:$0xff]
  %v1296 = vld [vmem:[%s1267 + $0xe0] sm:$0xff]
  %v1297 = vld [vmem:[%s1267 + $0xe8] sm:$0xff]
  %v1298 = vld [vmem:[%s1267 + $0xf0] sm:$0xff]
  %v1299 = vld [vmem:[%s1267 + $0xf8] sm:$0xff]
  %v1300 = vld [vmem:[%s1267 + $0x100] sm:$0xff]
  %v1301 = vld [vmem:[%s1267 + $0x108] sm:$0xff]
  %v1302 = vld [vmem:[%s1267 + $0x110] sm:$0xff]
  %v1303 = vld [vmem:[%s1267 + $0x118] sm:$0xff]
  %v1304 = vld [vmem:[%s1267 + $0x120] sm:$0xff]
  %v1305 = vld [vmem:[%s1267 + $0x128] sm:$0xff]
  %v1306 = vld [vmem:[%s1267 + $0x130] sm:$0xff]
  %v1307 = vld [vmem:[%s1267 + $0x138] sm:$0xff]
  %v1308 = vld [vmem:[%s1267 + $0x140] sm:$0xff]
  %v1309 = vld [vmem:[%s1267 + $0x148] sm:$0xff]
  %v1310 = vld [vmem:[%s1267 + $0x150] sm:$0xff]
  %v1311 = vld [vmem:[%s1267 + $0x158] sm:$0xff]
  %v1312 = vld [vmem:[%s1267 + $0x160] sm:$0xff]
  %v1313 = vld [vmem:[%s1267 + $0x168] sm:$0xff]
  %v1314 = vld [vmem:[%s1267 + $0x170] sm:$0xff]
  %v1315 = vld [vmem:[%s1267 + $0x178] sm:$0xff]
  %v1316 = vld [vmem:[%s1267 + $0x180] sm:$0x3]
  %v1317 = vld [vmem:[%s1267 + $0x188] sm:$0x3]
  %v1318 = vld [vmem:[%s1267 + $0x190] sm:$0x3]
  %v1319 = vld [vmem:[%s1267 + $0x198] sm:$0x3]
  %v1321 = vsel %vm121, %v1271, 0
  %v1324 = vsel %vm121, %v1275, 0
  %v1327 = vsel %vm121, %v1279, 0
  %v1330 = vsel %vm121, %v1283, 0
  %v1333 = vsel %vm121, %v1287, 0
  %v1336 = vsel %vm121, %v1291, 0
  %v1339 = vsel %vm121, %v1295, 0
  %v1342 = vsel %vm121, %v1299, 0
  %v1345 = vsel %vm121, %v1303, 0
  %v1348 = vsel %vm121, %v1307, 0
  %v1351 = vsel %vm121, %v1311, 0
  %v1354 = vsel %vm121, %v1315, 0
  %v1357 = vsel %vm121, %v1319, 0
  %1359 = vmatprep.subr.mxu0 0.0
  %1360 = vmatpush1.msra.mxu0 %v17
  %1361 = vmatprep.subr.mxu0 0.0
  %1362 = vmatpush1.msra.mxu0 %v18
  %1363 = vmatprep.subr.mxu0 0.0
  %1364 = vmatpush1.msra.mxu0 %v19
  %1365 = vmatprep.subr.mxu0 0.0
  %1366 = vmatpush1.msra.mxu0 %v20
  %1367 = vmatprep.subr.mxu0 0.0
  %1368 = vmatpush1.msra.mxu0 %v21
  %1369 = vmatprep.subr.mxu0 0.0
  %1370 = vmatpush1.msra.mxu0 %v22
  %1371 = vmatprep.subr.mxu0 0.0
  %1372 = vmatpush1.msra.mxu0 %v23
  %1373 = vmatprep.subr.mxu0 0.0
  %1374 = vmatpush1.msra.mxu0 %v24
  %1375 = vmatprep.subr.mxu0 0.0
  %1376 = vmatpush1.msra.mxu0 %v25
  %1377 = vmatprep.subr.mxu0 0.0
  %1378 = vmatpush1.msra.mxu0 %v26
  %1379 = vmatprep.subr.mxu0 0.0
  %1380 = vmatpush1.msra.mxu0 %v27
  %1381 = vmatprep.subr.mxu0 0.0
  %1382 = vmatpush1.msra.mxu0 %v28
  %1383 = vmatprep.subr.mxu0 0.0
  %1384 = vmatpush1.msra.mxu0 %v29
  %1385 = vmatprep.subr.mxu0 0.0
  %1386 = vmatpush1.msra.mxu0 %v30
  %1387 = vmatprep.subr.mxu0 0.0
  %1388 = vmatpush1.msra.mxu0 %v31
  %1389 = vmatprep.subr.mxu0 0.0
  %1390 = vmatpush1.msra.mxu0 %v32
  %1391 = vmatprep.subr.mxu0 0.0
  %1392 = vmatpush1.msra.mxu0 %v33
  %1393 = vmatprep.subr.mxu0 0.0
  %1394 = vmatpush1.msra.mxu0 %v34
  %1395 = vmatprep.subr.mxu0 0.0
  %1396 = vmatpush1.msra.mxu0 %v35
  %1397 = vmatprep.subr.mxu0 0.0
  %1398 = vmatpush1.msra.mxu0 %v36
  %1399 = vmatprep.subr.mxu0 0.0
  %1400 = vmatpush1.msra.mxu0 %v37
  %1401 = vmatprep.subr.mxu0 0.0
  %1402 = vmatpush1.msra.mxu0 %v38
  %1403 = vmatprep.subr.mxu0 0.0
  %1404 = vmatpush1.msra.mxu0 %v39
  %1405 = vmatprep.subr.mxu0 0.0
  %1406 = vmatpush1.msra.mxu0 %v40
  %1407 = vmatprep.subr.mxu0 0.0
  %1408 = vmatpush1.msra.mxu0 %v41
  %1409 = vmatprep.subr.mxu0 0.0
  %1410 = vmatpush1.msra.mxu0 %v42
  %1411 = vmatprep.subr.mxu0 0.0
  %1412 = vmatpush1.msra.mxu0 %v43
  %1413 = vmatprep.subr.mxu0 0.0
  %1414 = vmatpush1.msra.mxu0 %v44
  %1415 = vmatprep.subr.mxu0 0.0
  %1416 = vmatpush1.msra.mxu0 %v45
  %1417 = vmatprep.subr.mxu0 0.0
  %1418 = vmatpush1.msra.mxu0 %v46
  %1419 = vmatprep.subr.mxu0 0.0
  %1420 = vmatpush1.msra.mxu0 %v47
  %1421 = vmatprep.subr.mxu0 0.0
  %1422 = vmatpush1.msra.mxu0 %v48
  %1423 = vmatprep.mubr.f32.mxu0 %v1269
  %1424 = vmatmul.mubr.f32.gmra.mrb[0].mxu0 %v1268
  %v1425 = vpop.f32.mrb[0].mxu0
  %v1426 = vadd.f32 0.0, %v1425
  %v1427 = vpop.f32.mrb[0].mxu0
  %1428 = vmatprep.mubr.f32.mxu0 %v1273
  %1429 = vmatmul.mubr.f32.gmra.mrb[0].mxu0 %v1272
  %v1430 = vpop.f32.mrb[0].mxu0
  %v1431 = vadd.f32 0.0, %v1430
  %v1432 = vpop.f32.mrb[0].mxu0
  %1433 = vmatprep.mubr.f32.mxu0 %v1277
  %1434 = vmatmul.mubr.f32.gmra.mrb[0].mxu0 %v1276
  %v1435 = vpop.f32.mrb[0].mxu0
  %v1436 = vadd.f32 0.0, %v1435
  %v1437 = vpop.f32.mrb[0].mxu0
  %1438 = vmatprep.mubr.f32.mxu0 %v1281
  %1439 = vmatmul.mubr.f32.gmra.mrb[0].mxu0 %v1280
  %v1440 = vpop.f32.mrb[0].mxu0
  %v1441 = vadd.f32 0.0, %v1440
  %v1442 = vpop.f32.mrb[0].mxu0
  %1443 = vmatprep.mubr.f32.mxu0 %v1285
  %1444 = vmatmul.mubr.f32.gmra.mrb[0].mxu0 %v1284
  %v1445 = vpop.f32.mrb[0].mxu0
  %v1446 = vadd.f32 0.0, %v1445
  %v1447 = vpop.f32.mrb[0].mxu0
  %1448 = vmatprep.mubr.f32.mxu0 %v1289
  %1449 = vmatmul.mubr.f32.gmra.mrb[0].mxu0 %v1288
  %v1450 = vpop.f32.mrb[0].mxu0
  %v1451 = vadd.f32 0.0, %v1450
  %v1452 = vpop.f32.mrb[0].mxu0
  %1453 = vmatprep.mubr.f32.mxu0 %v1293
  %1454 = vmatmul.mubr.f32.gmra.mrb[0].mxu0 %v1292
  %v1455 = vpop.f32.mrb[0].mxu0
  %v1456 = vadd.f32 0.0, %v1455
  %v1457 = vpop.f32.mrb[0].mxu0
  %1458 = vmatprep.mubr.f32.mxu0 %v1297
  %1459 = vmatmul.mubr.f32.gmra.mrb[0].mxu0 %v1296
  %v1460 = vpop.f32.mrb[0].mxu0
  %v1461 = vadd.f32 0.0, %v1460
  %v1462 = vpop.f32.mrb[0].mxu0
  %1463 = vmatprep.mubr.f32.mxu0 %v1301
  %1464 = vmatmul.mubr.f32.gmra.mrb[0].mxu0 %v1300
  %v1465 = vpop.f32.mrb[0].mxu0
  %v1466 = vadd.f32 0.0, %v1465
  %v1467 = vpop.f32.mrb[0].mxu0
  %1468 = vmatprep.mubr.f32.mxu0 %v1305
  %1469 = vmatmul.mubr.f32.gmra.mrb[0].mxu0 %v1304
  %v1470 = vpop.f32.mrb[0].mxu0
  %v1471 = vadd.f32 0.0, %v1470
  %v1472 = vpop.f32.mrb[0].mxu0
  %1473 = vmatprep.mubr.f32.mxu0 %v1309
  %1474 = vmatmul.mubr.f32.gmra.mrb[0].mxu0 %v1308
  %v1475 = vpop.f32.mrb[0].mxu0
  %v1476 = vadd.f32 0.0, %v1475
  %v1477 = vpop.f32.mrb[0].mxu0
  %1478 = vmatprep.mubr.f32.mxu0 %v1313
  %1479 = vmatmul.mubr.f32.gmra.mrb[0].mxu0 %v1312
  %v1480 = vpop.f32.mrb[0].mxu0
  %v1481 = vadd.f32 0.0, %v1480
  %v1482 = vpop.f32.mrb[0].mxu0
  %1483 = vmatprep.mubr.f32.mxu0 %v1317
  %1484 = vmatmul.mubr.f32.gmra.mrb[0].mxu0 %v1316
  %v1485 = vpop.f32.mrb[0].mxu0
  %v1486 = vadd.f32 0.0, %v1485
  %v1487 = vpop.f32.mrb[0].mxu0
  %1488 = vdwg.mxu0
  %1489 = vmatprep.subr.mxu0 0.0
  %1490 = vmatpush1.msra.mxu0 %v49
  %1491 = vmatprep.subr.mxu0 0.0
  %1492 = vmatpush1.msra.mxu0 %v50
  %1493 = vmatprep.subr.mxu0 0.0
  %1494 = vmatpush1.msra.mxu0 %v51
  %1495 = vmatprep.subr.mxu0 0.0
  %1496 = vmatpush1.msra.mxu0 %v52
  %1497 = vmatprep.subr.mxu0 0.0
  %1498 = vmatpush1.msra.mxu0 %v53
  %1499 = vmatprep.subr.mxu0 0.0
  %1500 = vmatpush1.msra.mxu0 %v54
  %1501 = vmatprep.subr.mxu0 0.0
  %1502 = vmatpush1.msra.mxu0 %v55
  %1503 = vmatprep.subr.mxu0 0.0
  %1504 = vmatpush1.msra.mxu0 %v56
  %1505 = vmatprep.subr.mxu0 0.0
  %1506 = vmatpush1.msra.mxu0 %v57
  %1507 = vmatprep.subr.mxu0 0.0
  %1508 = vmatpush1.msra.mxu0 %v58
  %1509 = vmatprep.subr.mxu0 0.0
  %1510 = vmatpush1.msra.mxu0 %v59
  %1511 = vmatprep.subr.mxu0 0.0
  %1512 = vmatpush1.msra.mxu0 %v60
  %1513 = vmatprep.subr.mxu0 0.0
  %1514 = vmatpush1.msra.mxu0 %v61
  %1515 = vmatprep.subr.mxu0 0.0
  %1516 = vmatpush1.msra.mxu0 %v62
  %1517 = vmatprep.subr.mxu0 0.0
  %1518 = vmatpush1.msra.mxu0 %v63
  %1519 = vmatprep.subr.mxu0 0.0
  %1520 = vmatpush1.msra.mxu0 %v64
  %1521 = vmatprep.subr.mxu0 0.0
  %1522 = vmatpush1.msra.mxu0 %v65
  %1523 = vmatprep.subr.mxu0 0.0
  %1524 = vmatpush1.msra.mxu0 %v66
  %1525 = vmatprep.subr.mxu0 0.0
  %1526 = vmatpush1.msra.mxu0 0.0
  %1527 = vmatprep.subr.mxu0 0.0
  %1528 = vmatpush1.msra.mxu0 0.0
  %1529 = vmatprep.subr.mxu0 0.0
  %1530 = vmatpush1.msra.mxu0 0.0
  %1531 = vmatprep.subr.mxu0 0.0
  %1532 = vmatpush1.msra.mxu0 0.0
  %1533 = vmatprep.subr.mxu0 0.0
  %1534 = vmatpush1.msra.mxu0 0.0
  %1535 = vmatprep.subr.mxu0 0.0
  %1536 = vmatpush1.msra.mxu0 0.0
  %1537 = vmatprep.subr.mxu0 0.0
  %1538 = vmatpush1.msra.mxu0 0.0
  %1539 = vmatprep.subr.mxu0 0.0
  %1540 = vmatpush1.msra.mxu0 0.0
  %1541 = vmatprep.subr.mxu0 0.0
  %1542 = vmatpush1.msra.mxu0 0.0
  %1543 = vmatprep.subr.mxu0 0.0
  %1544 = vmatpush1.msra.mxu0 0.0
  %1545 = vmatprep.subr.mxu0 0.0
  %1546 = vmatpush1.msra.mxu0 0.0
  %1547 = vmatprep.subr.mxu0 0.0
  %1548 = vmatpush1.msra.mxu0 0.0
  %1549 = vmatprep.subr.mxu0 0.0
  %1550 = vmatpush1.msra.mxu0 0.0
  %1551 = vmatprep.subr.mxu0 0.0
  %1552 = vmatpush1.msra.mxu0 0.0
  %1553 = vmatprep.mubr.f32.mxu0 %v1321
  %1554 = vmatmul.mubr.f32.gmra.mrb[0].mxu0 %v1270
  %v1555 = vpop.f32.mrb[0].mxu0
  %v1556 = vadd.f32 %v1426, %v1555
  %v1557 = vpop.f32.mrb[0].mxu0
  %1558 = vmatprep.mubr.f32.mxu0 %v1324
  %1559 = vmatmul.mubr.f32.gmra.mrb[0].mxu0 %v1274
  %v1560 = vpop.f32.mrb[0].mxu0
  %v1561 = vadd.f32 %v1431, %v1560
  %v1562 = vpop.f32.mrb[0].mxu0
  %1563 = vmatprep.mubr.f32.mxu0 %v1327
  %1564 = vmatmul.mubr.f32.gmra.mrb[0].mxu0 %v1278
  %v1565 = vpop.f32.mrb[0].mxu0
  %v1566 = vadd.f32 %v1436, %v1565
  %v1567 = vpop.f32.mrb[0].mxu0
  %1568 = vmatprep.mubr.f32.mxu0 %v1330
  %1569 = vmatmul.mubr.f32.gmra.mrb[0].mxu0 %v1282
  %v1570 = vpop.f32.mrb[0].mxu0
  %v1571 = vadd.f32 %v1441, %v1570
  %v1572 = vpop.f32.mrb[0].mxu0
  %1573 = vmatprep.mubr.f32.mxu0 %v1333
  %1574 = vmatmul.mubr.f32.gmra.mrb[0].mxu0 %v1286
  %v1575 = vpop.f32.mrb[0].mxu0
  %v1576 = vadd.f32 %v1446, %v1575
  %v1577 = vpop.f32.mrb[0].mxu0
  %1578 = vmatprep.mubr.f32.mxu0 %v1336
  %1579 = vmatmul.mubr.f32.gmra.mrb[0].mxu0 %v1290
  %v1580 = vpop.f32.mrb[0].mxu0
  %v1581 = vadd.f32 %v1451, %v1580
  %v1582 = vpop.f32.mrb[0].mxu0
  %1583 = vmatprep.mubr.f32.mxu0 %v1339
  %1584 = vmatmul.mubr.f32.gmra.mrb[0].mxu0 %v1294
  %v1585 = vpop.f32.mrb[0].mxu0
  %v1586 = vadd.f32 %v1456, %v1585
  %v1587 = vpop.f32.mrb[0].mxu0
  %1588 = vmatprep.mubr.f32.mxu0 %v1342
  %1589 = vmatmul.mubr.f32.gmra.mrb[0].mxu0 %v1298
  %v1590 = vpop.f32.mrb[0].mxu0
  %v1591 = vadd.f32 %v1461, %v1590
  %v1592 = vpop.f32.mrb[0].mxu0
  %1593 = vmatprep.mubr.f32.mxu0 %v1345
  %1594 = vmatmul.mubr.f32.gmra.mrb[0].mxu0 %v1302
  %v1595 = vpop.f32.mrb[0].mxu0
  %v1596 = vadd.f32 %v1466, %v1595
  %v1597 = vpop.f32.mrb[0].mxu0
  %1598 = vmatprep.mubr.f32.mxu0 %v1348
  %1599 = vmatmul.mubr.f32.gmra.mrb[0].mxu0 %v1306
  %v1600 = vpop.f32.mrb[0].mxu0
  %v1601 = vadd.f32 %v1471, %v1600
  %v1602 = vpop.f32.mrb[0].mxu0
  %1603 = vmatprep.mubr.f32.mxu0 %v1351
  %1604 = vmatmul.mubr.f32.gmra.mrb[0].mxu0 %v1310
  %v1605 = vpop.f32.mrb[0].mxu0
  %v1606 = vadd.f32 %v1476, %v1605
  %v1607 = vpop.f32.mrb[0].mxu0
  %1608 = vmatprep.mubr.f32.mxu0 %v1354
  %1609 = vmatmul.mubr.f32.gmra.mrb[0].mxu0 %v1314
  %v1610 = vpop.f32.mrb[0].mxu0
  %v1611 = vadd.f32 %v1481, %v1610
  %v1612 = vpop.f32.mrb[0].mxu0
  %1613 = vmatprep.mubr.f32.mxu0 %v1357
  %1614 = vmatmul.mubr.f32.gmra.mrb[0].mxu0 %v1318
  %v1615 = vpop.f32.mrb[0].mxu0
  %v1616 = vadd.f32 %v1486, %v1615
  %v1617 = vpop.f32.mrb[0].mxu0
  %1618 = vdwg.mxu0
  %v1619 = vmul.f32 %v1556, %v425
  %v1620 = vmul.f32 %v1561, %v425
  %v1621 = vmul.f32 %v1566, %v425
  %v1622 = vmul.f32 %v1571, %v425
  %v1623 = vmul.f32 %v1576, %v425
  %v1624 = vmul.f32 %v1581, %v425
  %v1625 = vmul.f32 %v1586, %v425
  %v1626 = vmul.f32 %v1591, %v425
  %v1627 = vmul.f32 %v1596, %v425
  %v1628 = vmul.f32 %v1601, %v425
  %v1629 = vmul.f32 %v1606, %v425
  %v1630 = vmul.f32 %v1611, %v425
  %v1631 = vmul.f32 %v1616, %v425
  %v1632 = vadd.f32 %v1619, %v444
  %v1633 = vadd.f32 %v1620, %v444
  %v1634 = vadd.f32 %v1621, %v444
  %v1635 = vadd.f32 %v1622, %v444
  %v1636 = vadd.f32 %v1623, %v444
  %v1637 = vadd.f32 %v1624, %v444
  %v1638 = vadd.f32 %v1625, %v444
  %v1639 = vadd.f32 %v1626, %v444
  %v1640 = vadd.f32 %v1627, %v444
  %v1641 = vadd.f32 %v1628, %v444
  %v1642 = vadd.f32 %v1629, %v444
  %v1643 = vadd.f32 %v1630, %v444
  %v1644 = vadd.f32 %v1631, %v444
  %v1645 = vmax.f32 %v1632, 0.0
  %v1646 = vmax.f32 %v1633, 0.0
  %v1647 = vmax.f32 %v1634, 0.0
  %v1648 = vmax.f32 %v1635, 0.0
  %v1649 = vmax.f32 %v1636, 0.0
  %v1650 = vmax.f32 %v1637, 0.0
  %v1651 = vmax.f32 %v1638, 0.0
  %v1652 = vmax.f32 %v1639, 0.0
  %v1653 = vmax.f32 %v1640, 0.0
  %v1654 = vmax.f32 %v1641, 0.0
  %v1655 = vmax.f32 %v1642, 0.0
  %v1656 = vmax.f32 %v1643, 0.0
  %v1657 = vmax.f32 %v1644, 0.0
  %v1658 = vmax.f32 %v1254, %v1645
  %v1659 = vmax.f32 %v1255, %v1646
  %v1660 = vmax.f32 %v1256, %v1647
  %v1661 = vmax.f32 %v1257, %v1648
  %v1662 = vmax.f32 %v1258, %v1649
  %v1663 = vmax.f32 %v1259, %v1650
  %v1664 = vmax.f32 %v1260, %v1651
  %v1665 = vmax.f32 %v1261, %v1652
  %v1666 = vmax.f32 %v1262, %v1653
  %v1667 = vmax.f32 %v1263, %v1654
  %v1668 = vmax.f32 %v1264, %v1655
  %v1669 = vmax.f32 %v1265, %v1656
  %v1670 = vmax.f32 %v1266, %v1657
  %v1671 = vmax.f32 %v863, %v1658
  %v1672 = vmax.f32 %v864, %v1659
  %v1673 = vmax.f32 %v865, %v1660
  %v1674 = vmax.f32 %v866, %v1661
  %v1675 = vmax.f32 %v867, %v1662
  %v1676 = vmax.f32 %v868, %v1663
  %v1677 = vmax.f32 %v869, %v1664
  %v1678 = vmax.f32 %v870, %v1665
  %v1679 = vmax.f32 %v871, %v1666
  %v1680 = vmax.f32 %v872, %v1667
  %v1681 = vmax.f32 %v873, %v1668
  %v1682 = vmax.f32 %v874, %v1669
  %v1683 = vmax.f32 %v875, %v1670
  %vm1684 = vcmask 261120
  %1685 = vst.msk [vmem:[%s4] sm:$0xff] %vm1684, %v1671
  %1686 = vst.msk [vmem:[%s4 + $0x8] sm:$0xff] %vm1684, %v1672
  %1687 = vst.msk [vmem:[%s4 + $0x10] sm:$0xff] %vm1684, %v1673
  %1688 = vst.msk [vmem:[%s4 + $0x18] sm:$0xff] %vm1684, %v1674
  %1689 = vst.msk [vmem:[%s4 + $0x20] sm:$0xff] %vm1684, %v1675
  %1690 = vst.msk [vmem:[%s4 + $0x28] sm:$0xff] %vm1684, %v1676
  %1691 = vst.msk [vmem:[%s4 + $0x30] sm:$0xff] %vm1684, %v1677
  %1692 = vst.msk [vmem:[%s4 + $0x38] sm:$0xff] %vm1684, %v1678
  %1693 = vst.msk [vmem:[%s4 + $0x40] sm:$0xff] %vm1684, %v1679
  %1694 = vst.msk [vmem:[%s4 + $0x48] sm:$0xff] %vm1684, %v1680
  %1695 = vst.msk [vmem:[%s4 + $0x50] sm:$0xff] %vm1684, %v1681
  %1696 = vst.msk [vmem:[%s4 + $0x58] sm:$0xff] %vm1684, %v1682
  %vm1697 = vcmask 254976
  %1698 = vst.msk [vmem:[%s4 + $0x60] sm:$0x3] %vm1697, %v1683
  // Predicated region
  $region18: #{cnn_fashion_mnist_forward.4} parent=0 // pred_check
    _
  $region19: #{cnn_fashion_mnist_forward.4} parent=0 // pred_check_branch
    %1700 = sbr.rel (0) target = $region21
  $region20: #{cnn_fashion_mnist_forward.4} parent=0 // pred_region
    _
  $region21: #{cnn_fashion_mnist_forward.4} parent=0 // pred_fallthru
    _
  // Predicated region
  $region22: #{cnn_fashion_mnist_forward.4} parent=0 // pred_check
    _
  $region23: #{cnn_fashion_mnist_forward.4} parent=0 // pred_check_branch
    %1702 = sbr.rel (0) target = $region25
  $region24: #{cnn_fashion_mnist_forward.4} parent=0 // pred_region
    _
  $region25: #{cnn_fashion_mnist_forward.4} parent=0 // pred_fallthru
    _

// kernel: cnn_fashion_mnist_forward.5
$region0: #{cnn_fashion_mnist_forward.5}
  #allocation0 [shape = 'u32[]', space=smem, size = 0x4, offset = 0x4, fixed_abs, tag = 'smem constant byte address 0x4 - core index']
  #allocation1 [shape = 'u32[144,128]{1,0:T(1,128)}', space=vmem, size = 0x12000, scoped, tag = 'internal scratch']
  %s0 = inlined_call_operand.vmem [shape: f32[2,1568], index: 0, kind: input, shape index: {}]
  %s1 = inlined_call_operand.vmem [shape: f32[1568,10], index: 1, kind: input, shape index: {}]
  %s2 = inlined_call_operand.vmem [shape: f32[1,10], index: 2, kind: input, shape index: {}]
  %s3 = inlined_call_operand.hbm [shape: f32[2,10], index: 3, kind: output, shape index: {}]
  %s4 = sld [smem:[#allocation0]]
  $region22: #{cnn_fashion_mnist_forward.5} parent=0
    _
  %s6 = ssub.s32 1, %s4
  %s7 = scalar_select 0, %s6, %s4
  $region1: #{cnn_fashion_mnist_forward.5} parent=0
    #allocation2 [shape = 'u8[1024]{0}', space=vmem, size = 0x400, scoped, tag = 'output window, operand 0, single buffered']
    #allocation3 [shape = 's32[1]{0}', space=sflag, size = 0x4, scoped, tag = 'scoped memory for cnn_fashion_mnist_forward.5']
    %8 = vsyncpa [#allocation3], 0
    // Predicated region
    $region2: #{cnn_fashion_mnist_forward.5} parent=1 // pred_check
      _
    $region3: #{cnn_fashion_mnist_forward.5} parent=1 // pred_check_branch
      %10 = sbr.rel (0) target = $region5
    $region4: #{cnn_fashion_mnist_forward.5} parent=1 // pred_region
      _
    $region5: #{cnn_fashion_mnist_forward.5} parent=1 // pred_fallthru
      _
    // Predicated region
    $region6: #{cnn_fashion_mnist_forward.5} parent=1 // pred_check
      _
    $region7: #{cnn_fashion_mnist_forward.5} parent=1 // pred_check_branch
      %12 = sbr.rel (0) target = $region9
    $region8: #{cnn_fashion_mnist_forward.5} parent=1 // pred_region
      _
    $region9: #{cnn_fashion_mnist_forward.5} parent=1 // pred_fallthru
      _
    // Predicated region
    $region10: #{cnn_fashion_mnist_forward.5} parent=1 // pred_check
      _
    $region11: #{cnn_fashion_mnist_forward.5} parent=1 // pred_check_branch
      %14 = sbr.rel (0) target = $region13
    $region12: #{cnn_fashion_mnist_forward.5} parent=1 // pred_region
      _
    $region13: #{cnn_fashion_mnist_forward.5} parent=1 // pred_fallthru
      _
    %v15 = vld [vmem:[%s0] sm:$0xff]
    %v16 = vld [vmem:[%s0 + $0x8] sm:$0xff]
    %v17 = vld [vmem:[%s0 + $0x10] sm:$0xff]
    %v18 = vld [vmem:[%s0 + $0x18] sm:$0x3]
    %v19 = vld [vmem:[%s1] sm:$0xff]
    %v20 = vld [vmem:[%s1 + $0x8] sm:$0xff]
    %v21 = vld [vmem:[%s1 + $0x10] sm:$0xff]
    %v22 = vld [vmem:[%s1 + $0x18] sm:$0xff]
    %v23 = vld [vmem:[%s1 + $0x20] sm:$0xff]
    %v24 = vld [vmem:[%s1 + $0x28] sm:$0xff]
    %v25 = vld [vmem:[%s1 + $0x30] sm:$0xff]
    %v26 = vld [vmem:[%s1 + $0x38] sm:$0xff]
    %v27 = vld [vmem:[%s1 + $0x40] sm:$0xff]
    %v28 = vld [vmem:[%s1 + $0x48] sm:$0xff]
    %v29 = vld [vmem:[%s1 + $0x50] sm:$0xff]
    %v30 = vld [vmem:[%s1 + $0x58] sm:$0xff]
    %v31 = vld [vmem:[%s1 + $0x60] sm:$0xff]
    %v32 = vld [vmem:[%s1 + $0x68] sm:$0xff]
    %v33 = vld [vmem:[%s1 + $0x70] sm:$0xff]
    %v34 = vld [vmem:[%s1 + $0x78] sm:$0xff]
    %v35 = vld [vmem:[%s1 + $0x80] sm:$0xff]
    %v36 = vld [vmem:[%s1 + $0x88] sm:$0xff]
    %v37 = vld [vmem:[%s1 + $0x90] sm:$0xff]
    %v38 = vld [vmem:[%s1 + $0x98] sm:$0xff]
    %v39 = vld [vmem:[%s1 + $0xa0] sm:$0xff]
    %v40 = vld [vmem:[%s1 + $0xa8] sm:$0xff]
    %v41 = vld [vmem:[%s1 + $0xb0] sm:$0xff]
    %v42 = vld [vmem:[%s1 + $0xb8] sm:$0xff]
    %v43 = vld [vmem:[%s1 + $0xc0] sm:$0xff]
    %v44 = vld [vmem:[%s1 + $0xc8] sm:$0xff]
    %v45 = vld [vmem:[%s1 + $0xd0] sm:$0xff]
    %v46 = vld [vmem:[%s1 + $0xd8] sm:$0xff]
    %v47 = vld [vmem:[%s1 + $0xe0] sm:$0xff]
    %v48 = vld [vmem:[%s1 + $0xe8] sm:$0xff]
    %v49 = vld [vmem:[%s1 + $0xf0] sm:$0xff]
    %v50 = vld [vmem:[%s1 + $0xf8] sm:$0xff]
    %v51 = vld [vmem:[%s1 + $0x100] sm:$0xff]
    %v52 = vld [vmem:[%s1 + $0x108] sm:$0xff]
    %v53 = vld [vmem:[%s1 + $0x110] sm:$0xff]
    %v54 = vld [vmem:[%s1 + $0x118] sm:$0xff]
    %v55 = vld [vmem:[%s1 + $0x120] sm:$0xff]
    %v56 = vld [vmem:[%s1 + $0x128] sm:$0xff]
    %v57 = vld [vmem:[%s1 + $0x130] sm:$0xff]
    %v58 = vld [vmem:[%s1 + $0x138] sm:$0xff]
    %v59 = vld [vmem:[%s1 + $0x140] sm:$0xff]
    %v60 = vld [vmem:[%s1 + $0x148] sm:$0xff]
    %v61 = vld [vmem:[%s1 + $0x150] sm:$0xff]
    %v62 = vld [vmem:[%s1 + $0x158] sm:$0xff]
    %v63 = vld [vmem:[%s1 + $0x160] sm:$0xff]
    %v64 = vld [vmem:[%s1 + $0x168] sm:$0xff]
    %v65 = vld [vmem:[%s1 + $0x170] sm:$0xff]
    %v66 = vld [vmem:[%s1 + $0x178] sm:$0xff]
    %v67 = vld [vmem:[%s1 + $0x180] sm:$0xff]
    %v68 = vld [vmem:[%s1 + $0x188] sm:$0xff]
    %v69 = vld [vmem:[%s1 + $0x190] sm:$0xff]
    %v70 = vld [vmem:[%s1 + $0x198] sm:$0xff]
    %v71 = vld [vmem:[%s1 + $0x1a0] sm:$0xff]
    %v72 = vld [vmem:[%s1 + $0x1a8] sm:$0xff]
    %v73 = vld [vmem:[%s1 + $0x1b0] sm:$0xff]
    %v74 = vld [vmem:[%s1 + $0x1b8] sm:$0xff]
    %v75 = vld [vmem:[%s1 + $0x1c0] sm:$0xff]
    %v76 = vld [vmem:[%s1 + $0x1c8] sm:$0xff]
    %v77 = vld [vmem:[%s1 + $0x1d0] sm:$0xff]
    %v78 = vld [vmem:[%s1 + $0x1d8] sm:$0xff]
    %v79 = vld [vmem:[%s1 + $0x1e0] sm:$0xff]
    %v80 = vld [vmem:[%s1 + $0x1e8] sm:$0xff]
    %v81 = vld [vmem:[%s1 + $0x1f0] sm:$0xff]
    %v82 = vld [vmem:[%s1 + $0x1f8] sm:$0xff]
    %v83 = vld [vmem:[%s1 + $0x200] sm:$0xff]
    %v84 = vld [vmem:[%s1 + $0x208] sm:$0xff]
    %v85 = vld [vmem:[%s1 + $0x210] sm:$0xff]
    %v86 = vld [vmem:[%s1 + $0x218] sm:$0xff]
    %v87 = vld [vmem:[%s1 + $0x220] sm:$0xff]
    %v88 = vld [vmem:[%s1 + $0x228] sm:$0xff]
    %v89 = vld [vmem:[%s1 + $0x230] sm:$0xff]
    %v90 = vld [vmem:[%s1 + $0x238] sm:$0xff]
    %v91 = vld [vmem:[%s1 + $0x240] sm:$0xff]
    %v92 = vld [vmem:[%s1 + $0x248] sm:$0xff]
    %v93 = vld [vmem:[%s1 + $0x250] sm:$0xff]
    %v94 = vld [vmem:[%s1 + $0x258] sm:$0xff]
    %v95 = vld [vmem:[%s1 + $0x260] sm:$0xff]
    %v96 = vld [vmem:[%s1 + $0x268] sm:$0xff]
    %v97 = vld [vmem:[%s1 + $0x270] sm:$0xff]
    %v98 = vld [vmem:[%s1 + $0x278] sm:$0xff]
    %v99 = vld [vmem:[%s1 + $0x280] sm:$0xff]
    %v100 = vld [vmem:[%s1 + $0x288] sm:$0xff]
    %v101 = vld [vmem:[%s1 + $0x290] sm:$0xff]
    %v102 = vld [vmem:[%s1 + $0x298] sm:$0xff]
    %v103 = vld [vmem:[%s1 + $0x2a0] sm:$0xff]
    %v104 = vld [vmem:[%s1 + $0x2a8] sm:$0xff]
    %v105 = vld [vmem:[%s1 + $0x2b0] sm:$0xff]
    %v106 = vld [vmem:[%s1 + $0x2b8] sm:$0xff]
    %v107 = vld [vmem:[%s1 + $0x2c0] sm:$0xff]
    %v108 = vld [vmem:[%s1 + $0x2c8] sm:$0xff]
    %v109 = vld [vmem:[%s1 + $0x2d0] sm:$0xff]
    %v110 = vld [vmem:[%s1 + $0x2d8] sm:$0xff]
    %v111 = vld [vmem:[%s1 + $0x2e0] sm:$0xff]
    %v112 = vld [vmem:[%s1 + $0x2e8] sm:$0xff]
    %v113 = vld [vmem:[%s1 + $0x2f0] sm:$0xff]
    %v114 = vld [vmem:[%s1 + $0x2f8] sm:$0xff]
    %v115 = vld [vmem:[%s1 + $0x300] sm:$0xff]
    %v116 = vld [vmem:[%s1 + $0x308] sm:$0xff]
    %v117 = vld [vmem:[%s1 + $0x310] sm:$0xff]
    %v118 = vld [vmem:[%s1 + $0x318] sm:$0xff]
    %v119 = vld [vmem:[%s1 + $0x320] sm:$0xff]
    %v120 = vld [vmem:[%s1 + $0x328] sm:$0xff]
    %v121 = vld [vmem:[%s1 + $0x330] sm:$0xff]
    %v122 = vld [vmem:[%s1 + $0x338] sm:$0xff]
    %v123 = vld [vmem:[%s1 + $0x340] sm:$0xff]
    %v124 = vld [vmem:[%s1 + $0x348] sm:$0xff]
    %v125 = vld [vmem:[%s1 + $0x350] sm:$0xff]
    %v126 = vld [vmem:[%s1 + $0x358] sm:$0xff]
    %v127 = vld [vmem:[%s1 + $0x360] sm:$0xff]
    %v128 = vld [vmem:[%s1 + $0x368] sm:$0xff]
    %v129 = vld [vmem:[%s1 + $0x370] sm:$0xff]
    %v130 = vld [vmem:[%s1 + $0x378] sm:$0xff]
    %v131 = vld [vmem:[%s1 + $0x380] sm:$0xff]
    %v132 = vld [vmem:[%s1 + $0x388] sm:$0xff]
    %v133 = vld [vmem:[%s1 + $0x390] sm:$0xff]
    %v134 = vld [vmem:[%s1 + $0x398] sm:$0xff]
    %v135 = vld [vmem:[%s1 + $0x3a0] sm:$0xff]
    %v136 = vld [vmem:[%s1 + $0x3a8] sm:$0xff]
    %v137 = vld [vmem:[%s1 + $0x3b0] sm:$0xff]
    %v138 = vld [vmem:[%s1 + $0x3b8] sm:$0xff]
    %v139 = vld [vmem:[%s1 + $0x3c0] sm:$0xff]
    %v140 = vld [vmem:[%s1 + $0x3c8] sm:$0xff]
    %v141 = vld [vmem:[%s1 + $0x3d0] sm:$0xff]
    %v142 = vld [vmem:[%s1 + $0x3d8] sm:$0xff]
    %v143 = vld [vmem:[%s1 + $0x3e0] sm:$0xff]
    %v144 = vld [vmem:[%s1 + $0x3e8] sm:$0xff]
    %v145 = vld [vmem:[%s1 + $0x3f0] sm:$0xff]
    %v146 = vld [vmem:[%s1 + $0x3f8] sm:$0xff]
    %v147 = vld [vmem:[%s1 + $0x400] sm:$0xff]
    %v148 = vld [vmem:[%s1 + $0x408] sm:$0xff]
    %v149 = vld [vmem:[%s1 + $0x410] sm:$0xff]
    %v150 = vld [vmem:[%s1 + $0x418] sm:$0xff]
    %v151 = vld [vmem:[%s1 + $0x420] sm:$0xff]
    %v152 = vld [vmem:[%s1 + $0x428] sm:$0xff]
    %v153 = vld [vmem:[%s1 + $0x430] sm:$0xff]
    %v154 = vld [vmem:[%s1 + $0x438] sm:$0xff]
    %v155 = vld [vmem:[%s1 + $0x440] sm:$0xff]
    %v156 = vld [vmem:[%s1 + $0x448] sm:$0xff]
    %v157 = vld [vmem:[%s1 + $0x450] sm:$0xff]
    %v158 = vld [vmem:[%s1 + $0x458] sm:$0xff]
    %v159 = vld [vmem:[%s1 + $0x460] sm:$0xff]
    %v160 = vld [vmem:[%s1 + $0x468] sm:$0xff]
    %v161 = vld [vmem:[%s1 + $0x470] sm:$0xff]
    %v162 = vld [vmem:[%s1 + $0x478] sm:$0xff]
    %v163 = vld [vmem:[%s1 + $0x480] sm:$0xff]
    %v164 = vld [vmem:[%s1 + $0x488] sm:$0xff]
    %v165 = vld [vmem:[%s1 + $0x490] sm:$0xff]
    %v166 = vld [vmem:[%s1 + $0x498] sm:$0xff]
    %v167 = vld [vmem:[%s1 + $0x4a0] sm:$0xff]
    %v168 = vld [vmem:[%s1 + $0x4a8] sm:$0xff]
    %v169 = vld [vmem:[%s1 + $0x4b0] sm:$0xff]
    %v170 = vld [vmem:[%s1 + $0x4b8] sm:$0xff]
    %v171 = vld [vmem:[%s1 + $0x4c0] sm:$0xff]
    %v172 = vld [vmem:[%s1 + $0x4c8] sm:$0xff]
    %v173 = vld [vmem:[%s1 + $0x4d0] sm:$0xff]
    %v174 = vld [vmem:[%s1 + $0x4d8] sm:$0xff]
    %v175 = vld [vmem:[%s1 + $0x4e0] sm:$0xff]
    %v176 = vld [vmem:[%s1 + $0x4e8] sm:$0xff]
    %v177 = vld [vmem:[%s1 + $0x4f0] sm:$0xff]
    %v178 = vld [vmem:[%s1 + $0x4f8] sm:$0xff]
    %v179 = vld [vmem:[%s1 + $0x500] sm:$0xff]
    %v180 = vld [vmem:[%s1 + $0x508] sm:$0xff]
    %v181 = vld [vmem:[%s1 + $0x510] sm:$0xff]
    %v182 = vld [vmem:[%s1 + $0x518] sm:$0xff]
    %v183 = vld [vmem:[%s1 + $0x520] sm:$0xff]
    %v184 = vld [vmem:[%s1 + $0x528] sm:$0xff]
    %v185 = vld [vmem:[%s1 + $0x530] sm:$0xff]
    %v186 = vld [vmem:[%s1 + $0x538] sm:$0xff]
    %v187 = vld [vmem:[%s1 + $0x540] sm:$0xff]
    %v188 = vld [vmem:[%s1 + $0x548] sm:$0xff]
    %v189 = vld [vmem:[%s1 + $0x550] sm:$0xff]
    %v190 = vld [vmem:[%s1 + $0x558] sm:$0xff]
    %v191 = vld [vmem:[%s1 + $0x560] sm:$0xff]
    %v192 = vld [vmem:[%s1 + $0x568] sm:$0xff]
    %v193 = vld [vmem:[%s1 + $0x570] sm:$0xff]
    %v194 = vld [vmem:[%s1 + $0x578] sm:$0xff]
    %v195 = vld [vmem:[%s1 + $0x580] sm:$0xff]
    %v196 = vld [vmem:[%s1 + $0x588] sm:$0xff]
    %v197 = vld [vmem:[%s1 + $0x590] sm:$0xff]
    %v198 = vld [vmem:[%s1 + $0x598] sm:$0xff]
    %v199 = vld [vmem:[%s1 + $0x5a0] sm:$0xff]
    %v200 = vld [vmem:[%s1 + $0x5a8] sm:$0xff]
    %v201 = vld [vmem:[%s1 + $0x5b0] sm:$0xff]
    %v202 = vld [vmem:[%s1 + $0x5b8] sm:$0xff]
    %v203 = vld [vmem:[%s1 + $0x5c0] sm:$0xff]
    %v204 = vld [vmem:[%s1 + $0x5c8] sm:$0xff]
    %v205 = vld [vmem:[%s1 + $0x5d0] sm:$0xff]
    %v206 = vld [vmem:[%s1 + $0x5d8] sm:$0xff]
    %v207 = vld [vmem:[%s1 + $0x5e0] sm:$0xff]
    %v208 = vld [vmem:[%s1 + $0x5e8] sm:$0xff]
    %v209 = vld [vmem:[%s1 + $0x5f0] sm:$0xff]
    %v210 = vld [vmem:[%s1 + $0x5f8] sm:$0xff]
    %v211 = vld [vmem:[%s1 + $0x600] sm:$0xff]
    %v212 = vld [vmem:[%s1 + $0x608] sm:$0xff]
    %v213 = vld [vmem:[%s1 + $0x610] sm:$0xff]
    %v214 = vld [vmem:[%s1 + $0x618] sm:$0xff]
    %v215 = vld [vmem:[%s2] sm:$0x1]
    %v217 = vlaneseq
    %v218 = vshrl.u32 %v217, 7
    %v219 = vsub.s32 0, %v218
    %v220 = vrot.slane %v215, %v219
    %v226 = vcombine.high %v15, %v15
    %v228 = vunpack.c.l.s4 1983009808
    %v229 = vunpack.c.0.s8 %v228
    %v230 = vlaneseq
    %v231 = vshrl.u32 %v230, 7
    %v232 = vsub.s32 %v229, %v231
    %v233 = vrot.slane %v15, %v232
    %v235 = vunpack.c.l.s4 1983009808
    %v236 = vunpack.c.0.s8 %v235
    %v237 = vlaneseq
    %v238 = vshrl.u32 %v237, 7
    %v239 = vsub.s32 %v236, %v238
    %v240 = vrot.slane %v226, %v239
    %v241 = vcombine.high %v233, %v233
    %v242 = vcombine.high %v240, %v240
    %v243 = vcombine.high %v16, %v16
    %v245 = vunpack.c.l.s4 1983009808
    %v246 = vunpack.c.0.s8 %v245
    %v247 = vlaneseq
    %v248 = vshrl.u32 %v247, 7
    %v249 = vsub.s32 %v246, %v248
    %v250 = vrot.slane %v16, %v249
    %v252 = vunpack.c.l.s4 1983009808
    %v253 = vunpack.c.0.s8 %v252
    %v254 = vlaneseq
    %v255 = vshrl.u32 %v254, 7
    %v256 = vsub.s32 %v253, %v255
    %v257 = vrot.slane %v243, %v256
    %v258 = vcombine.high %v250, %v250
    %v259 = vcombine.high %v257, %v257
    %v260 = vcombine.high %v17, %v17
    %v262 = vunpack.c.l.s4 1983009808
    %v263 = vunpack.c.0.s8 %v262
    %v264 = vlaneseq
    %v265 = vshrl.u32 %v264, 7
    %v266 = vsub.s32 %v263, %v265
    %v267 = vrot.slane %v17, %v266
    %v269 = vunpack.c.l.s4 1983009808
    %v270 = vunpack.c.0.s8 %v269
    %v271 = vlaneseq
    %v272 = vshrl.u32 %v271, 7
    %v273 = vsub.s32 %v270, %v272
    %v274 = vrot.slane %v260, %v273
    %v275 = vcombine.high %v267, %v267
    %v276 = vcombine.high %v274, %v274
    %v278 = vunpack.c.l.s4 1983009808
    %v279 = vunpack.c.0.s8 %v278
    %v280 = vlaneseq
    %v281 = vshrl.u32 %v280, 7
    %v282 = vsub.s32 %v279, %v281
    %v283 = vrot.slane %v18, %v282
    %vm296 = vcmask 261120
    %v297 = vsel %vm296, %v283, 0
    %299 = vmatprep.subr.mxu0 0.0
    %300 = vmatpush1.msra.mxu0 %v19
    %301 = vmatprep.subr.mxu0 0.0
    %302 = vmatpush1.msra.mxu0 %v20
    %303 = vmatprep.subr.mxu0 0.0
    %304 = vmatpush1.msra.mxu0 %v21
    %305 = vmatprep.subr.mxu0 0.0
    %306 = vmatpush1.msra.mxu0 %v22
    %307 = vmatprep.subr.mxu0 0.0
    %308 = vmatpush1.msra.mxu0 %v23
    %309 = vmatprep.subr.mxu0 0.0
    %310 = vmatpush1.msra.mxu0 %v24
    %311 = vmatprep.subr.mxu0 0.0
    %312 = vmatpush1.msra.mxu0 %v25
    %313 = vmatprep.subr.mxu0 0.0
    %314 = vmatpush1.msra.mxu0 %v26
    %315 = vmatprep.subr.mxu0 0.0
    %316 = vmatpush1.msra.mxu0 %v27
    %317 = vmatprep.subr.mxu0 0.0
    %318 = vmatpush1.msra.mxu0 %v28
    %319 = vmatprep.subr.mxu0 0.0
    %320 = vmatpush1.msra.mxu0 %v29
    %321 = vmatprep.subr.mxu0 0.0
    %322 = vmatpush1.msra.mxu0 %v30
    %323 = vmatprep.subr.mxu0 0.0
    %324 = vmatpush1.msra.mxu0 %v31
    %325 = vmatprep.subr.mxu0 0.0
    %326 = vmatpush1.msra.mxu0 %v32
    %327 = vmatprep.subr.mxu0 0.0
    %328 = vmatpush1.msra.mxu0 %v33
    %329 = vmatprep.subr.mxu0 0.0
    %330 = vmatpush1.msra.mxu0 %v34
    %331 = vmatprep.subr.mxu0 0.0
    %332 = vmatpush1.msra.mxu0 %v35
    %333 = vmatprep.subr.mxu0 0.0
    %334 = vmatpush1.msra.mxu0 %v36
    %335 = vmatprep.subr.mxu0 0.0
    %336 = vmatpush1.msra.mxu0 %v37
    %337 = vmatprep.subr.mxu0 0.0
    %338 = vmatpush1.msra.mxu0 %v38
    %339 = vmatprep.subr.mxu0 0.0
    %340 = vmatpush1.msra.mxu0 %v39
    %341 = vmatprep.subr.mxu0 0.0
    %342 = vmatpush1.msra.mxu0 %v40
    %343 = vmatprep.subr.mxu0 0.0
    %344 = vmatpush1.msra.mxu0 %v41
    %345 = vmatprep.subr.mxu0 0.0
    %346 = vmatpush1.msra.mxu0 %v42
    %347 = vmatprep.subr.mxu0 0.0
    %348 = vmatpush1.msra.mxu0 %v43
    %349 = vmatprep.subr.mxu0 0.0
    %350 = vmatpush1.msra.mxu0 %v44
    %351 = vmatprep.subr.mxu0 0.0
    %352 = vmatpush1.msra.mxu0 %v45
    %353 = vmatprep.subr.mxu0 0.0
    %354 = vmatpush1.msra.mxu0 %v46
    %355 = vmatprep.subr.mxu0 0.0
    %356 = vmatpush1.msra.mxu0 %v47
    %357 = vmatprep.subr.mxu0 0.0
    %358 = vmatpush1.msra.mxu0 %v48
    %359 = vmatprep.subr.mxu0 0.0
    %360 = vmatpush1.msra.mxu0 %v49
    %361 = vmatprep.subr.mxu0 0.0
    %362 = vmatpush1.msra.mxu0 %v50
    %363 = vmatprep.mubr.f32.mxu0 %v241
    %364 = vmatmul.mubr.f32.gmra.mrb[0].mxu0 %v233
    %v365 = vpop.f32.mrb[0].mxu0
    %v366 = vadd.f32 %v220, %v365
    %v367 = vpop.f32.mrb[0].mxu0
    %368 = vdwg.mxu0
    %369 = vmatprep.subr.mxu0 0.0
    %370 = vmatpush1.msra.mxu0 %v51
    %371 = vmatprep.subr.mxu0 0.0
    %372 = vmatpush1.msra.mxu0 %v52
    %373 = vmatprep.subr.mxu0 0.0
    %374 = vmatpush1.msra.mxu0 %v53
    %375 = vmatprep.subr.mxu0 0.0
    %376 = vmatpush1.msra.mxu0 %v54
    %377 = vmatprep.subr.mxu0 0.0
    %378 = vmatpush1.msra.mxu0 %v55
    %379 = vmatprep.subr.mxu0 0.0
    %380 = vmatpush1.msra.mxu0 %v56
    %381 = vmatprep.subr.mxu0 0.0
    %382 = vmatpush1.msra.mxu0 %v57
    %383 = vmatprep.subr.mxu0 0.0
    %384 = vmatpush1.msra.mxu0 %v58
    %385 = vmatprep.subr.mxu0 0.0
    %386 = vmatpush1.msra.mxu0 %v59
    %387 = vmatprep.subr.mxu0 0.0
    %388 = vmatpush1.msra.mxu0 %v60
    %389 = vmatprep.subr.mxu0 0.0
    %390 = vmatpush1.msra.mxu0 %v61
    %391 = vmatprep.subr.mxu0 0.0
    %392 = vmatpush1.msra.mxu0 %v62
    %393 = vmatprep.subr.mxu0 0.0
    %394 = vmatpush1.msra.mxu0 %v63
    %395 = vmatprep.subr.mxu0 0.0
    %396 = vmatpush1.msra.mxu0 %v64
    %397 = vmatprep.subr.mxu0 0.0
    %398 = vmatpush1.msra.mxu0 %v65
    %399 = vmatprep.subr.mxu0 0.0
    %400 = vmatpush1.msra.mxu0 %v66
    %401 = vmatprep.subr.mxu0 0.0
    %402 = vmatpush1.msra.mxu0 %v67
    %403 = vmatprep.subr.mxu0 0.0
    %404 = vmatpush1.msra.mxu0 %v68
    %405 = vmatprep.subr.mxu0 0.0
    %406 = vmatpush1.msra.mxu0 %v69
    %407 = vmatprep.subr.mxu0 0.0
    %408 = vmatpush1.msra.mxu0 %v70
    %409 = vmatprep.subr.mxu0 0.0
    %410 = vmatpush1.msra.mxu0 %v71
    %411 = vmatprep.subr.mxu0 0.0
    %412 = vmatpush1.msra.mxu0 %v72
    %413 = vmatprep.subr.mxu0 0.0
    %414 = vmatpush1.msra.mxu0 %v73
    %415 = vmatprep.subr.mxu0 0.0
    %416 = vmatpush1.msra.mxu0 %v74
    %417 = vmatprep.subr.mxu0 0.0
    %418 = vmatpush1.msra.mxu0 %v75
    %419 = vmatprep.subr.mxu0 0.0
    %420 = vmatpush1.msra.mxu0 %v76
    %421 = vmatprep.subr.mxu0 0.0
    %422 = vmatpush1.msra.mxu0 %v77
    %423 = vmatprep.subr.mxu0 0.0
    %424 = vmatpush1.msra.mxu0 %v78
    %425 = vmatprep.subr.mxu0 0.0
    %426 = vmatpush1.msra.mxu0 %v79
    %427 = vmatprep.subr.mxu0 0.0
    %428 = vmatpush1.msra.mxu0 %v80
    %429 = vmatprep.subr.mxu0 0.0
    %430 = vmatpush1.msra.mxu0 %v81
    %431 = vmatprep.subr.mxu0 0.0
    %432 = vmatpush1.msra.mxu0 %v82
    %433 = vmatprep.mubr.f32.mxu0 %v242
    %434 = vmatmul.mubr.f32.gmra.mrb[0].mxu0 %v240
    %v435 = vpop.f32.mrb[0].mxu0
    %v436 = vadd.f32 %v366, %v435
    %v437 = vpop.f32.mrb[0].mxu0
    %438 = vdwg.mxu0
    %439 = vmatprep.subr.mxu0 0.0
    %440 = vmatpush1.msra.mxu0 %v83
    %441 = vmatprep.subr.mxu0 0.0
    %442 = vmatpush1.msra.mxu0 %v84
    %443 = vmatprep.subr.mxu0 0.0
    %444 = vmatpush1.msra.mxu0 %v85
    %445 = vmatprep.subr.mxu0 0.0
    %446 = vmatpush1.msra.mxu0 %v86
    %447 = vmatprep.subr.mxu0 0.0
    %448 = vmatpush1.msra.mxu0 %v87
    %449 = vmatprep.subr.mxu0 0.0
    %450 = vmatpush1.msra.mxu0 %v88
    %451 = vmatprep.subr.mxu0 0.0
    %452 = vmatpush1.msra.mxu0 %v89
    %453 = vmatprep.subr.mxu0 0.0
    %454 = vmatpush1.msra.mxu0 %v90
    %455 = vmatprep.subr.mxu0 0.0
    %456 = vmatpush1.msra.mxu0 %v91
    %457 = vmatprep.subr.mxu0 0.0
    %458 = vmatpush1.msra.mxu0 %v92
    %459 = vmatprep.subr.mxu0 0.0
    %460 = vmatpush1.msra.mxu0 %v93
    %461 = vmatprep.subr.mxu0 0.0
    %462 = vmatpush1.msra.mxu0 %v94
    %463 = vmatprep.subr.mxu0 0.0
    %464 = vmatpush1.msra.mxu0 %v95
    %465 = vmatprep.subr.mxu0 0.0
    %466 = vmatpush1.msra.mxu0 %v96
    %467 = vmatprep.subr.mxu0 0.0
    %468 = vmatpush1.msra.mxu0 %v97
    %469 = vmatprep.subr.mxu0 0.0
    %470 = vmatpush1.msra.mxu0 %v98
    %471 = vmatprep.subr.mxu0 0.0
    %472 = vmatpush1.msra.mxu0 %v99
    %473 = vmatprep.subr.mxu0 0.0
    %474 = vmatpush1.msra.mxu0 %v100
    %475 = vmatprep.subr.mxu0 0.0
    %476 = vmatpush1.msra.mxu0 %v101
    %477 = vmatprep.subr.mxu0 0.0
    %478 = vmatpush1.msra.mxu0 %v102
    %479 = vmatprep.subr.mxu0 0.0
    %480 = vmatpush1.msra.mxu0 %v103
    %481 = vmatprep.subr.mxu0 0.0
    %482 = vmatpush1.msra.mxu0 %v104
    %483 = vmatprep.subr.mxu0 0.0
    %484 = vmatpush1.msra.mxu0 %v105
    %485 = vmatprep.subr.mxu0 0.0
    %486 = vmatpush1.msra.mxu0 %v106
    %487 = vmatprep.subr.mxu0 0.0
    %488 = vmatpush1.msra.mxu0 %v107
    %489 = vmatprep.subr.mxu0 0.0
    %490 = vmatpush1.msra.mxu0 %v108
    %491 = vmatprep.subr.mxu0 0.0
    %492 = vmatpush1.msra.mxu0 %v109
    %493 = vmatprep.subr.mxu0 0.0
    %494 = vmatpush1.msra.mxu0 %v110
    %495 = vmatprep.subr.mxu0 0.0
    %496 = vmatpush1.msra.mxu0 %v111
    %497 = vmatprep.subr.mxu0 0.0
    %498 = vmatpush1.msra.mxu0 %v112
    %499 = vmatprep.subr.mxu0 0.0
    %500 = vmatpush1.msra.mxu0 %v113
    %501 = vmatprep.subr.mxu0 0.0
    %502 = vmatpush1.msra.mxu0 %v114
    %503 = vmatprep.mubr.f32.mxu0 %v258
    %504 = vmatmul.mubr.f32.gmra.mrb[0].mxu0 %v250
    %v505 = vpop.f32.mrb[0].mxu0
    %v506 = vadd.f32 %v436, %v505
    %v507 = vpop.f32.mrb[0].mxu0
    %508 = vdwg.mxu0
    %509 = vmatprep.subr.mxu0 0.0
    %510 = vmatpush1.msra.mxu0 %v115
    %511 = vmatprep.subr.mxu0 0.0
    %512 = vmatpush1.msra.mxu0 %v116
    %513 = vmatprep.subr.mxu0 0.0
    %514 = vmatpush1.msra.mxu0 %v117
    %515 = vmatprep.subr.mxu0 0.0
    %516 = vmatpush1.msra.mxu0 %v118
    %517 = vmatprep.subr.mxu0 0.0
    %518 = vmatpush1.msra.mxu0 %v119
    %519 = vmatprep.subr.mxu0 0.0
    %520 = vmatpush1.msra.mxu0 %v120
    %521 = vmatprep.subr.mxu0 0.0
    %522 = vmatpush1.msra.mxu0 %v121
    %523 = vmatprep.subr.mxu0 0.0
    %524 = vmatpush1.msra.mxu0 %v122
    %525 = vmatprep.subr.mxu0 0.0
    %526 = vmatpush1.msra.mxu0 %v123
    %527 = vmatprep.subr.mxu0 0.0
    %528 = vmatpush1.msra.mxu0 %v124
    %529 = vmatprep.subr.mxu0 0.0
    %530 = vmatpush1.msra.mxu0 %v125
    %531 = vmatprep.subr.mxu0 0.0
    %532 = vmatpush1.msra.mxu0 %v126
    %533 = vmatprep.subr.mxu0 0.0
    %534 = vmatpush1.msra.mxu0 %v127
    %535 = vmatprep.subr.mxu0 0.0
    %536 = vmatpush1.msra.mxu0 %v128
    %537 = vmatprep.subr.mxu0 0.0
    %538 = vmatpush1.msra.mxu0 %v129
    %539 = vmatprep.subr.mxu0 0.0
    %540 = vmatpush1.msra.mxu0 %v130
    %541 = vmatprep.subr.mxu0 0.0
    %542 = vmatpush1.msra.mxu0 %v131
    %543 = vmatprep.subr.mxu0 0.0
    %544 = vmatpush1.msra.mxu0 %v132
    %545 = vmatprep.subr.mxu0 0.0
    %546 = vmatpush1.msra.mxu0 %v133
    %547 = vmatprep.subr.mxu0 0.0
    %548 = vmatpush1.msra.mxu0 %v134
    %549 = vmatprep.subr.mxu0 0.0
    %550 = vmatpush1.msra.mxu0 %v135
    %551 = vmatprep.subr.mxu0 0.0
    %552 = vmatpush1.msra.mxu0 %v136
    %553 = vmatprep.subr.mxu0 0.0
    %554 = vmatpush1.msra.mxu0 %v137
    %555 = vmatprep.subr.mxu0 0.0
    %556 = vmatpush1.msra.mxu0 %v138
    %557 = vmatprep.subr.mxu0 0.0
    %558 = vmatpush1.msra.mxu0 %v139
    %559 = vmatprep.subr.mxu0 0.0
    %560 = vmatpush1.msra.mxu0 %v140
    %561 = vmatprep.subr.mxu0 0.0
    %562 = vmatpush1.msra.mxu0 %v141
    %563 = vmatprep.subr.mxu0 0.0
    %564 = vmatpush1.msra.mxu0 %v142
    %565 = vmatprep.subr.mxu0 0.0
    %566 = vmatpush1.msra.mxu0 %v143
    %567 = vmatprep.subr.mxu0 0.0
    %568 = vmatpush1.msra.mxu0 %v144
    %569 = vmatprep.subr.mxu0 0.0
    %570 = vmatpush1.msra.mxu0 %v145
    %571 = vmatprep.subr.mxu0 0.0
    %572 = vmatpush1.msra.mxu0 %v146
    %573 = vmatprep.mubr.f32.mxu0 %v259
    %574 = vmatmul.mubr.f32.gmra.mrb[0].mxu0 %v257
    %v575 = vpop.f32.mrb[0].mxu0
    %v576 = vadd.f32 %v506, %v575
    %v577 = vpop.f32.mrb[0].mxu0
    %578 = vdwg.mxu0
    %579 = vmatprep.subr.mxu0 0.0
    %580 = vmatpush1.msra.mxu0 %v147
    %581 = vmatprep.subr.mxu0 0.0
    %582 = vmatpush1.msra.mxu0 %v148
    %583 = vmatprep.subr.mxu0 0.0
    %584 = vmatpush1.msra.mxu0 %v149
    %585 = vmatprep.subr.mxu0 0.0
    %586 = vmatpush1.msra.mxu0 %v150
    %587 = vmatprep.subr.mxu0 0.0
    %588 = vmatpush1.msra.mxu0 %v151
    %589 = vmatprep.subr.mxu0 0.0
    %590 = vmatpush1.msra.mxu0 %v152
    %591 = vmatprep.subr.mxu0 0.0
    %592 = vmatpush1.msra.mxu0 %v153
    %593 = vmatprep.subr.mxu0 0.0
    %594 = vmatpush1.msra.mxu0 %v154
    %595 = vmatprep.subr.mxu0 0.0
    %596 = vmatpush1.msra.mxu0 %v155
    %597 = vmatprep.subr.mxu0 0.0
    %598 = vmatpush1.msra.mxu0 %v156
    %599 = vmatprep.subr.mxu0 0.0
    %600 = vmatpush1.msra.mxu0 %v157
    %601 = vmatprep.subr.mxu0 0.0
    %602 = vmatpush1.msra.mxu0 %v158
    %603 = vmatprep.subr.mxu0 0.0
    %604 = vmatpush1.msra.mxu0 %v159
    %605 = vmatprep.subr.mxu0 0.0
    %606 = vmatpush1.msra.mxu0 %v160
    %607 = vmatprep.subr.mxu0 0.0
    %608 = vmatpush1.msra.mxu0 %v161
    %609 = vmatprep.subr.mxu0 0.0
    %610 = vmatpush1.msra.mxu0 %v162
    %611 = vmatprep.subr.mxu0 0.0
    %612 = vmatpush1.msra.mxu0 %v163
    %613 = vmatprep.subr.mxu0 0.0
    %614 = vmatpush1.msra.mxu0 %v164
    %615 = vmatprep.subr.mxu0 0.0
    %616 = vmatpush1.msra.mxu0 %v165
    %617 = vmatprep.subr.mxu0 0.0
    %618 = vmatpush1.msra.mxu0 %v166
    %619 = vmatprep.subr.mxu0 0.0
    %620 = vmatpush1.msra.mxu0 %v167
    %621 = vmatprep.subr.mxu0 0.0
    %622 = vmatpush1.msra.mxu0 %v168
    %623 = vmatprep.subr.mxu0 0.0
    %624 = vmatpush1.msra.mxu0 %v169
    %625 = vmatprep.subr.mxu0 0.0
    %626 = vmatpush1.msra.mxu0 %v170
    %627 = vmatprep.subr.mxu0 0.0
    %628 = vmatpush1.msra.mxu0 %v171
    %629 = vmatprep.subr.mxu0 0.0
    %630 = vmatpush1.msra.mxu0 %v172
    %631 = vmatprep.subr.mxu0 0.0
    %632 = vmatpush1.msra.mxu0 %v173
    %633 = vmatprep.subr.mxu0 0.0
    %634 = vmatpush1.msra.mxu0 %v174
    %635 = vmatprep.subr.mxu0 0.0
    %636 = vmatpush1.msra.mxu0 %v175
    %637 = vmatprep.subr.mxu0 0.0
    %638 = vmatpush1.msra.mxu0 %v176
    %639 = vmatprep.subr.mxu0 0.0
    %640 = vmatpush1.msra.mxu0 %v177
    %641 = vmatprep.subr.mxu0 0.0
    %642 = vmatpush1.msra.mxu0 %v178
    %643 = vmatprep.mubr.f32.mxu0 %v275
    %644 = vmatmul.mubr.f32.gmra.mrb[0].mxu0 %v267
    %v645 = vpop.f32.mrb[0].mxu0
    %v646 = vadd.f32 %v576, %v645
    %v647 = vpop.f32.mrb[0].mxu0
    %648 = vdwg.mxu0
    %649 = vmatprep.subr.mxu0 0.0
    %650 = vmatpush1.msra.mxu0 %v179
    %651 = vmatprep.subr.mxu0 0.0
    %652 = vmatpush1.msra.mxu0 %v180
    %653 = vmatprep.subr.mxu0 0.0
    %654 = vmatpush1.msra.mxu0 %v181
    %655 = vmatprep.subr.mxu0 0.0
    %656 = vmatpush1.msra.mxu0 %v182
    %657 = vmatprep.subr.mxu0 0.0
    %658 = vmatpush1.msra.mxu0 %v183
    %659 = vmatprep.subr.mxu0 0.0
    %660 = vmatpush1.msra.mxu0 %v184
    %661 = vmatprep.subr.mxu0 0.0
    %662 = vmatpush1.msra.mxu0 %v185
    %663 = vmatprep.subr.mxu0 0.0
    %664 = vmatpush1.msra.mxu0 %v186
    %665 = vmatprep.subr.mxu0 0.0
    %666 = vmatpush1.msra.mxu0 %v187
    %667 = vmatprep.subr.mxu0 0.0
    %668 = vmatpush1.msra.mxu0 %v188
    %669 = vmatprep.subr.mxu0 0.0
    %670 = vmatpush1.msra.mxu0 %v189
    %671 = vmatprep.subr.mxu0 0.0
    %672 = vmatpush1.msra.mxu0 %v190
    %673 = vmatprep.subr.mxu0 0.0
    %674 = vmatpush1.msra.mxu0 %v191
    %675 = vmatprep.subr.mxu0 0.0
    %676 = vmatpush1.msra.mxu0 %v192
    %677 = vmatprep.subr.mxu0 0.0
    %678 = vmatpush1.msra.mxu0 %v193
    %679 = vmatprep.subr.mxu0 0.0
    %680 = vmatpush1.msra.mxu0 %v194
    %681 = vmatprep.subr.mxu0 0.0
    %682 = vmatpush1.msra.mxu0 %v195
    %683 = vmatprep.subr.mxu0 0.0
    %684 = vmatpush1.msra.mxu0 %v196
    %685 = vmatprep.subr.mxu0 0.0
    %686 = vmatpush1.msra.mxu0 %v197
    %687 = vmatprep.subr.mxu0 0.0
    %688 = vmatpush1.msra.mxu0 %v198
    %689 = vmatprep.subr.mxu0 0.0
    %690 = vmatpush1.msra.mxu0 %v199
    %691 = vmatprep.subr.mxu0 0.0
    %692 = vmatpush1.msra.mxu0 %v200
    %693 = vmatprep.subr.mxu0 0.0
    %694 = vmatpush1.msra.mxu0 %v201
    %695 = vmatprep.subr.mxu0 0.0
    %696 = vmatpush1.msra.mxu0 %v202
    %697 = vmatprep.subr.mxu0 0.0
    %698 = vmatpush1.msra.mxu0 %v203
    %699 = vmatprep.subr.mxu0 0.0
    %700 = vmatpush1.msra.mxu0 %v204
    %701 = vmatprep.subr.mxu0 0.0
    %702 = vmatpush1.msra.mxu0 %v205
    %703 = vmatprep.subr.mxu0 0.0
    %704 = vmatpush1.msra.mxu0 %v206
    %705 = vmatprep.subr.mxu0 0.0
    %706 = vmatpush1.msra.mxu0 %v207
    %707 = vmatprep.subr.mxu0 0.0
    %708 = vmatpush1.msra.mxu0 %v208
    %709 = vmatprep.subr.mxu0 0.0
    %710 = vmatpush1.msra.mxu0 %v209
    %711 = vmatprep.subr.mxu0 0.0
    %712 = vmatpush1.msra.mxu0 %v210
    %713 = vmatprep.mubr.f32.mxu0 %v276
    %714 = vmatmul.mubr.f32.gmra.mrb[0].mxu0 %v274
    %v715 = vpop.f32.mrb[0].mxu0
    %v716 = vadd.f32 %v646, %v715
    %v717 = vpop.f32.mrb[0].mxu0
    %718 = vdwg.mxu0
    %719 = vmatprep.subr.mxu0 0.0
    %720 = vmatpush1.msra.mxu0 %v211
    %721 = vmatprep.subr.mxu0 0.0
    %722 = vmatpush1.msra.mxu0 %v212
    %723 = vmatprep.subr.mxu0 0.0
    %724 = vmatpush1.msra.mxu0 %v213
    %725 = vmatprep.subr.mxu0 0.0
    %726 = vmatpush1.msra.mxu0 %v214
    %727 = vmatprep.subr.mxu0 0.0
    %728 = vmatpush1.msra.mxu0 0.0
    %729 = vmatprep.subr.mxu0 0.0
    %730 = vmatpush1.msra.mxu0 0.0
    %731 = vmatprep.subr.mxu0 0.0
    %732 = vmatpush1.msra.mxu0 0.0
    %733 = vmatprep.subr.mxu0 0.0
    %734 = vmatpush1.msra.mxu0 0.0
    %735 = vmatprep.subr.mxu0 0.0
    %736 = vmatpush1.msra.mxu0 0.0
    %737 = vmatprep.subr.mxu0 0.0
    %738 = vmatpush1.msra.mxu0 0.0
    %739 = vmatprep.subr.mxu0 0.0
    %740 = vmatpush1.msra.mxu0 0.0
    %741 = vmatprep.subr.mxu0 0.0
    %742 = vmatpush1.msra.mxu0 0.0
    %743 = vmatprep.subr.mxu0 0.0
    %744 = vmatpush1.msra.mxu0 0.0
    %745 = vmatprep.subr.mxu0 0.0
    %746 = vmatpush1.msra.mxu0 0.0
    %747 = vmatprep.subr.mxu0 0.0
    %748 = vmatpush1.msra.mxu0 0.0
    %749 = vmatprep.subr.mxu0 0.0
    %750 = vmatpush1.msra.mxu0 0.0
    %751 = vmatprep.subr.mxu0 0.0
    %752 = vmatpush1.msra.mxu0 0.0
    %753 = vmatprep.subr.mxu0 0.0
    %754 = vmatpush1.msra.mxu0 0.0
    %755 = vmatprep.subr.mxu0 0.0
    %756 = vmatpush1.msra.mxu0 0.0
    %757 = vmatprep.subr.mxu0 0.0
    %758 = vmatpush1.msra.mxu0 0.0
    %759 = vmatprep.subr.mxu0 0.0
    %760 = vmatpush1.msra.mxu0 0.0
    %761 = vmatprep.subr.mxu0 0.0
    %762 = vmatpush1.msra.mxu0 0.0
    %763 = vmatprep.subr.mxu0 0.0
    %764 = vmatpush1.msra.mxu0 0.0
    %765 = vmatprep.subr.mxu0 0.0
    %766 = vmatpush1.msra.mxu0 0.0
    %767 = vmatprep.subr.mxu0 0.0
    %768 = vmatpush1.msra.mxu0 0.0
    %769 = vmatprep.subr.mxu0 0.0
    %770 = vmatpush1.msra.mxu0 0.0
    %771 = vmatprep.subr.mxu0 0.0
    %772 = vmatpush1.msra.mxu0 0.0
    %773 = vmatprep.subr.mxu0 0.0
    %774 = vmatpush1.msra.mxu0 0.0
    %775 = vmatprep.subr.mxu0 0.0
    %776 = vmatpush1.msra.mxu0 0.0
    %777 = vmatprep.subr.mxu0 0.0
    %778 = vmatpush1.msra.mxu0 0.0
    %779 = vmatprep.subr.mxu0 0.0
    %780 = vmatpush1.msra.mxu0 0.0
    %781 = vmatprep.subr.mxu0 0.0
    %782 = vmatpush1.msra.mxu0 0.0
    %783 = vmatprep.mubr.f32.mxu0 0.0
    %784 = vmatmul.mubr.f32.gmra.mrb[0].mxu0 %v297
    %v785 = vpop.f32.mrb[0].mxu0
    %v786 = vadd.f32 %v716, %v785
    %v787 = vpop.f32.mrb[0].mxu0
    %788 = vdwg.mxu0
    %vm789 = vcmask 74752
    %790 = vst.msk [vmem:[#allocation2] sm:$0x3] %vm789, %v786
    // Predicated region
    $region14: #{cnn_fashion_mnist_forward.5} parent=1 // pred_check
      _
    $region15: #{cnn_fashion_mnist_forward.5} parent=1 // pred_check_branch
      %792 = sbr.rel (0) target = $region17
    $region16: #{cnn_fashion_mnist_forward.5} parent=1 // pred_region
      %s794 = ssub.s32 32, 32
      %795 = vsyncadd [#allocation3], %s794
      %s797 = sshll.u32 [#allocation2], 4
      %s798 = int_to_ptr.vmem [resolvable:$true] %s797
      %800 = dma.vmem_to_hbm [thread:$0]  %s798, 32, %s3, [#allocation3]
    $region17: #{cnn_fashion_mnist_forward.5} parent=1 // pred_fallthru
      _
    // Predicated region
    $region18: #{cnn_fashion_mnist_forward.5} parent=1 // pred_check
      _
    $region19: #{cnn_fashion_mnist_forward.5} parent=1 // pred_check_branch
      %802 = sbr.rel (0) target = $region21
    $region20: #{cnn_fashion_mnist_forward.5} parent=1 // pred_region
      %803 = dma.done [#allocation3], 32
    $region21: #{cnn_fashion_mnist_forward.5} parent=1 // pred_fallthru
      _
    %804 = vsyncpa [#allocation3], 1

</llo_original>
